<compile_context>
chip_gen: v5e
topology: v5e:2x2
jax: 0.10.0
libtpu: 0.0.40
codegen_flags: <defaults>
</compile_context>

<pallas_src>
import math
import numpy as np
import jax
import jax.numpy as jnp
from jax.experimental import pallas as pl
from jax.experimental.pallas import tpu as pltpu


def _round_up(x, m):
    return ((x + m - 1) // m) * m


# ---------------------------------------------------------------------------
# Reference positional encoding (PositionalEncoding: include_input=True,
# log_sampling=True, normalize=False, gaussian_pe=False):
#   [x, sin(f0*x), cos(f0*x), sin(f1*x), cos(f1*x), ...],  f_k = 2**k
# ---------------------------------------------------------------------------
def positional_encoding(x, num_encoding_functions):
    freqs = 2.0 ** jnp.arange(num_encoding_functions, dtype=jnp.float32)
    enc = [x]
    for k in range(num_encoding_functions):
        enc.append(jnp.sin(x * freqs[k]))
        enc.append(jnp.cos(x * freqs[k]))
    return jnp.concatenate(enc, axis=-1)


# ---------------------------------------------------------------------------
# In-kernel PE constants.
#   G2 (2*raw_dim, n_enc_pad) bf16 : stacked [G; G] frequency/gather matrix so that
#       [x_hi | x_lo] @ G2 = x_hi@G + x_lo@G  (one matmul, f32 accumulation).
#       Entries are 0 or 2**k -> exact in bf16.
#   blend (3, n_enc_pad) f32 : row0 = identity mask, row1 = trig mask,
#       row2 = per-column phase offset (pi/2 for cos columns) so a single sin covers
#       both sin and cos columns.
# Column order matches the torch module's concat order exactly.
# ---------------------------------------------------------------------------
def _build_pe_constants(input_pe_params):
    raw_dim = sum(d for _, d, _ in input_pe_params)
    cols = []  # (raw_col, freq, kind)   kind: 0=id, 1=sin, 2=cos
    c0 = 0
    for _name, d, n in input_pe_params:
        for c in range(d):
            cols.append((c0 + c, 1.0, 0))          # include_input
        for k in range(n):
            f = 2.0 ** k                           # log-sampled frequencies
            for c in range(d):
                cols.append((c0 + c, f, 1))        # sin(f * x)
            for c in range(d):
                cols.append((c0 + c, f, 2))        # cos(f * x)
        c0 += d
    n_enc = len(cols)
    n_enc_pad = _round_up(n_enc, 128)              # lane-align the encoding width
    G = np.zeros((raw_dim, n_enc_pad), np.float32)
    blend = np.zeros((3, n_enc_pad), np.float32)
    for j, (c, f, kind) in enumerate(cols):
        G[c, j] = f
        if kind == 0:
            blend[0, j] = 1.0
        else:
            blend[1, j] = 1.0
            if kind == 2:
                blend[2, j] = math.pi / 2.0        # cos(x) = sin(x + pi/2)
    G2 = np.vstack([G, G])
    return (jnp.asarray(G2, jnp.bfloat16), jnp.asarray(blend, jnp.float32),
            n_enc, n_enc_pad, raw_dim)


# ---------------------------------------------------------------------------
# Fused kernel: PE (single stacked matmul + single-sin blend) + Linear/ReLU MLP with
# bf16 matmul operands and f32 accumulation; final layer is pure Linear
# (outermost_linear=True).  When out_features == 1 the last layer runs on VPU + XLU
# (multiply + lane reduce) instead of a wasteful N=1 MXU matmul.
# ---------------------------------------------------------------------------
def _make_radiance_kernel(num_linear, final_on_vpu):
    def kernel(*refs):
        x_ref, g2_ref, blend_ref = refs[0], refs[1], refs[2]
        o_ref = refs[-1]
        wb = refs[3:-1]                      # alternating (weight, bias)

        # phase = [x_hi | x_lo] @ [G; G]  — bf16 operands, f32 accumulation.
        phase = jnp.dot(x_ref[...], g2_ref[...], preferred_element_type=jnp.float32)

        m_id = blend_ref[0:1, :]
        m_trig = blend_ref[1:2, :]
        off = blend_ref[2:3, :]
        # Single sin covers both sin and cos columns (EUP, overlaps MXU).
        enc = m_id * phase + m_trig * jnp.sin(phase + off)

        act = enc                            # current activation in f32
        h = enc.astype(jnp.bfloat16)         # bf16 view for the next MXU dot
        n_mxu = num_linear - 1 if final_on_vpu else num_linear
        for li in range(n_mxu):
            w = wb[2 * li][...]              # (din, dout) bf16
            b = wb[2 * li + 1][...]          # (1, dout)  f32
            acc = jnp.dot(h, w, preferred_element_type=jnp.float32) + b
            if li < num_linear - 1:
                act = jnp.maximum(acc, 0.0)  # ReLU in f32
                h = act.astype(jnp.bfloat16)
            else:
                act = acc                    # outermost layer is linear
                h = acc

        if final_on_vpu:
            w_last = wb[2 * (num_linear - 1)][...]      # (1, H)  f32 row
            b_last = wb[2 * (num_linear - 1) + 1][...]  # (1, 1)  f32
            out = jnp.sum(act * w_last, axis=-1, keepdims=True) + b_last
        else:
            out = act
        o_ref[...] = out.astype(o_ref.dtype)
    return kernel


def radiance_mlp_pallas(flat_raw, params, tm=2048):
    """flat_raw: (M, raw_dim) f32 raw concatenated coords -> (M, out_features) f32."""
    M, raw_dim = flat_raw.shape
    out_f = params['out_features']
    k_weights, k_biases = params['kernel_weights'], params['kernel_biases']
    num_linear = len(k_weights)
    final_on_vpu = params['final_on_vpu']
    G2, blend = params['pe_g2'], params['pe_blend']
    n_enc_pad = G2.shape[1]

    # Row tile: big (amortize ~0.35us/step), clamped for small inputs, and kept such
    # that the grid has >= 2 steps when possible (v7x: 2 TensorCores share the
    # "parallel" grid axis).  Irrelevant overhead on v5e/v6e (single TC).
    m_128 = _round_up(max(M, 1), 128)
    tm = min(tm, m_128)
    half = ((m_128 // 2) // 128) * 128
    if half >= 128:
        tm = min(tm, half) if tm > half else tm
    m_pad = _round_up(M, tm)

    # Hi/lo split of the raw coords, stacked to (M, 2*raw_dim) bf16:
    #   x_hi is bf16-round(x) (exact products with 2^k), x_lo the bf16-rounded residual;
    #   worst-case phase error at f=2^9 is ~2^-9 rad — well inside tolerance.
    # HBM traffic is unchanged (2*raw_dim*2 B/row == raw_dim*4 B/row).
    x_hi = flat_raw.astype(jnp.bfloat16)
    x_lo = (flat_raw - x_hi.astype(jnp.float32)).astype(jnp.bfloat16)
    xs = jnp.concatenate([x_hi, x_lo], axis=-1)          # (M, 2*raw_dim) bf16
    if m_pad != M:                                       # pad only the ragged tail
        xs = jnp.zeros((m_pad, 2 * raw_dim), jnp.bfloat16).at[:M].set(xs)

    in_specs = [pl.BlockSpec((tm, 2 * raw_dim), lambda i: (i, 0)),
                pl.BlockSpec(G2.shape, lambda i: (0, 0)),
                pl.BlockSpec(blend.shape, lambda i: (0, 0))]
    args = [xs, G2, blend]
    for w, b in zip(k_weights, k_biases):
        in_specs.append(pl.BlockSpec(w.shape, lambda i: (0, 0)))
        in_specs.append(pl.BlockSpec(b.shape, lambda i: (0, 0)))
        args.extend([w, b])
    out_specs = pl.BlockSpec((tm, out_f), lambda i: (i, 0))

    # Scheduling hint for XLA around the custom call.
    flops = 2 * m_pad * (2 * raw_dim) * n_enc_pad
    for w in params['weights']:
        flops += 2 * m_pad * int(w.shape[0]) * int(w.shape[1])
    transcendentals = m_pad * n_enc_pad
    const_bytes = (int(G2.size) * 2 + int(blend.size) * 4
                   + sum(int(w.size) * w.dtype.itemsize for w in k_weights)
                   + sum(int(b.size) * 4 for b in k_biases))
    bytes_accessed = m_pad * (2 * raw_dim * 2 + out_f * 4) + const_bytes
    cost = pl.CostEstimate(flops=int(flops), transcendentals=int(transcendentals),
                           bytes_accessed=int(bytes_accessed))

    out = pl.pallas_call(
        _make_radiance_kernel(num_linear, final_on_vpu),
        out_shape=jax.ShapeDtypeStruct((m_pad, out_f), jnp.float32),
        grid_spec=pltpu.PrefetchScalarGridSpec(
            num_scalar_prefetch=0,
            grid=(m_pad // tm,),
            in_specs=in_specs,
            out_specs=out_specs),
        compiler_params=pltpu.CompilerParams(
            dimension_semantics=("parallel",),
            vmem_limit_bytes=32 * 1024 * 1024),   # safe on v5e/v6e/v7x; helps v5e at big tm
        cost_estimate=cost,
    )(*args)
    return out[:M] if m_pad != M else out


# ---------------------------------------------------------------------------
# Parameter construction (deterministic): kaiming_uniform(relu) weights,
# torch-default uniform biases.  Kernel-ready copies (bf16 weights, padded layer-0,
# transposed final row for the VPU final layer) + PE constants built once here.
# ---------------------------------------------------------------------------
def build_radiance_net_params(key,
                              out_features=1,
                              hidden_features=128,
                              num_hidden_layers=2,
                              input_pe_params=(('ray_samples', 3, 10),
                                               ('ray_orientations', 6, 4))):
    G2, blend, n_enc, n_enc_pad, raw_dim = _build_pe_constants(input_pe_params)
    dims = [n_enc] + [hidden_features] * (num_hidden_layers + 1) + [out_features]
    num_linear = len(dims) - 1
    final_on_vpu = (out_features == 1 and num_linear >= 2)

    weights, biases, kernel_weights, kernel_biases = [], [], [], []
    for i in range(num_linear):
        fan_in, fan_out = dims[i], dims[i + 1]
        key, kw, kb = jax.random.split(key, 3)
        bw = math.sqrt(2.0) * math.sqrt(3.0 / fan_in)   # kaiming_uniform_, relu
        bb = 1.0 / math.sqrt(fan_in)                    # torch Linear default bias
        w = jax.random.uniform(kw, (fan_in, fan_out), jnp.float32, -bw, bw)
        b = jax.random.uniform(kb, (1, fan_out), jnp.float32, -bb, bb)
        weights.append(w)
        biases.append(b)
        if i == num_linear - 1 and final_on_vpu:
            kernel_weights.append(w.T)                  # (1, H) f32 row for VPU reduce
        else:
            if i == 0 and n_enc_pad != n_enc:           # zero rows for padded enc columns
                w_k = jnp.zeros((n_enc_pad, fan_out), jnp.float32).at[:fan_in, :].set(w)
            else:
                w_k = w
            kernel_weights.append(w_k.astype(jnp.bfloat16))
        kernel_biases.append(b)

    return {'weights': weights, 'biases': biases,
            'kernel_weights': kernel_weights, 'kernel_biases': kernel_biases,
            'pe_g2': G2, 'pe_blend': blend,
            'final_on_vpu': final_on_vpu,
            'input_pe_params': tuple(input_pe_params),
            'out_features': out_features, 'raw_dim': raw_dim}


def radiance_net_forward(params, model_input, tm=2048, return_encoded_inputs=False):
    raw_list = [model_input[name].astype(jnp.float32)
                for name, _, _ in params['input_pe_params']]
    coords_raw = jnp.concatenate(raw_list, axis=-1)
    if coords_raw.ndim == 2:
        coords_raw = coords_raw[None, :, :]
    B, N, C = coords_raw.shape
    flat = coords_raw.reshape(B * N, C)
    out_flat = radiance_mlp_pallas(flat, params, tm=tm)
    output = out_flat.reshape(B, N, params['out_features'])

    if return_encoded_inputs:
        model_in = {name: positional_encoding(model_input[name].astype(jnp.float32), n)
                    for name, _d, n in params['input_pe_params']}
    else:
        # TODO(synk): the torch module returns the *encoded* inputs in model_in; the PE
        # now lives inside the kernel, so by default return the raw inputs to avoid
        # re-materializing the encoding in HBM (set return_encoded_inputs=True to match).
        model_in = dict(model_input)
    return {'model_in': model_in, 'model_out': {'output': output}}


# ---------------------------------------------------------------------------
# Pure-JAX f32 reference (no Pallas) for correctness checking
# ---------------------------------------------------------------------------
def radiance_net_reference(params, model_input):
    enc = [positional_encoding(model_input[name].astype(jnp.float32), n)
           for name, _d, n in params['input_pe_params']]
    coords = jnp.concatenate(enc, axis=-1)
    if coords.ndim == 2:
        coords = coords[None, :, :]
    h = coords
    nL = len(params['weights'])
    for i, (w, b) in enumerate(zip(params['weights'], params['biases'])):
        h = h @ w + b[0]
        if i < nL - 1:
            h = jnp.maximum(h, 0.0)
    return h


if __name__ == "__main__":
    key = jax.random.PRNGKey(0)
    kp, ks, ko = jax.random.split(key, 3)

    # small shapes: batch=2, 64 samples per ray batch
    B, N = 2, 64
    model_input = {
        'ray_samples': jax.random.uniform(ks, (B, N, 3), jnp.float32, -1.0, 1.0),
        'ray_orientations': jax.random.uniform(ko, (B, N, 6), jnp.float32, -1.0, 1.0),
    }

    params = build_radiance_net_params(
        kp, out_features=1, hidden_features=128, num_hidden_layers=2,
        input_pe_params=(('ray_samples', 3, 10), ('ray_orientations', 6, 4)))

    result = radiance_net_forward(params, model_input)
    out = result['model_out']['output']
    jax.block_until_ready(out)

    ref = radiance_net_reference(params, model_input)
    jax.block_until_ready(ref)

    assert out.shape == (B, N, 1), out.shape
    # bf16 MXU operands with f32 accumulation (+ hi/lo PE split, pi/2 single-sin):
    # loose-ish tolerance vs pure-f32 reference while still catching structural errors.
    if not jnp.allclose(out, ref, rtol=5e-2, atol=5e-2):
        max_err = float(jnp.max(jnp.abs(out - ref)))
        raise AssertionError(
            f"Pallas RadianceNet output mismatch vs f32 reference (max abs err {max_err})")

    print("KERNEL_OK")
</pallas_src>

<mosaic_0001>
module attributes {stable_mosaic.version = 11 : i64} {
  func.func @kernel(%arg0: i32, %arg1: memref<128x18xbf16, #tpu.memory_space<vmem>>, %arg2: memref<18x128xbf16, #tpu.memory_space<vmem>>, %arg3: memref<3x128xf32, #tpu.memory_space<vmem>>, %arg4: memref<128x128xbf16, #tpu.memory_space<vmem>>, %arg5: memref<1x128xf32, #tpu.memory_space<vmem>>, %arg6: memref<128x128xbf16, #tpu.memory_space<vmem>>, %arg7: memref<1x128xf32, #tpu.memory_space<vmem>>, %arg8: memref<128x128xbf16, #tpu.memory_space<vmem>>, %arg9: memref<1x128xf32, #tpu.memory_space<vmem>>, %arg10: memref<1x128xf32, #tpu.memory_space<vmem>>, %arg11: memref<1x1xf32, #tpu.memory_space<vmem>>, %arg12: memref<128x1xf32, #tpu.memory_space<vmem>>) attributes {dimension_semantics = [#tpu.dimension_semantics<parallel>], iteration_bounds = array<i64: 1>, scalar_prefetch = 0 : i64, scratch_operands = 0 : i64, tpu.core_type = #tpu.core_type<tc>, window_params = [{transform_indices = @transform_0, window_bounds = array<i64: 128, 18>}, {pipeline_mode = #tpu.pipeline_mode<synchronous>, transform_indices = @transform_1, window_bounds = array<i64: 18, 128>}, {pipeline_mode = #tpu.pipeline_mode<synchronous>, transform_indices = @transform_2, window_bounds = array<i64: 3, 128>}, {pipeline_mode = #tpu.pipeline_mode<synchronous>, transform_indices = @transform_3, window_bounds = array<i64: 128, 128>}, {pipeline_mode = #tpu.pipeline_mode<synchronous>, transform_indices = @transform_4, window_bounds = array<i64: 1, 128>}, {pipeline_mode = #tpu.pipeline_mode<synchronous>, transform_indices = @transform_5, window_bounds = array<i64: 128, 128>}, {pipeline_mode = #tpu.pipeline_mode<synchronous>, transform_indices = @transform_6, window_bounds = array<i64: 1, 128>}, {pipeline_mode = #tpu.pipeline_mode<synchronous>, transform_indices = @transform_7, window_bounds = array<i64: 128, 128>}, {pipeline_mode = #tpu.pipeline_mode<synchronous>, transform_indices = @transform_8, window_bounds = array<i64: 1, 128>}, {pipeline_mode = #tpu.pipeline_mode<synchronous>, transform_indices = @transform_9, window_bounds = array<i64: 1, 128>}, {pipeline_mode = #tpu.pipeline_mode<synchronous>, transform_indices = @transform_10, window_bounds = array<i64: 1, 1>}, {transform_indices = @transform_11, window_bounds = array<i64: 128, 1>}]} {
    %c0 = arith.constant 0 : index
    %c0_0 = arith.constant 0 : index
    %0 = vector.load %arg1[%c0, %c0_0] : memref<128x18xbf16, #tpu.memory_space<vmem>>, vector<128x18xbf16>
    %c0_1 = arith.constant 0 : index
    %c0_2 = arith.constant 0 : index
    %1 = vector.load %arg2[%c0_1, %c0_2] : memref<18x128xbf16, #tpu.memory_space<vmem>>, vector<18x128xbf16>
    %cst = arith.constant dense<0.000000e+00> : vector<128x128xf32>
    %2 = tpu.matmul %0, %1, %cst {dimension_numbers = #tpu.dot_dimension_numbers<[1], [0], [0], [1], [0, 0, 1, 1], [], []>} : vector<128x18xbf16>, vector<18x128xbf16>, vector<128x128xf32> -> vector<128x128xf32>
    %c0_3 = arith.constant 0 : index
    %c0_4 = arith.constant 0 : index
    %3 = vector.load %arg3[%c0_3, %c0_4] : memref<3x128xf32, #tpu.memory_space<vmem>>, vector<1x128xf32>
    %c1 = arith.constant 1 : index
    %c0_5 = arith.constant 0 : index
    %4 = vector.load %arg3[%c1, %c0_5] : memref<3x128xf32, #tpu.memory_space<vmem>>, vector<1x128xf32>
    %c2 = arith.constant 2 : index
    %c0_6 = arith.constant 0 : index
    %5 = vector.load %arg3[%c2, %c0_6] : memref<3x128xf32, #tpu.memory_space<vmem>>, vector<1x128xf32>
    %6 = vector.broadcast %3 : vector<1x128xf32> to vector<128x128xf32>
    %7 = arith.mulf %6, %2 : vector<128x128xf32>
    %8 = vector.broadcast %5 : vector<1x128xf32> to vector<128x128xf32>
    %9 = arith.addf %2, %8 : vector<128x128xf32>
    %10 = math.sin %9 : vector<128x128xf32>
    %11 = vector.broadcast %4 : vector<1x128xf32> to vector<128x128xf32>
    %12 = arith.mulf %11, %10 : vector<128x128xf32>
    %13 = arith.addf %7, %12 : vector<128x128xf32>
    %14 = arith.truncf %13 : vector<128x128xf32> to vector<128x128xbf16>
    %c0_7 = arith.constant 0 : index
    %c0_8 = arith.constant 0 : index
    %15 = vector.load %arg4[%c0_7, %c0_8] : memref<128x128xbf16, #tpu.memory_space<vmem>>, vector<128x128xbf16>
    %c0_9 = arith.constant 0 : index
    %c0_10 = arith.constant 0 : index
    %16 = vector.load %arg5[%c0_9, %c0_10] : memref<1x128xf32, #tpu.memory_space<vmem>>, vector<1x128xf32>
    %cst_11 = arith.constant dense<0.000000e+00> : vector<128x128xf32>
    %17 = tpu.matmul %14, %15, %cst_11 {dimension_numbers = #tpu.dot_dimension_numbers<[1], [0], [0], [1], [0, 0, 1, 1], [], []>} : vector<128x128xbf16>, vector<128x128xbf16>, vector<128x128xf32> -> vector<128x128xf32>
    %18 = vector.broadcast %16 : vector<1x128xf32> to vector<128x128xf32>
    %19 = arith.addf %17, %18 : vector<128x128xf32>
    %cst_12 = arith.constant 0.000000e+00 : f32
    %20 = vector.broadcast %cst_12 : f32 to vector<128x128xf32>
    %21 = arith.maximumf %19, %20 : vector<128x128xf32>
    %22 = arith.truncf %21 : vector<128x128xf32> to vector<128x128xbf16>
    %c0_13 = arith.constant 0 : index
    %c0_14 = arith.constant 0 : index
    %23 = vector.load %arg6[%c0_13, %c0_14] : memref<128x128xbf16, #tpu.memory_space<vmem>>, vector<128x128xbf16>
    %c0_15 = arith.constant 0 : index
    %c0_16 = arith.constant 0 : index
    %24 = vector.load %arg7[%c0_15, %c0_16] : memref<1x128xf32, #tpu.memory_space<vmem>>, vector<1x128xf32>
    %cst_17 = arith.constant dense<0.000000e+00> : vector<128x128xf32>
    %25 = tpu.matmul %22, %23, %cst_17 {dimension_numbers = #tpu.dot_dimension_numbers<[1], [0], [0], [1], [0, 0, 1, 1], [], []>} : vector<128x128xbf16>, vector<128x128xbf16>, vector<128x128xf32> -> vector<128x128xf32>
    %26 = vector.broadcast %24 : vector<1x128xf32> to vector<128x128xf32>
    %27 = arith.addf %25, %26 : vector<128x128xf32>
    %cst_18 = arith.constant 0.000000e+00 : f32
    %28 = vector.broadcast %cst_18 : f32 to vector<128x128xf32>
    %29 = arith.maximumf %27, %28 : vector<128x128xf32>
    %30 = arith.truncf %29 : vector<128x128xf32> to vector<128x128xbf16>
    %c0_19 = arith.constant 0 : index
    %c0_20 = arith.constant 0 : index
    %31 = vector.load %arg8[%c0_19, %c0_20] : memref<128x128xbf16, #tpu.memory_space<vmem>>, vector<128x128xbf16>
    %c0_21 = arith.constant 0 : index
    %c0_22 = arith.constant 0 : index
    %32 = vector.load %arg9[%c0_21, %c0_22] : memref<1x128xf32, #tpu.memory_space<vmem>>, vector<1x128xf32>
    %cst_23 = arith.constant dense<0.000000e+00> : vector<128x128xf32>
    %33 = tpu.matmul %30, %31, %cst_23 {dimension_numbers = #tpu.dot_dimension_numbers<[1], [0], [0], [1], [0, 0, 1, 1], [], []>} : vector<128x128xbf16>, vector<128x128xbf16>, vector<128x128xf32> -> vector<128x128xf32>
    %34 = vector.broadcast %32 : vector<1x128xf32> to vector<128x128xf32>
    %35 = arith.addf %33, %34 : vector<128x128xf32>
    %cst_24 = arith.constant 0.000000e+00 : f32
    %36 = vector.broadcast %cst_24 : f32 to vector<128x128xf32>
    %37 = arith.maximumf %35, %36 : vector<128x128xf32>
    %c0_25 = arith.constant 0 : index
    %c0_26 = arith.constant 0 : index
    %38 = vector.load %arg10[%c0_25, %c0_26] : memref<1x128xf32, #tpu.memory_space<vmem>>, vector<1x128xf32>
    %c0_27 = arith.constant 0 : index
    %c0_28 = arith.constant 0 : index
    %39 = vector.load %arg11[%c0_27, %c0_28] : memref<1x1xf32, #tpu.memory_space<vmem>>, vector<1x1xf32>
    %40 = vector.broadcast %38 : vector<1x128xf32> to vector<128x128xf32>
    %41 = arith.mulf %37, %40 : vector<128x128xf32>
    %cst_29 = arith.constant dense<0.000000e+00> : vector<128xf32>
    %42 = vector.multi_reduction <add>, %41, %cst_29 [1] : vector<128x128xf32> to vector<128xf32>
    %43 = vector.shape_cast %42 : vector<128xf32> to vector<128x1xf32>
    %44 = vector.broadcast %39 : vector<1x1xf32> to vector<128x1xf32>
    %45 = arith.addf %43, %44 : vector<128x1xf32>
    %c0_30 = arith.constant 0 : index
    %c0_31 = arith.constant 0 : index
    %46 = vector.load %arg12[%c0_30, %c0_31] : memref<128x1xf32, #tpu.memory_space<vmem>>, vector<128x1xf32>
    tpu.vector_store %arg12[%c0_30, %c0_31], %45 {strides = array<i32>} : memref<128x1xf32, #tpu.memory_space<vmem>>, vector<128x1xf32>,
    return
  }
  func.func @transform_0(%arg0: i32) -> (i32, i32) {
    %c0_i32 = arith.constant 0 : i32
    %c0_i32_0 = arith.constant 0 : i32
    return %arg0, %c0_i32 : i32, i32
  }
  func.func @transform_1(%arg0: i32) -> (i32, i32) {
    %c0_i32 = arith.constant 0 : i32
    %c0_i32_0 = arith.constant 0 : i32
    %c0_i32_1 = arith.constant 0 : i32
    return %c0_i32, %c0_i32_0 : i32, i32
  }
  func.func @transform_2(%arg0: i32) -> (i32, i32) {
    %c0_i32 = arith.constant 0 : i32
    %c0_i32_0 = arith.constant 0 : i32
    %c0_i32_1 = arith.constant 0 : i32
    return %c0_i32, %c0_i32_0 : i32, i32
  }
  func.func @transform_3(%arg0: i32) -> (i32, i32) {
    %c0_i32 = arith.constant 0 : i32
    %c0_i32_0 = arith.constant 0 : i32
    %c0_i32_1 = arith.constant 0 : i32
    return %c0_i32, %c0_i32_0 : i32, i32
  }
  func.func @transform_4(%arg0: i32) -> (i32, i32) {
    %c0_i32 = arith.constant 0 : i32
    %c0_i32_0 = arith.constant 0 : i32
    %c0_i32_1 = arith.constant 0 : i32
    return %c0_i32, %c0_i32_0 : i32, i32
  }
  func.func @transform_5(%arg0: i32) -> (i32, i32) {
    %c0_i32 = arith.constant 0 : i32
    %c0_i32_0 = arith.constant 0 : i32
    %c0_i32_1 = arith.constant 0 : i32
    return %c0_i32, %c0_i32_0 : i32, i32
  }
  func.func @transform_6(%arg0: i32) -> (i32, i32) {
    %c0_i32 = arith.constant 0 : i32
    %c0_i32_0 = arith.constant 0 : i32
    %c0_i32_1 = arith.constant 0 : i32
    return %c0_i32, %c0_i32_0 : i32, i32
  }
  func.func @transform_7(%arg0: i32) -> (i32, i32) {
    %c0_i32 = arith.constant 0 : i32
    %c0_i32_0 = arith.constant 0 : i32
    %c0_i32_1 = arith.constant 0 : i32
    return %c0_i32, %c0_i32_0 : i32, i32
  }
  func.func @transform_8(%arg0: i32) -> (i32, i32) {
    %c0_i32 = arith.constant 0 : i32
    %c0_i32_0 = arith.constant 0 : i32
    %c0_i32_1 = arith.constant 0 : i32
    return %c0_i32, %c0_i32_0 : i32, i32
  }
  func.func @transform_9(%arg0: i32) -> (i32, i32) {
    %c0_i32 = arith.constant 0 : i32
    %c0_i32_0 = arith.constant 0 : i32
    %c0_i32_1 = arith.constant 0 : i32
    return %c0_i32, %c0_i32_0 : i32, i32
  }
  func.func @transform_10(%arg0: i32) -> (i32, i32) {
    %c0_i32 = arith.constant 0 : i32
    %c0_i32_0 = arith.constant 0 : i32
    %c0_i32_1 = arith.constant 0 : i32
    return %c0_i32, %c0_i32_0 : i32, i32
  }
  func.func @transform_11(%arg0: i32) -> (i32, i32) {
    %c0_i32 = arith.constant 0 : i32
    %c0_i32_0 = arith.constant 0 : i32
    return %arg0, %c0_i32 : i32, i32
  }
}

</mosaic_0001>

<llo_original>
// kernel: tpu_custom_call.1
$region0: #{tpu_custom_call.1}
  #allocation0 [shape = 'u32[]', space=smem, size = 0x4, offset = 0x4, fixed_abs, tag = 'smem constant byte address 0x4 - core index']
  #allocation1 [shape = 'u32[72,128]{1,0:T(1,128)}', space=vmem, size = 0x9000, scoped, tag = 'internal scratch']
  #allocation2 [shape = 'f32[1,1]{1,0:T(1,128)S(1)}', space=vmem, size = 0x200, scoped, tag = 'scoped memory for tpu_custom_call.1']
  %s0 = inlined_call_operand.vmem [shape: bf16[128,18], index: 0, kind: input, shape index: {}]
  %s1 = inlined_call_operand.vmem [shape: bf16[18,128], index: 1, kind: input, shape index: {}]
  %s2 = inlined_call_operand.vmem [shape: f32[3,128], index: 2, kind: input, shape index: {}]
  %s3 = inlined_call_operand.vmem [shape: bf16[128,128], index: 3, kind: input, shape index: {}]
  %s4 = inlined_call_operand.vmem [shape: f32[1,128], index: 4, kind: input, shape index: {}]
  %s5 = inlined_call_operand.hbm [shape: bf16[128,128], index: 5, kind: input, shape index: {}]
  %s6 = inlined_call_operand.vmem [shape: f32[1,128], index: 6, kind: input, shape index: {}]
  %s7 = inlined_call_operand.hbm [shape: bf16[128,128], index: 7, kind: input, shape index: {}]
  %s8 = inlined_call_operand.vmem [shape: f32[1,128], index: 8, kind: input, shape index: {}]
  %s9 = inlined_call_operand.vmem [shape: f32[1,128], index: 9, kind: input, shape index: {}]
  %s10 = inlined_call_operand.<no memory space> [shape: f32[1,1], index: 10, kind: input, shape index: {}]
  %s11 = inlined_call_operand.vmem [shape: f32[128,1], index: 11, kind: output, shape index: {}]
  %s12 = sld [smem:[#allocation0]]
  $region62: #{tpu_custom_call.1} parent=0
    _
  %s14 = ssub.s32 1, %s12
  %s15 = scalar_select 0, %s14, %s12
  %v16 = vstv %s10
  %17 = vst [vmem:[#allocation2] sm:$0x1] %v16
  $region1: #{tpu_custom_call.1} parent=0
    #allocation3 [shape = 'u8[32768]{0}', space=vmem, size = 0x8000, scoped, tag = 'input window, operand 5, single buffered']
    #allocation4 [shape = 's32[1]{0}', space=sflag, size = 0x4, scoped, tag = 'scoped memory for tpu_custom_call.1']
    #allocation5 [shape = 'u8[32768]{0}', space=vmem, size = 0x8000, scoped, tag = 'input window, operand 7, single buffered']
    #allocation6 [shape = 's32[1]{0}', space=sflag, size = 0x4, scoped, tag = 'scoped memory for tpu_custom_call.1']
    %18 = vsyncpa [#allocation4], 0
    %19 = vsyncpa [#allocation6], 0
    // Predicated region
    $region2: #{tpu_custom_call.1} parent=1 // pred_check
      _
    $region3: #{tpu_custom_call.1} parent=1 // pred_check_branch
      %21 = sbr.rel (0) target = $region5
    $region4: #{tpu_custom_call.1} parent=1 // pred_region
      _
    $region5: #{tpu_custom_call.1} parent=1 // pred_fallthru
      _
    // Predicated region
    $region6: #{tpu_custom_call.1} parent=1 // pred_check
      _
    $region7: #{tpu_custom_call.1} parent=1 // pred_check_branch
      %23 = sbr.rel (0) target = $region9
    $region8: #{tpu_custom_call.1} parent=1 // pred_region
      _
    $region9: #{tpu_custom_call.1} parent=1 // pred_fallthru
      _
    // Predicated region
    $region10: #{tpu_custom_call.1} parent=1 // pred_check
      _
    $region11: #{tpu_custom_call.1} parent=1 // pred_check_branch
      %25 = sbr.rel (0) target = $region13
    $region12: #{tpu_custom_call.1} parent=1 // pred_region
      _
    $region13: #{tpu_custom_call.1} parent=1 // pred_fallthru
      _
    // Predicated region
    $region14: #{tpu_custom_call.1} parent=1 // pred_check
      _
    $region15: #{tpu_custom_call.1} parent=1 // pred_check_branch
      %27 = sbr.rel (0) target = $region17
    $region16: #{tpu_custom_call.1} parent=1 // pred_region
      _
    $region17: #{tpu_custom_call.1} parent=1 // pred_fallthru
      _
    // Predicated region
    $region18: #{tpu_custom_call.1} parent=1 // pred_check
      _
    $region19: #{tpu_custom_call.1} parent=1 // pred_check_branch
      %29 = sbr.rel (0) target = $region21
    $region20: #{tpu_custom_call.1} parent=1 // pred_region
      _
    $region21: #{tpu_custom_call.1} parent=1 // pred_fallthru
      _
    // Predicated region
    $region22: #{tpu_custom_call.1} parent=1 // pred_check
      _
    $region23: #{tpu_custom_call.1} parent=1 // pred_check_branch
      %31 = sbr.rel (0) target = $region25
    $region24: #{tpu_custom_call.1} parent=1 // pred_region
      %33 = vsyncadd [#allocation4], 0
      %s34 = sshll.u32 %s5, 4
      %s35 = int_to_ptr.hbm [resolvable:$true] %s34
      %s36 = sshll.u32 [#allocation3], 4
      %s37 = int_to_ptr.vmem [resolvable:$true] %s36
      %42 = dma.hbm_to_vmem [thread:$0]  %s35, 1024, %s37, [#allocation4], 64, 64, 4
    $region25: #{tpu_custom_call.1} parent=1 // pred_fallthru
      _
    // Predicated region
    $region26: #{tpu_custom_call.1} parent=1 // pred_check
      _
    $region27: #{tpu_custom_call.1} parent=1 // pred_check_branch
      %44 = sbr.rel (0) target = $region29
    $region28: #{tpu_custom_call.1} parent=1 // pred_region
      _
    $region29: #{tpu_custom_call.1} parent=1 // pred_fallthru
      _
    // Predicated region
    $region30: #{tpu_custom_call.1} parent=1 // pred_check
      _
    $region31: #{tpu_custom_call.1} parent=1 // pred_check_branch
      %46 = sbr.rel (0) target = $region33
    $region32: #{tpu_custom_call.1} parent=1 // pred_region
      %48 = vsyncadd [#allocation6], 0
      %s49 = sshll.u32 %s7, 4
      %s50 = int_to_ptr.hbm [resolvable:$true] %s49
      %s51 = sshll.u32 [#allocation5], 4
      %s52 = int_to_ptr.vmem [resolvable:$true] %s51
      %57 = dma.hbm_to_vmem [thread:$0]  %s50, 1024, %s52, [#allocation6], 64, 64, 4
    $region33: #{tpu_custom_call.1} parent=1 // pred_fallthru
      _
    // Predicated region
    $region34: #{tpu_custom_call.1} parent=1 // pred_check
      _
    $region35: #{tpu_custom_call.1} parent=1 // pred_check_branch
      %59 = sbr.rel (0) target = $region37
    $region36: #{tpu_custom_call.1} parent=1 // pred_region
      _
    $region37: #{tpu_custom_call.1} parent=1 // pred_fallthru
      _
    // Predicated region
    $region38: #{tpu_custom_call.1} parent=1 // pred_check
      _
    $region39: #{tpu_custom_call.1} parent=1 // pred_check_branch
      %61 = sbr.rel (0) target = $region41
    $region40: #{tpu_custom_call.1} parent=1 // pred_region
      _
    $region41: #{tpu_custom_call.1} parent=1 // pred_fallthru
      _
    // Predicated region
    $region42: #{tpu_custom_call.1} parent=1 // pred_check
      _
    $region43: #{tpu_custom_call.1} parent=1 // pred_check_branch
      %63 = sbr.rel (0) target = $region45
    $region44: #{tpu_custom_call.1} parent=1 // pred_region
      _
    $region45: #{tpu_custom_call.1} parent=1 // pred_fallthru
      _
    // Predicated region
    $region46: #{tpu_custom_call.1} parent=1 // pred_check
      _
    $region47: #{tpu_custom_call.1} parent=1 // pred_check_branch
      %65 = sbr.rel (0) target = $region49
    $region48: #{tpu_custom_call.1} parent=1 // pred_region
      %67 = dma.done [#allocation4], 1024
    $region49: #{tpu_custom_call.1} parent=1 // pred_fallthru
      _
    // Predicated region
    $region50: #{tpu_custom_call.1} parent=1 // pred_check
      _
    $region51: #{tpu_custom_call.1} parent=1 // pred_check_branch
      %69 = sbr.rel (0) target = $region53
    $region52: #{tpu_custom_call.1} parent=1 // pred_region
      %71 = dma.done [#allocation6], 1024
    $region53: #{tpu_custom_call.1} parent=1 // pred_fallthru
      _
    %v73 = vld [vmem:[%s0] sm:$0xf]
    %v74 = vld [vmem:[%s0 + $0x4] sm:$0xf]
    %v75 = vld [vmem:[%s0 + $0x8] sm:$0xf]
    %v76 = vld [vmem:[%s0 + $0xc] sm:$0xf]
    %v77 = vld [vmem:[%s0 + $0x10] sm:$0xf]
    %v78 = vld [vmem:[%s0 + $0x14] sm:$0xf]
    %v79 = vld [vmem:[%s0 + $0x18] sm:$0xf]
    %v80 = vld [vmem:[%s0 + $0x1c] sm:$0xf]
    %v81 = vld [vmem:[%s0 + $0x20] sm:$0xf]
    %v82 = vld [vmem:[%s0 + $0x24] sm:$0xf]
    %v83 = vld [vmem:[%s0 + $0x28] sm:$0xf]
    %v84 = vld [vmem:[%s0 + $0x2c] sm:$0xf]
    %v85 = vld [vmem:[%s0 + $0x30] sm:$0xf]
    %v86 = vld [vmem:[%s0 + $0x34] sm:$0xf]
    %v87 = vld [vmem:[%s0 + $0x38] sm:$0xf]
    %v88 = vld [vmem:[%s0 + $0x3c] sm:$0xf]
    %v89 = vld [vmem:[%s1] sm:$0xf]
    %v90 = vld [vmem:[%s1 + $0x4] sm:$0xf]
    %v91 = vld [vmem:[%s1 + $0x8] sm:$0x1]
    %v108 = vunpack.c.l.b16 %v73
    %v109 = vunpack.c.l.b16 %v74
    %v110 = vunpack.c.l.b16 %v75
    %v111 = vunpack.c.l.b16 %v76
    %v112 = vunpack.c.l.b16 %v77
    %v113 = vunpack.c.l.b16 %v78
    %v114 = vunpack.c.l.b16 %v79
    %v115 = vunpack.c.l.b16 %v80
    %v116 = vunpack.c.l.b16 %v81
    %v117 = vunpack.c.l.b16 %v82
    %v118 = vunpack.c.l.b16 %v83
    %v119 = vunpack.c.l.b16 %v84
    %v120 = vunpack.c.l.b16 %v85
    %v121 = vunpack.c.l.b16 %v86
    %v122 = vunpack.c.l.b16 %v87
    %v123 = vunpack.c.l.b16 %v88
    %v124 = vpack.c.b16 %v109, %v108
    %v125 = vpack.c.b16 %v111, %v110
    %v126 = vpack.c.b16 %v113, %v112
    %v127 = vpack.c.b16 %v115, %v114
    %v128 = vpack.c.b16 %v117, %v116
    %v129 = vpack.c.b16 %v119, %v118
    %v130 = vpack.c.b16 %v121, %v120
    %v131 = vpack.c.b16 %v123, %v122
    %v135 = vunpack.c.l.b16 %v89
    %v136 = vunpack.c.l.b16 %v90
    %v137 = vunpack.c.l.b16 %v91
    %v138 = vpack.c.b16 %v136, %v135
    %v139 = vpack.c.b16 %v137, %v137
    %vm141 = vcmask 146432
    %v143 = vsel %vm141, %v124, 0
    %v146 = vsel %vm141, %v125, 0
    %v149 = vsel %vm141, %v126, 0
    %v152 = vsel %vm141, %v127, 0
    %v155 = vsel %vm141, %v128, 0
    %v158 = vsel %vm141, %v129, 0
    %v161 = vsel %vm141, %v130, 0
    %v164 = vsel %vm141, %v131, 0
    %vm166 = vcmask 1040384
    %v168 = vsel %vm166, %v139, 0
    %170 = vmatpush.bf16.msra.mxu0 0
    %171 = vmatpush.bf16.msra.mxu0 0
    %172 = vmatpush.bf16.msra.mxu0 0
    %173 = vmatpush.bf16.msra.mxu0 0
    %174 = vmatpush.bf16.msra.mxu0 0
    %175 = vmatpush.bf16.msra.mxu0 0
    %176 = vmatpush.bf16.msra.mxu0 %v168
    %177 = vmatpush.bf16.msra.mxu0 %v138
    %178 = vmatmul.bf16.gmra.mxu0 %v143
    %v179 = vpop.f32.mrf.mxu0
    %v180 = vadd.f32 0.0, %v179
    %v181 = vpop.f32.mrf.mxu0
    %v182 = vadd.f32 0.0, %v181
    %183 = vmatmul.bf16.gmra.mxu0 %v146
    %v184 = vpop.f32.mrf.mxu0
    %v185 = vadd.f32 0.0, %v184
    %v186 = vpop.f32.mrf.mxu0
    %v187 = vadd.f32 0.0, %v186
    %188 = vmatmul.bf16.gmra.mxu0 %v149
    %v189 = vpop.f32.mrf.mxu0
    %v190 = vadd.f32 0.0, %v189
    %v191 = vpop.f32.mrf.mxu0
    %v192 = vadd.f32 0.0, %v191
    %193 = vmatmul.bf16.gmra.mxu0 %v152
    %v194 = vpop.f32.mrf.mxu0
    %v195 = vadd.f32 0.0, %v194
    %v196 = vpop.f32.mrf.mxu0
    %v197 = vadd.f32 0.0, %v196
    %198 = vmatmul.bf16.gmra.mxu0 %v155
    %v199 = vpop.f32.mrf.mxu0
    %v200 = vadd.f32 0.0, %v199
    %v201 = vpop.f32.mrf.mxu0
    %v202 = vadd.f32 0.0, %v201
    %203 = vmatmul.bf16.gmra.mxu0 %v158
    %v204 = vpop.f32.mrf.mxu0
    %v205 = vadd.f32 0.0, %v204
    %v206 = vpop.f32.mrf.mxu0
    %v207 = vadd.f32 0.0, %v206
    %208 = vmatmul.bf16.gmra.mxu0 %v161
    %v209 = vpop.f32.mrf.mxu0
    %v210 = vadd.f32 0.0, %v209
    %v211 = vpop.f32.mrf.mxu0
    %v212 = vadd.f32 0.0, %v211
    %213 = vmatmul.bf16.gmra.mxu0 %v164
    %v214 = vpop.f32.mrf.mxu0
    %v215 = vadd.f32 0.0, %v214
    %v216 = vpop.f32.mrf.mxu0
    %v217 = vadd.f32 0.0, %v216
    %218 = vdwg.mxu0
    %v219 = vld [vmem:[%s2] sm:$0x1]
    %v220 = vld [vmem:[%s2 + $0x1] sm:$0x1]
    %v221 = vld [vmem:[%s2 + $0x2] sm:$0x1]
    %v222 = vperm.slane %v219, 0
    %v223 = vmul.f32 %v222, %v180
    %v224 = vmul.f32 %v222, %v182
    %v225 = vmul.f32 %v222, %v185
    %v226 = vmul.f32 %v222, %v187
    %v227 = vmul.f32 %v222, %v190
    %v228 = vmul.f32 %v222, %v192
    %v229 = vmul.f32 %v222, %v195
    %v230 = vmul.f32 %v222, %v197
    %v231 = vmul.f32 %v222, %v200
    %v232 = vmul.f32 %v222, %v202
    %v233 = vmul.f32 %v222, %v205
    %v234 = vmul.f32 %v222, %v207
    %v235 = vmul.f32 %v222, %v210
    %v236 = vmul.f32 %v222, %v212
    %v237 = vmul.f32 %v222, %v215
    %v238 = vmul.f32 %v222, %v217
    %v239 = vperm.slane %v221, 0
    %v240 = vadd.f32 %v180, %v239
    %v241 = vadd.f32 %v182, %v239
    %v242 = vadd.f32 %v185, %v239
    %v243 = vadd.f32 %v187, %v239
    %v244 = vadd.f32 %v190, %v239
    %v245 = vadd.f32 %v192, %v239
    %v246 = vadd.f32 %v195, %v239
    %v247 = vadd.f32 %v197, %v239
    %v248 = vadd.f32 %v200, %v239
    %v249 = vadd.f32 %v202, %v239
    %v250 = vadd.f32 %v205, %v239
    %v251 = vadd.f32 %v207, %v239
    %v252 = vadd.f32 %v210, %v239
    %v253 = vadd.f32 %v212, %v239
    %v254 = vadd.f32 %v215, %v239
    %v255 = vadd.f32 %v217, %v239
    %v256 = vand.u32 2147483647, %v240
    %vm257 = vcmp.le.f32.partialorder %v256, 0.7853982
    %vm258 = vcmp.lt.s32.totalorder %v240, 0
    %v259 = vand.u32 %v240, 2139095040
    %v260 = vshrl.u32 %v259, 23
    %v261 = vsub.s32 %v260, 127
    %v262 = vand.u32 2147483647, %v240
    %v263 = vand.u32 %v262, 8388607
    %v264 = vor.u32 %v263, 8388608
    %v265 = vsub.s32 0, %v264
    %v266 = vadd.s32 %v261, 1
    %vm267 = vcmp.gt.s32.totalorder %v266, 0
    %v268 = vsel %vm267, %v266, 0
    %v269 = vshrl.u32 %v268, 5
    %v270 = vand.u32 %v268, 31
    %v271 = vsub.s32 32, %v270
    %v272 = vshrl.u32 683565275, %v271
    %v273 = vshll.u32 683565275, %v270
    %v274 = vshrl.u32 2475754826, %v271
    %v275 = vor.u32 %v273, %v274
    %v276 = vshll.u32 2475754826, %v270
    %v277 = vshrl.u32 2131351028, %v271
    %v278 = vor.u32 %v276, %v277
    %v279 = vshll.u32 2131351028, %v270
    %v280 = vshrl.u32 2102212464, %v271
    %v281 = vor.u32 %v279, %v280
    %v282 = vshll.u32 2102212464, %v270
    %v283 = vshrl.u32 920167782, %v271
    %v284 = vor.u32 %v282, %v283
    %v285 = vshll.u32 920167782, %v270
    %v286 = vshrl.u32 1326507024, %v271
    %v287 = vor.u32 %v285, %v286
    %vm288 = vcmp.lt.s32.totalorder %v269, 1
    %vm289 = vcmp.lt.s32.totalorder %v269, 2
    %vm290 = vcmp.lt.s32.totalorder %v269, 3
    %vm291 = vcmp.lt.s32.totalorder %v269, 4
    %v292 = vsel %vm288, %v272, %v275
    %v293 = vsel %vm291, %v281, 2102212464
    %v294 = vsel %vm290, %v278, %v293
    %v295 = vsel %vm289, %v292, %v294
    %v296 = vsel %vm288, %v275, %v278
    %v297 = vsel %vm291, %v284, 920167782
    %v298 = vsel %vm290, %v281, %v297
    %v299 = vsel %vm289, %v296, %v298
    %v300 = vsel %vm288, %v278, %v281
    %v301 = vsel %vm291, %v287, 1326507024
    %v302 = vsel %vm290, %v284, %v301
    %v303 = vsel %vm289, %v300, %v302
    %v304 = vshll.u32 %v264, 8
    %v305 = vand.u32 %v304, 65535
    %v306 = vshrl.u32 %v304, 16
    %v307 = vand.u32 %v303, 65535
    %v308 = vshrl.u32 %v303, 16
    %v309 = vmul.u32 %v305, %v307
    %v310 = vmul.u32 %v305, %v308
    %v311 = vmul.u32 %v306, %v307
    %v312 = vmul.u32 %v306, %v308
    %v313 = vshll.u32 %v310, 16
    %v314 = vshrl.u32 %v310, 16
    %v315 = vshll.u32 %v311, 16
    %v316 = vshrl.u32 %v311, 16
    %vm317 = vc.u32 %v309, %v313
    %v318 = vsel %vm317, 1, 0
    %v319 = vadd.s32 %v309, %v313
    %v320 = vadd.s32 %v312, %v318
    %vm321 = vc.u32 %v319, %v315
    %v322 = vsel %vm321, 1, 0
    %v323 = vadd.s32 %v319, %v315
    %v324 = vadd.s32 %v320, %v322
    %v325 = vadd.s32 %v324, %v314
    %v326 = vadd.s32 %v325, %v316
    %v327 = vand.u32 %v304, 65535
    %v328 = vshrl.u32 %v304, 16
    %v329 = vand.u32 %v299, 65535
    %v330 = vshrl.u32 %v299, 16
    %v331 = vmul.u32 %v327, %v329
    %v332 = vmul.u32 %v327, %v330
    %v333 = vmul.u32 %v328, %v329
    %v334 = vmul.u32 %v328, %v330
    %v335 = vshll.u32 %v332, 16
    %v336 = vshrl.u32 %v332, 16
    %v337 = vshll.u32 %v333, 16
    %v338 = vshrl.u32 %v333, 16
    %vm339 = vc.u32 %v331, %v335
    %v340 = vsel %vm339, 1, 0
    %v341 = vadd.s32 %v331, %v335
    %v342 = vadd.s32 %v334, %v340
    %vm343 = vc.u32 %v341, %v337
    %v344 = vsel %vm343, 1, 0
    %v345 = vadd.s32 %v341, %v337
    %v346 = vadd.s32 %v342, %v344
    %v347 = vadd.s32 %v346, %v336
    %v348 = vadd.s32 %v347, %v338
    %v349 = vmul.u32 %v304, %v295
    %v350 = vadd.s32 %v326, %v345
    %vm351 = vc.u32 %v326, %v345
    %v352 = vadd.s32 %v348, 1
    %v353 = vsel %vm351, %v352, %v348
    %v354 = vadd.s32 %v349, %v353
    %v355 = vadd.s32 %v354, 536870912
    %v356 = vshrl.u32 %v355, 30
    %v357 = vshll.u32 %v356, 30
    %v358 = vsub.s32 %v354, %v357
    %vm359 = vcmp.lt.s32.totalorder %v358, 0
    %v360 = vsub.s32 0, %v358
    %v361 = vsel %vm359, %v360, %v358
    %v362 = vclz %v361
    %v363 = vsub.s32 %v362, 2
    %vm364 = vcmp.gt.s32.totalorder 0, %v363
    %v365 = vsel %vm364, 0, %v363
    %v366 = vsub.s32 32, %v365
    %v367 = vshll.u32 %v358, %v365
    %v368 = vshrl.u32 %v350, %v366
    %v369 = vor.u32 %v367, %v368
    %v370 = vsub.s32 4294967266, %v365
    %v371 = vadd.s32 %v370, 127
    %v372 = vshll.u32 %v371, 23
    %v373 = vor.u32 4788187, %v372
    %v374 = vand.u32 2147483647, %v373
    %v376 = vcvt.s32.f32 %v369
    %v377 = vmul.f32 %v376, %v374
    %v378 = vxor.u32 %v377, 2147483648
    %v379 = vsel %vm258, %v378, %v377
    %v380 = vsub.s32 4, %v356
    %v381 = vsel %vm258, %v380, %v356
    %v382 = vsel %vm257, %v240, %v379
    %v383 = vsel %vm257, 0, %v381
    %v384 = vmul.f32 %v382, %v382
    %v385 = vmul.f32 %v384, -0.001358992
    %v386 = vadd.f32 %v385, 0.041655596
    %v387 = vmul.f32 %v384, %v386
    %v388 = vadd.f32 %v387, -0.4999988
    %v389 = vmul.f32 %v384, %v388
    %v390 = vadd.f32 1.0, %v389
    %v391 = vmul.f32 %v382, %v382
    %v392 = vmul.f32 %v391, -0.00019511016
    %v393 = vadd.f32 %v392, 0.008332121
    %v394 = vmul.f32 %v391, %v393
    %v395 = vadd.f32 %v394, -0.16666654
    %v396 = vmul.f32 %v391, %v395
    %v397 = vadd.f32 %v396, 1.0
    %v398 = vmul.f32 %v397, %v382
    %vm399 = vweird.f32 %v240
    %v400 = vadd.s32 %v383, 3
    %v401 = vand.u32 %v400, 3
    %vm402 = vcmp.lt.s32.totalorder %v401, 2
    %vm403 = vcmp.eq.s32.totalorder %v401, 0
    %v404 = vxor.u32 %v398, 2147483648
    %v405 = vsel %vm403, %v390, %v404
    %vm406 = vcmp.eq.s32.totalorder %v401, 2
    %v407 = vxor.u32 %v390, 2147483648
    %v408 = vsel %vm406, %v407, %v398
    %v409 = vsel %vm402, %v405, %v408
    %v410 = vsel %vm399, nan, %v409
    %v411 = vand.u32 2147483647, %v241
    %vm412 = vcmp.le.f32.partialorder %v411, 0.7853982
    %vm413 = vcmp.lt.s32.totalorder %v241, 0
    %v414 = vand.u32 %v241, 2139095040
    %v415 = vshrl.u32 %v414, 23
    %v416 = vsub.s32 %v415, 127
    %v417 = vand.u32 2147483647, %v241
    %v418 = vand.u32 %v417, 8388607
    %v419 = vor.u32 %v418, 8388608
    %v420 = vsub.s32 0, %v419
    %v421 = vadd.s32 %v416, 1
    %vm422 = vcmp.gt.s32.totalorder %v421, 0
    %v423 = vsel %vm422, %v421, 0
    %v424 = vshrl.u32 %v423, 5
    %v425 = vand.u32 %v423, 31
    %v426 = vsub.s32 32, %v425
    %v427 = vshrl.u32 683565275, %v426
    %v428 = vshll.u32 683565275, %v425
    %v429 = vshrl.u32 2475754826, %v426
    %v430 = vor.u32 %v428, %v429
    %v431 = vshll.u32 2475754826, %v425
    %v432 = vshrl.u32 2131351028, %v426
    %v433 = vor.u32 %v431, %v432
    %v434 = vshll.u32 2131351028, %v425
    %v435 = vshrl.u32 2102212464, %v426
    %v436 = vor.u32 %v434, %v435
    %v437 = vshll.u32 2102212464, %v425
    %v438 = vshrl.u32 920167782, %v426
    %v439 = vor.u32 %v437, %v438
    %v440 = vshll.u32 920167782, %v425
    %v441 = vshrl.u32 1326507024, %v426
    %v442 = vor.u32 %v440, %v441
    %vm443 = vcmp.lt.s32.totalorder %v424, 1
    %vm444 = vcmp.lt.s32.totalorder %v424, 2
    %vm445 = vcmp.lt.s32.totalorder %v424, 3
    %vm446 = vcmp.lt.s32.totalorder %v424, 4
    %v447 = vsel %vm443, %v427, %v430
    %v448 = vsel %vm446, %v436, 2102212464
    %v449 = vsel %vm445, %v433, %v448
    %v450 = vsel %vm444, %v447, %v449
    %v451 = vsel %vm443, %v430, %v433
    %v452 = vsel %vm446, %v439, 920167782
    %v453 = vsel %vm445, %v436, %v452
    %v454 = vsel %vm444, %v451, %v453
    %v455 = vsel %vm443, %v433, %v436
    %v456 = vsel %vm446, %v442, 1326507024
    %v457 = vsel %vm445, %v439, %v456
    %v458 = vsel %vm444, %v455, %v457
    %v459 = vshll.u32 %v419, 8
    %v460 = vand.u32 %v459, 65535
    %v461 = vshrl.u32 %v459, 16
    %v462 = vand.u32 %v458, 65535
    %v463 = vshrl.u32 %v458, 16
    %v464 = vmul.u32 %v460, %v462
    %v465 = vmul.u32 %v460, %v463
    %v466 = vmul.u32 %v461, %v462
    %v467 = vmul.u32 %v461, %v463
    %v468 = vshll.u32 %v465, 16
    %v469 = vshrl.u32 %v465, 16
    %v470 = vshll.u32 %v466, 16
    %v471 = vshrl.u32 %v466, 16
    %vm472 = vc.u32 %v464, %v468
    %v473 = vsel %vm472, 1, 0
    %v474 = vadd.s32 %v464, %v468
    %v475 = vadd.s32 %v467, %v473
    %vm476 = vc.u32 %v474, %v470
    %v477 = vsel %vm476, 1, 0
    %v478 = vadd.s32 %v474, %v470
    %v479 = vadd.s32 %v475, %v477
    %v480 = vadd.s32 %v479, %v469
    %v481 = vadd.s32 %v480, %v471
    %v482 = vand.u32 %v459, 65535
    %v483 = vshrl.u32 %v459, 16
    %v484 = vand.u32 %v454, 65535
    %v485 = vshrl.u32 %v454, 16
    %v486 = vmul.u32 %v482, %v484
    %v487 = vmul.u32 %v482, %v485
    %v488 = vmul.u32 %v483, %v484
    %v489 = vmul.u32 %v483, %v485
    %v490 = vshll.u32 %v487, 16
    %v491 = vshrl.u32 %v487, 16
    %v492 = vshll.u32 %v488, 16
    %v493 = vshrl.u32 %v488, 16
    %vm494 = vc.u32 %v486, %v490
    %v495 = vsel %vm494, 1, 0
    %v496 = vadd.s32 %v486, %v490
    %v497 = vadd.s32 %v489, %v495
    %vm498 = vc.u32 %v496, %v492
    %v499 = vsel %vm498, 1, 0
    %v500 = vadd.s32 %v496, %v492
    %v501 = vadd.s32 %v497, %v499
    %v502 = vadd.s32 %v501, %v491
    %v503 = vadd.s32 %v502, %v493
    %v504 = vmul.u32 %v459, %v450
    %v505 = vadd.s32 %v481, %v500
    %vm506 = vc.u32 %v481, %v500
    %v507 = vadd.s32 %v503, 1
    %v508 = vsel %vm506, %v507, %v503
    %v509 = vadd.s32 %v504, %v508
    %v510 = vadd.s32 %v509, 536870912
    %v511 = vshrl.u32 %v510, 30
    %v512 = vshll.u32 %v511, 30
    %v513 = vsub.s32 %v509, %v512
    %vm514 = vcmp.lt.s32.totalorder %v513, 0
    %v515 = vsub.s32 0, %v513
    %v516 = vsel %vm514, %v515, %v513
    %v517 = vclz %v516
    %v518 = vsub.s32 %v517, 2
    %vm519 = vcmp.gt.s32.totalorder 0, %v518
    %v520 = vsel %vm519, 0, %v518
    %v521 = vsub.s32 32, %v520
    %v522 = vshll.u32 %v513, %v520
    %v523 = vshrl.u32 %v505, %v521
    %v524 = vor.u32 %v522, %v523
    %v525 = vsub.s32 4294967266, %v520
    %v526 = vadd.s32 %v525, 127
    %v527 = vshll.u32 %v526, 23
    %v528 = vor.u32 4788187, %v527
    %v529 = vand.u32 2147483647, %v528
    %v531 = vcvt.s32.f32 %v524
    %v532 = vmul.f32 %v531, %v529
    %v533 = vxor.u32 %v532, 2147483648
    %v534 = vsel %vm413, %v533, %v532
    %v535 = vsub.s32 4, %v511
    %v536 = vsel %vm413, %v535, %v511
    %v537 = vsel %vm412, %v241, %v534
    %v538 = vsel %vm412, 0, %v536
    %v539 = vmul.f32 %v537, %v537
    %v540 = vmul.f32 %v539, -0.001358992
    %v541 = vadd.f32 %v540, 0.041655596
    %v542 = vmul.f32 %v539, %v541
    %v543 = vadd.f32 %v542, -0.4999988
    %v544 = vmul.f32 %v539, %v543
    %v545 = vadd.f32 1.0, %v544
    %v546 = vmul.f32 %v537, %v537
    %v547 = vmul.f32 %v546, -0.00019511016
    %v548 = vadd.f32 %v547, 0.008332121
    %v549 = vmul.f32 %v546, %v548
    %v550 = vadd.f32 %v549, -0.16666654
    %v551 = vmul.f32 %v546, %v550
    %v552 = vadd.f32 %v551, 1.0
    %v553 = vmul.f32 %v552, %v537
    %vm554 = vweird.f32 %v241
    %v555 = vadd.s32 %v538, 3
    %v556 = vand.u32 %v555, 3
    %vm557 = vcmp.lt.s32.totalorder %v556, 2
    %vm558 = vcmp.eq.s32.totalorder %v556, 0
    %v559 = vxor.u32 %v553, 2147483648
    %v560 = vsel %vm558, %v545, %v559
    %vm561 = vcmp.eq.s32.totalorder %v556, 2
    %v562 = vxor.u32 %v545, 2147483648
    %v563 = vsel %vm561, %v562, %v553
    %v564 = vsel %vm557, %v560, %v563
    %v565 = vsel %vm554, nan, %v564
    %v566 = vand.u32 2147483647, %v242
    %vm567 = vcmp.le.f32.partialorder %v566, 0.7853982
    %vm568 = vcmp.lt.s32.totalorder %v242, 0
    %v569 = vand.u32 %v242, 2139095040
    %v570 = vshrl.u32 %v569, 23
    %v571 = vsub.s32 %v570, 127
    %v572 = vand.u32 2147483647, %v242
    %v573 = vand.u32 %v572, 8388607
    %v574 = vor.u32 %v573, 8388608
    %v575 = vsub.s32 0, %v574
    %v576 = vadd.s32 %v571, 1
    %vm577 = vcmp.gt.s32.totalorder %v576, 0
    %v578 = vsel %vm577, %v576, 0
    %v579 = vshrl.u32 %v578, 5
    %v580 = vand.u32 %v578, 31
    %v581 = vsub.s32 32, %v580
    %v582 = vshrl.u32 683565275, %v581
    %v583 = vshll.u32 683565275, %v580
    %v584 = vshrl.u32 2475754826, %v581
    %v585 = vor.u32 %v583, %v584
    %v586 = vshll.u32 2475754826, %v580
    %v587 = vshrl.u32 2131351028, %v581
    %v588 = vor.u32 %v586, %v587
    %v589 = vshll.u32 2131351028, %v580
    %v590 = vshrl.u32 2102212464, %v581
    %v591 = vor.u32 %v589, %v590
    %v592 = vshll.u32 2102212464, %v580
    %v593 = vshrl.u32 920167782, %v581
    %v594 = vor.u32 %v592, %v593
    %v595 = vshll.u32 920167782, %v580
    %v596 = vshrl.u32 1326507024, %v581
    %v597 = vor.u32 %v595, %v596
    %vm598 = vcmp.lt.s32.totalorder %v579, 1
    %vm599 = vcmp.lt.s32.totalorder %v579, 2
    %vm600 = vcmp.lt.s32.totalorder %v579, 3
    %vm601 = vcmp.lt.s32.totalorder %v579, 4
    %v602 = vsel %vm598, %v582, %v585
    %v603 = vsel %vm601, %v591, 2102212464
    %v604 = vsel %vm600, %v588, %v603
    %v605 = vsel %vm599, %v602, %v604
    %v606 = vsel %vm598, %v585, %v588
    %v607 = vsel %vm601, %v594, 920167782
    %v608 = vsel %vm600, %v591, %v607
    %v609 = vsel %vm599, %v606, %v608
    %v610 = vsel %vm598, %v588, %v591
    %v611 = vsel %vm601, %v597, 1326507024
    %v612 = vsel %vm600, %v594, %v611
    %v613 = vsel %vm599, %v610, %v612
    %v614 = vshll.u32 %v574, 8
    %v615 = vand.u32 %v614, 65535
    %v616 = vshrl.u32 %v614, 16
    %v617 = vand.u32 %v613, 65535
    %v618 = vshrl.u32 %v613, 16
    %v619 = vmul.u32 %v615, %v617
    %v620 = vmul.u32 %v615, %v618
    %v621 = vmul.u32 %v616, %v617
    %v622 = vmul.u32 %v616, %v618
    %v623 = vshll.u32 %v620, 16
    %v624 = vshrl.u32 %v620, 16
    %v625 = vshll.u32 %v621, 16
    %v626 = vshrl.u32 %v621, 16
    %vm627 = vc.u32 %v619, %v623
    %v628 = vsel %vm627, 1, 0
    %v629 = vadd.s32 %v619, %v623
    %v630 = vadd.s32 %v622, %v628
    %vm631 = vc.u32 %v629, %v625
    %v632 = vsel %vm631, 1, 0
    %v633 = vadd.s32 %v629, %v625
    %v634 = vadd.s32 %v630, %v632
    %v635 = vadd.s32 %v634, %v624
    %v636 = vadd.s32 %v635, %v626
    %v637 = vand.u32 %v614, 65535
    %v638 = vshrl.u32 %v614, 16
    %v639 = vand.u32 %v609, 65535
    %v640 = vshrl.u32 %v609, 16
    %v641 = vmul.u32 %v637, %v639
    %v642 = vmul.u32 %v637, %v640
    %v643 = vmul.u32 %v638, %v639
    %v644 = vmul.u32 %v638, %v640
    %v645 = vshll.u32 %v642, 16
    %v646 = vshrl.u32 %v642, 16
    %v647 = vshll.u32 %v643, 16
    %v648 = vshrl.u32 %v643, 16
    %vm649 = vc.u32 %v641, %v645
    %v650 = vsel %vm649, 1, 0
    %v651 = vadd.s32 %v641, %v645
    %v652 = vadd.s32 %v644, %v650
    %vm653 = vc.u32 %v651, %v647
    %v654 = vsel %vm653, 1, 0
    %v655 = vadd.s32 %v651, %v647
    %v656 = vadd.s32 %v652, %v654
    %v657 = vadd.s32 %v656, %v646
    %v658 = vadd.s32 %v657, %v648
    %v659 = vmul.u32 %v614, %v605
    %v660 = vadd.s32 %v636, %v655
    %vm661 = vc.u32 %v636, %v655
    %v662 = vadd.s32 %v658, 1
    %v663 = vsel %vm661, %v662, %v658
    %v664 = vadd.s32 %v659, %v663
    %v665 = vadd.s32 %v664, 536870912
    %v666 = vshrl.u32 %v665, 30
    %v667 = vshll.u32 %v666, 30
    %v668 = vsub.s32 %v664, %v667
    %vm669 = vcmp.lt.s32.totalorder %v668, 0
    %v670 = vsub.s32 0, %v668
    %v671 = vsel %vm669, %v670, %v668
    %v672 = vclz %v671
    %v673 = vsub.s32 %v672, 2
    %vm674 = vcmp.gt.s32.totalorder 0, %v673
    %v675 = vsel %vm674, 0, %v673
    %v676 = vsub.s32 32, %v675
    %v677 = vshll.u32 %v668, %v675
    %v678 = vshrl.u32 %v660, %v676
    %v679 = vor.u32 %v677, %v678
    %v680 = vsub.s32 4294967266, %v675
    %v681 = vadd.s32 %v680, 127
    %v682 = vshll.u32 %v681, 23
    %v683 = vor.u32 4788187, %v682
    %v684 = vand.u32 2147483647, %v683
    %v686 = vcvt.s32.f32 %v679
    %v687 = vmul.f32 %v686, %v684
    %v688 = vxor.u32 %v687, 2147483648
    %v689 = vsel %vm568, %v688, %v687
    %v690 = vsub.s32 4, %v666
    %v691 = vsel %vm568, %v690, %v666
    %v692 = vsel %vm567, %v242, %v689
    %v693 = vsel %vm567, 0, %v691
    %v694 = vmul.f32 %v692, %v692
    %v695 = vmul.f32 %v694, -0.001358992
    %v696 = vadd.f32 %v695, 0.041655596
    %v697 = vmul.f32 %v694, %v696
    %v698 = vadd.f32 %v697, -0.4999988
    %v699 = vmul.f32 %v694, %v698
    %v700 = vadd.f32 1.0, %v699
    %v701 = vmul.f32 %v692, %v692
    %v702 = vmul.f32 %v701, -0.00019511016
    %v703 = vadd.f32 %v702, 0.008332121
    %v704 = vmul.f32 %v701, %v703
    %v705 = vadd.f32 %v704, -0.16666654
    %v706 = vmul.f32 %v701, %v705
    %v707 = vadd.f32 %v706, 1.0
    %v708 = vmul.f32 %v707, %v692
    %vm709 = vweird.f32 %v242
    %v710 = vadd.s32 %v693, 3
    %v711 = vand.u32 %v710, 3
    %vm712 = vcmp.lt.s32.totalorder %v711, 2
    %vm713 = vcmp.eq.s32.totalorder %v711, 0
    %v714 = vxor.u32 %v708, 2147483648
    %v715 = vsel %vm713, %v700, %v714
    %vm716 = vcmp.eq.s32.totalorder %v711, 2
    %v717 = vxor.u32 %v700, 2147483648
    %v718 = vsel %vm716, %v717, %v708
    %v719 = vsel %vm712, %v715, %v718
    %v720 = vsel %vm709, nan, %v719
    %v721 = vand.u32 2147483647, %v243
    %vm722 = vcmp.le.f32.partialorder %v721, 0.7853982
    %vm723 = vcmp.lt.s32.totalorder %v243, 0
    %v724 = vand.u32 %v243, 2139095040
    %v725 = vshrl.u32 %v724, 23
    %v726 = vsub.s32 %v725, 127
    %v727 = vand.u32 2147483647, %v243
    %v728 = vand.u32 %v727, 8388607
    %v729 = vor.u32 %v728, 8388608
    %v730 = vsub.s32 0, %v729
    %v731 = vadd.s32 %v726, 1
    %vm732 = vcmp.gt.s32.totalorder %v731, 0
    %v733 = vsel %vm732, %v731, 0
    %v734 = vshrl.u32 %v733, 5
    %v735 = vand.u32 %v733, 31
    %v736 = vsub.s32 32, %v735
    %v737 = vshrl.u32 683565275, %v736
    %v738 = vshll.u32 683565275, %v735
    %v739 = vshrl.u32 2475754826, %v736
    %v740 = vor.u32 %v738, %v739
    %v741 = vshll.u32 2475754826, %v735
    %v742 = vshrl.u32 2131351028, %v736
    %v743 = vor.u32 %v741, %v742
    %v744 = vshll.u32 2131351028, %v735
    %v745 = vshrl.u32 2102212464, %v736
    %v746 = vor.u32 %v744, %v745
    %v747 = vshll.u32 2102212464, %v735
    %v748 = vshrl.u32 920167782, %v736
    %v749 = vor.u32 %v747, %v748
    %v750 = vshll.u32 920167782, %v735
    %v751 = vshrl.u32 1326507024, %v736
    %v752 = vor.u32 %v750, %v751
    %vm753 = vcmp.lt.s32.totalorder %v734, 1
    %vm754 = vcmp.lt.s32.totalorder %v734, 2
    %vm755 = vcmp.lt.s32.totalorder %v734, 3
    %vm756 = vcmp.lt.s32.totalorder %v734, 4
    %v757 = vsel %vm753, %v737, %v740
    %v758 = vsel %vm756, %v746, 2102212464
    %v759 = vsel %vm755, %v743, %v758
    %v760 = vsel %vm754, %v757, %v759
    %v761 = vsel %vm753, %v740, %v743
    %v762 = vsel %vm756, %v749, 920167782
    %v763 = vsel %vm755, %v746, %v762
    %v764 = vsel %vm754, %v761, %v763
    %v765 = vsel %vm753, %v743, %v746
    %v766 = vsel %vm756, %v752, 1326507024
    %v767 = vsel %vm755, %v749, %v766
    %v768 = vsel %vm754, %v765, %v767
    %v769 = vshll.u32 %v729, 8
    %v770 = vand.u32 %v769, 65535
    %v771 = vshrl.u32 %v769, 16
    %v772 = vand.u32 %v768, 65535
    %v773 = vshrl.u32 %v768, 16
    %v774 = vmul.u32 %v770, %v772
    %v775 = vmul.u32 %v770, %v773
    %v776 = vmul.u32 %v771, %v772
    %v777 = vmul.u32 %v771, %v773
    %v778 = vshll.u32 %v775, 16
    %v779 = vshrl.u32 %v775, 16
    %v780 = vshll.u32 %v776, 16
    %v781 = vshrl.u32 %v776, 16
    %vm782 = vc.u32 %v774, %v778
    %v783 = vsel %vm782, 1, 0
    %v784 = vadd.s32 %v774, %v778
    %v785 = vadd.s32 %v777, %v783
    %vm786 = vc.u32 %v784, %v780
    %v787 = vsel %vm786, 1, 0
    %v788 = vadd.s32 %v784, %v780
    %v789 = vadd.s32 %v785, %v787
    %v790 = vadd.s32 %v789, %v779
    %v791 = vadd.s32 %v790, %v781
    %v792 = vand.u32 %v769, 65535
    %v793 = vshrl.u32 %v769, 16
    %v794 = vand.u32 %v764, 65535
    %v795 = vshrl.u32 %v764, 16
    %v796 = vmul.u32 %v792, %v794
    %v797 = vmul.u32 %v792, %v795
    %v798 = vmul.u32 %v793, %v794
    %v799 = vmul.u32 %v793, %v795
    %v800 = vshll.u32 %v797, 16
    %v801 = vshrl.u32 %v797, 16
    %v802 = vshll.u32 %v798, 16
    %v803 = vshrl.u32 %v798, 16
    %vm804 = vc.u32 %v796, %v800
    %v805 = vsel %vm804, 1, 0
    %v806 = vadd.s32 %v796, %v800
    %v807 = vadd.s32 %v799, %v805
    %vm808 = vc.u32 %v806, %v802
    %v809 = vsel %vm808, 1, 0
    %v810 = vadd.s32 %v806, %v802
    %v811 = vadd.s32 %v807, %v809
    %v812 = vadd.s32 %v811, %v801
    %v813 = vadd.s32 %v812, %v803
    %v814 = vmul.u32 %v769, %v760
    %v815 = vadd.s32 %v791, %v810
    %vm816 = vc.u32 %v791, %v810
    %v817 = vadd.s32 %v813, 1
    %v818 = vsel %vm816, %v817, %v813
    %v819 = vadd.s32 %v814, %v818
    %v820 = vadd.s32 %v819, 536870912
    %v821 = vshrl.u32 %v820, 30
    %v822 = vshll.u32 %v821, 30
    %v823 = vsub.s32 %v819, %v822
    %vm824 = vcmp.lt.s32.totalorder %v823, 0
    %v825 = vsub.s32 0, %v823
    %v826 = vsel %vm824, %v825, %v823
    %v827 = vclz %v826
    %v828 = vsub.s32 %v827, 2
    %vm829 = vcmp.gt.s32.totalorder 0, %v828
    %v830 = vsel %vm829, 0, %v828
    %v831 = vsub.s32 32, %v830
    %v832 = vshll.u32 %v823, %v830
    %v833 = vshrl.u32 %v815, %v831
    %v834 = vor.u32 %v832, %v833
    %v835 = vsub.s32 4294967266, %v830
    %v836 = vadd.s32 %v835, 127
    %v837 = vshll.u32 %v836, 23
    %v838 = vor.u32 4788187, %v837
    %v839 = vand.u32 2147483647, %v838
    %v841 = vcvt.s32.f32 %v834
    %v842 = vmul.f32 %v841, %v839
    %v843 = vxor.u32 %v842, 2147483648
    %v844 = vsel %vm723, %v843, %v842
    %v845 = vsub.s32 4, %v821
    %v846 = vsel %vm723, %v845, %v821
    %v847 = vsel %vm722, %v243, %v844
    %v848 = vsel %vm722, 0, %v846
    %v849 = vmul.f32 %v847, %v847
    %v850 = vmul.f32 %v849, -0.001358992
    %v851 = vadd.f32 %v850, 0.041655596
    %v852 = vmul.f32 %v849, %v851
    %v853 = vadd.f32 %v852, -0.4999988
    %v854 = vmul.f32 %v849, %v853
    %v855 = vadd.f32 1.0, %v854
    %v856 = vmul.f32 %v847, %v847
    %v857 = vmul.f32 %v856, -0.00019511016
    %v858 = vadd.f32 %v857, 0.008332121
    %v859 = vmul.f32 %v856, %v858
    %v860 = vadd.f32 %v859, -0.16666654
    %v861 = vmul.f32 %v856, %v860
    %v862 = vadd.f32 %v861, 1.0
    %v863 = vmul.f32 %v862, %v847
    %vm864 = vweird.f32 %v243
    %v865 = vadd.s32 %v848, 3
    %v866 = vand.u32 %v865, 3
    %vm867 = vcmp.lt.s32.totalorder %v866, 2
    %vm868 = vcmp.eq.s32.totalorder %v866, 0
    %v869 = vxor.u32 %v863, 2147483648
    %v870 = vsel %vm868, %v855, %v869
    %vm871 = vcmp.eq.s32.totalorder %v866, 2
    %v872 = vxor.u32 %v855, 2147483648
    %v873 = vsel %vm871, %v872, %v863
    %v874 = vsel %vm867, %v870, %v873
    %v875 = vsel %vm864, nan, %v874
    %v876 = vand.u32 2147483647, %v244
    %vm877 = vcmp.le.f32.partialorder %v876, 0.7853982
    %vm878 = vcmp.lt.s32.totalorder %v244, 0
    %v879 = vand.u32 %v244, 2139095040
    %v880 = vshrl.u32 %v879, 23
    %v881 = vsub.s32 %v880, 127
    %v882 = vand.u32 2147483647, %v244
    %v883 = vand.u32 %v882, 8388607
    %v884 = vor.u32 %v883, 8388608
    %v885 = vsub.s32 0, %v884
    %v886 = vadd.s32 %v881, 1
    %vm887 = vcmp.gt.s32.totalorder %v886, 0
    %v888 = vsel %vm887, %v886, 0
    %v889 = vshrl.u32 %v888, 5
    %v890 = vand.u32 %v888, 31
    %v891 = vsub.s32 32, %v890
    %v892 = vshrl.u32 683565275, %v891
    %v893 = vshll.u32 683565275, %v890
    %v894 = vshrl.u32 2475754826, %v891
    %v895 = vor.u32 %v893, %v894
    %v896 = vshll.u32 2475754826, %v890
    %v897 = vshrl.u32 2131351028, %v891
    %v898 = vor.u32 %v896, %v897
    %v899 = vshll.u32 2131351028, %v890
    %v900 = vshrl.u32 2102212464, %v891
    %v901 = vor.u32 %v899, %v900
    %v902 = vshll.u32 2102212464, %v890
    %v903 = vshrl.u32 920167782, %v891
    %v904 = vor.u32 %v902, %v903
    %v905 = vshll.u32 920167782, %v890
    %v906 = vshrl.u32 1326507024, %v891
    %v907 = vor.u32 %v905, %v906
    %vm908 = vcmp.lt.s32.totalorder %v889, 1
    %vm909 = vcmp.lt.s32.totalorder %v889, 2
    %vm910 = vcmp.lt.s32.totalorder %v889, 3
    %vm911 = vcmp.lt.s32.totalorder %v889, 4
    %v912 = vsel %vm908, %v892, %v895
    %v913 = vsel %vm911, %v901, 2102212464
    %v914 = vsel %vm910, %v898, %v913
    %v915 = vsel %vm909, %v912, %v914
    %v916 = vsel %vm908, %v895, %v898
    %v917 = vsel %vm911, %v904, 920167782
    %v918 = vsel %vm910, %v901, %v917
    %v919 = vsel %vm909, %v916, %v918
    %v920 = vsel %vm908, %v898, %v901
    %v921 = vsel %vm911, %v907, 1326507024
    %v922 = vsel %vm910, %v904, %v921
    %v923 = vsel %vm909, %v920, %v922
    %v924 = vshll.u32 %v884, 8
    %v925 = vand.u32 %v924, 65535
    %v926 = vshrl.u32 %v924, 16
    %v927 = vand.u32 %v923, 65535
    %v928 = vshrl.u32 %v923, 16
    %v929 = vmul.u32 %v925, %v927
    %v930 = vmul.u32 %v925, %v928
    %v931 = vmul.u32 %v926, %v927
    %v932 = vmul.u32 %v926, %v928
    %v933 = vshll.u32 %v930, 16
    %v934 = vshrl.u32 %v930, 16
    %v935 = vshll.u32 %v931, 16
    %v936 = vshrl.u32 %v931, 16
    %vm937 = vc.u32 %v929, %v933
    %v938 = vsel %vm937, 1, 0
    %v939 = vadd.s32 %v929, %v933
    %v940 = vadd.s32 %v932, %v938
    %vm941 = vc.u32 %v939, %v935
    %v942 = vsel %vm941, 1, 0
    %v943 = vadd.s32 %v939, %v935
    %v944 = vadd.s32 %v940, %v942
    %v945 = vadd.s32 %v944, %v934
    %v946 = vadd.s32 %v945, %v936
    %v947 = vand.u32 %v924, 65535
    %v948 = vshrl.u32 %v924, 16
    %v949 = vand.u32 %v919, 65535
    %v950 = vshrl.u32 %v919, 16
    %v951 = vmul.u32 %v947, %v949
    %v952 = vmul.u32 %v947, %v950
    %v953 = vmul.u32 %v948, %v949
    %v954 = vmul.u32 %v948, %v950
    %v955 = vshll.u32 %v952, 16
    %v956 = vshrl.u32 %v952, 16
    %v957 = vshll.u32 %v953, 16
    %v958 = vshrl.u32 %v953, 16
    %vm959 = vc.u32 %v951, %v955
    %v960 = vsel %vm959, 1, 0
    %v961 = vadd.s32 %v951, %v955
    %v962 = vadd.s32 %v954, %v960
    %vm963 = vc.u32 %v961, %v957
    %v964 = vsel %vm963, 1, 0
    %v965 = vadd.s32 %v961, %v957
    %v966 = vadd.s32 %v962, %v964
    %v967 = vadd.s32 %v966, %v956
    %v968 = vadd.s32 %v967, %v958
    %v969 = vmul.u32 %v924, %v915
    %v970 = vadd.s32 %v946, %v965
    %vm971 = vc.u32 %v946, %v965
    %v972 = vadd.s32 %v968, 1
    %v973 = vsel %vm971, %v972, %v968
    %v974 = vadd.s32 %v969, %v973
    %v975 = vadd.s32 %v974, 536870912
    %v976 = vshrl.u32 %v975, 30
    %v977 = vshll.u32 %v976, 30
    %v978 = vsub.s32 %v974, %v977
    %vm979 = vcmp.lt.s32.totalorder %v978, 0
    %v980 = vsub.s32 0, %v978
    %v981 = vsel %vm979, %v980, %v978
    %v982 = vclz %v981
    %v983 = vsub.s32 %v982, 2
    %vm984 = vcmp.gt.s32.totalorder 0, %v983
    %v985 = vsel %vm984, 0, %v983
    %v986 = vsub.s32 32, %v985
    %v987 = vshll.u32 %v978, %v985
    %v988 = vshrl.u32 %v970, %v986
    %v989 = vor.u32 %v987, %v988
    %v990 = vsub.s32 4294967266, %v985
    %v991 = vadd.s32 %v990, 127
    %v992 = vshll.u32 %v991, 23
    %v993 = vor.u32 4788187, %v992
    %v994 = vand.u32 2147483647, %v993
    %v996 = vcvt.s32.f32 %v989
    %v997 = vmul.f32 %v996, %v994
    %v998 = vxor.u32 %v997, 2147483648
    %v999 = vsel %vm878, %v998, %v997
    %v1000 = vsub.s32 4, %v976
    %v1001 = vsel %vm878, %v1000, %v976
    %v1002 = vsel %vm877, %v244, %v999
    %v1003 = vsel %vm877, 0, %v1001
    %v1004 = vmul.f32 %v1002, %v1002
    %v1005 = vmul.f32 %v1004, -0.001358992
    %v1006 = vadd.f32 %v1005, 0.041655596
    %v1007 = vmul.f32 %v1004, %v1006
    %v1008 = vadd.f32 %v1007, -0.4999988
    %v1009 = vmul.f32 %v1004, %v1008
    %v1010 = vadd.f32 1.0, %v1009
    %v1011 = vmul.f32 %v1002, %v1002
    %v1012 = vmul.f32 %v1011, -0.00019511016
    %v1013 = vadd.f32 %v1012, 0.008332121
    %v1014 = vmul.f32 %v1011, %v1013
    %v1015 = vadd.f32 %v1014, -0.16666654
    %v1016 = vmul.f32 %v1011, %v1015
    %v1017 = vadd.f32 %v1016, 1.0
    %v1018 = vmul.f32 %v1017, %v1002
    %vm1019 = vweird.f32 %v244
    %v1020 = vadd.s32 %v1003, 3
    %v1021 = vand.u32 %v1020, 3
    %vm1022 = vcmp.lt.s32.totalorder %v1021, 2
    %vm1023 = vcmp.eq.s32.totalorder %v1021, 0
    %v1024 = vxor.u32 %v1018, 2147483648
    %v1025 = vsel %vm1023, %v1010, %v1024
    %vm1026 = vcmp.eq.s32.totalorder %v1021, 2
    %v1027 = vxor.u32 %v1010, 2147483648
    %v1028 = vsel %vm1026, %v1027, %v1018
    %v1029 = vsel %vm1022, %v1025, %v1028
    %v1030 = vsel %vm1019, nan, %v1029
    %v1031 = vand.u32 2147483647, %v245
    %vm1032 = vcmp.le.f32.partialorder %v1031, 0.7853982
    %vm1033 = vcmp.lt.s32.totalorder %v245, 0
    %v1034 = vand.u32 %v245, 2139095040
    %v1035 = vshrl.u32 %v1034, 23
    %v1036 = vsub.s32 %v1035, 127
    %v1037 = vand.u32 2147483647, %v245
    %v1038 = vand.u32 %v1037, 8388607
    %v1039 = vor.u32 %v1038, 8388608
    %v1040 = vsub.s32 0, %v1039
    %v1041 = vadd.s32 %v1036, 1
    %vm1042 = vcmp.gt.s32.totalorder %v1041, 0
    %v1043 = vsel %vm1042, %v1041, 0
    %v1044 = vshrl.u32 %v1043, 5
    %v1045 = vand.u32 %v1043, 31
    %v1046 = vsub.s32 32, %v1045
    %v1047 = vshrl.u32 683565275, %v1046
    %v1048 = vshll.u32 683565275, %v1045
    %v1049 = vshrl.u32 2475754826, %v1046
    %v1050 = vor.u32 %v1048, %v1049
    %v1051 = vshll.u32 2475754826, %v1045
    %v1052 = vshrl.u32 2131351028, %v1046
    %v1053 = vor.u32 %v1051, %v1052
    %v1054 = vshll.u32 2131351028, %v1045
    %v1055 = vshrl.u32 2102212464, %v1046
    %v1056 = vor.u32 %v1054, %v1055
    %v1057 = vshll.u32 2102212464, %v1045
    %v1058 = vshrl.u32 920167782, %v1046
    %v1059 = vor.u32 %v1057, %v1058
    %v1060 = vshll.u32 920167782, %v1045
    %v1061 = vshrl.u32 1326507024, %v1046
    %v1062 = vor.u32 %v1060, %v1061
    %vm1063 = vcmp.lt.s32.totalorder %v1044, 1
    %vm1064 = vcmp.lt.s32.totalorder %v1044, 2
    %vm1065 = vcmp.lt.s32.totalorder %v1044, 3
    %vm1066 = vcmp.lt.s32.totalorder %v1044, 4
    %v1067 = vsel %vm1063, %v1047, %v1050
    %v1068 = vsel %vm1066, %v1056, 2102212464
    %v1069 = vsel %vm1065, %v1053, %v1068
    %v1070 = vsel %vm1064, %v1067, %v1069
    %v1071 = vsel %vm1063, %v1050, %v1053
    %v1072 = vsel %vm1066, %v1059, 920167782
    %v1073 = vsel %vm1065, %v1056, %v1072
    %v1074 = vsel %vm1064, %v1071, %v1073
    %v1075 = vsel %vm1063, %v1053, %v1056
    %v1076 = vsel %vm1066, %v1062, 1326507024
    %v1077 = vsel %vm1065, %v1059, %v1076
    %v1078 = vsel %vm1064, %v1075, %v1077
    %v1079 = vshll.u32 %v1039, 8
    %v1080 = vand.u32 %v1079, 65535
    %v1081 = vshrl.u32 %v1079, 16
    %v1082 = vand.u32 %v1078, 65535
    %v1083 = vshrl.u32 %v1078, 16
    %v1084 = vmul.u32 %v1080, %v1082
    %v1085 = vmul.u32 %v1080, %v1083
    %v1086 = vmul.u32 %v1081, %v1082
    %v1087 = vmul.u32 %v1081, %v1083
    %v1088 = vshll.u32 %v1085, 16
    %v1089 = vshrl.u32 %v1085, 16
    %v1090 = vshll.u32 %v1086, 16
    %v1091 = vshrl.u32 %v1086, 16
    %vm1092 = vc.u32 %v1084, %v1088
    %v1093 = vsel %vm1092, 1, 0
    %v1094 = vadd.s32 %v1084, %v1088
    %v1095 = vadd.s32 %v1087, %v1093
    %vm1096 = vc.u32 %v1094, %v1090
    %v1097 = vsel %vm1096, 1, 0
    %v1098 = vadd.s32 %v1094, %v1090
    %v1099 = vadd.s32 %v1095, %v1097
    %v1100 = vadd.s32 %v1099, %v1089
    %v1101 = vadd.s32 %v1100, %v1091
    %v1102 = vand.u32 %v1079, 65535
    %v1103 = vshrl.u32 %v1079, 16
    %v1104 = vand.u32 %v1074, 65535
    %v1105 = vshrl.u32 %v1074, 16
    %v1106 = vmul.u32 %v1102, %v1104
    %v1107 = vmul.u32 %v1102, %v1105
    %v1108 = vmul.u32 %v1103, %v1104
    %v1109 = vmul.u32 %v1103, %v1105
    %v1110 = vshll.u32 %v1107, 16
    %v1111 = vshrl.u32 %v1107, 16
    %v1112 = vshll.u32 %v1108, 16
    %v1113 = vshrl.u32 %v1108, 16
    %vm1114 = vc.u32 %v1106, %v1110
    %v1115 = vsel %vm1114, 1, 0
    %v1116 = vadd.s32 %v1106, %v1110
    %v1117 = vadd.s32 %v1109, %v1115
    %vm1118 = vc.u32 %v1116, %v1112
    %v1119 = vsel %vm1118, 1, 0
    %v1120 = vadd.s32 %v1116, %v1112
    %v1121 = vadd.s32 %v1117, %v1119
    %v1122 = vadd.s32 %v1121, %v1111
    %v1123 = vadd.s32 %v1122, %v1113
    %v1124 = vmul.u32 %v1079, %v1070
    %v1125 = vadd.s32 %v1101, %v1120
    %vm1126 = vc.u32 %v1101, %v1120
    %v1127 = vadd.s32 %v1123, 1
    %v1128 = vsel %vm1126, %v1127, %v1123
    %v1129 = vadd.s32 %v1124, %v1128
    %v1130 = vadd.s32 %v1129, 536870912
    %v1131 = vshrl.u32 %v1130, 30
    %v1132 = vshll.u32 %v1131, 30
    %v1133 = vsub.s32 %v1129, %v1132
    %vm1134 = vcmp.lt.s32.totalorder %v1133, 0
    %v1135 = vsub.s32 0, %v1133
    %v1136 = vsel %vm1134, %v1135, %v1133
    %v1137 = vclz %v1136
    %v1138 = vsub.s32 %v1137, 2
    %vm1139 = vcmp.gt.s32.totalorder 0, %v1138
    %v1140 = vsel %vm1139, 0, %v1138
    %v1141 = vsub.s32 32, %v1140
    %v1142 = vshll.u32 %v1133, %v1140
    %v1143 = vshrl.u32 %v1125, %v1141
    %v1144 = vor.u32 %v1142, %v1143
    %v1145 = vsub.s32 4294967266, %v1140
    %v1146 = vadd.s32 %v1145, 127
    %v1147 = vshll.u32 %v1146, 23
    %v1148 = vor.u32 4788187, %v1147
    %v1149 = vand.u32 2147483647, %v1148
    %v1151 = vcvt.s32.f32 %v1144
    %v1152 = vmul.f32 %v1151, %v1149
    %v1153 = vxor.u32 %v1152, 2147483648
    %v1154 = vsel %vm1033, %v1153, %v1152
    %v1155 = vsub.s32 4, %v1131
    %v1156 = vsel %vm1033, %v1155, %v1131
    %v1157 = vsel %vm1032, %v245, %v1154
    %v1158 = vsel %vm1032, 0, %v1156
    %v1159 = vmul.f32 %v1157, %v1157
    %v1160 = vmul.f32 %v1159, -0.001358992
    %v1161 = vadd.f32 %v1160, 0.041655596
    %v1162 = vmul.f32 %v1159, %v1161
    %v1163 = vadd.f32 %v1162, -0.4999988
    %v1164 = vmul.f32 %v1159, %v1163
    %v1165 = vadd.f32 1.0, %v1164
    %v1166 = vmul.f32 %v1157, %v1157
    %v1167 = vmul.f32 %v1166, -0.00019511016
    %v1168 = vadd.f32 %v1167, 0.008332121
    %v1169 = vmul.f32 %v1166, %v1168
    %v1170 = vadd.f32 %v1169, -0.16666654
    %v1171 = vmul.f32 %v1166, %v1170
    %v1172 = vadd.f32 %v1171, 1.0
    %v1173 = vmul.f32 %v1172, %v1157
    %vm1174 = vweird.f32 %v245
    %v1175 = vadd.s32 %v1158, 3
    %v1176 = vand.u32 %v1175, 3
    %vm1177 = vcmp.lt.s32.totalorder %v1176, 2
    %vm1178 = vcmp.eq.s32.totalorder %v1176, 0
    %v1179 = vxor.u32 %v1173, 2147483648
    %v1180 = vsel %vm1178, %v1165, %v1179
    %vm1181 = vcmp.eq.s32.totalorder %v1176, 2
    %v1182 = vxor.u32 %v1165, 2147483648
    %v1183 = vsel %vm1181, %v1182, %v1173
    %v1184 = vsel %vm1177, %v1180, %v1183
    %v1185 = vsel %vm1174, nan, %v1184
    %v1186 = vand.u32 2147483647, %v246
    %vm1187 = vcmp.le.f32.partialorder %v1186, 0.7853982
    %vm1188 = vcmp.lt.s32.totalorder %v246, 0
    %v1189 = vand.u32 %v246, 2139095040
    %v1190 = vshrl.u32 %v1189, 23
    %v1191 = vsub.s32 %v1190, 127
    %v1192 = vand.u32 2147483647, %v246
    %v1193 = vand.u32 %v1192, 8388607
    %v1194 = vor.u32 %v1193, 8388608
    %v1195 = vsub.s32 0, %v1194
    %v1196 = vadd.s32 %v1191, 1
    %vm1197 = vcmp.gt.s32.totalorder %v1196, 0
    %v1198 = vsel %vm1197, %v1196, 0
    %v1199 = vshrl.u32 %v1198, 5
    %v1200 = vand.u32 %v1198, 31
    %v1201 = vsub.s32 32, %v1200
    %v1202 = vshrl.u32 683565275, %v1201
    %v1203 = vshll.u32 683565275, %v1200
    %v1204 = vshrl.u32 2475754826, %v1201
    %v1205 = vor.u32 %v1203, %v1204
    %v1206 = vshll.u32 2475754826, %v1200
    %v1207 = vshrl.u32 2131351028, %v1201
    %v1208 = vor.u32 %v1206, %v1207
    %v1209 = vshll.u32 2131351028, %v1200
    %v1210 = vshrl.u32 2102212464, %v1201
    %v1211 = vor.u32 %v1209, %v1210
    %v1212 = vshll.u32 2102212464, %v1200
    %v1213 = vshrl.u32 920167782, %v1201
    %v1214 = vor.u32 %v1212, %v1213
    %v1215 = vshll.u32 920167782, %v1200
    %v1216 = vshrl.u32 1326507024, %v1201
    %v1217 = vor.u32 %v1215, %v1216
    %vm1218 = vcmp.lt.s32.totalorder %v1199, 1
    %vm1219 = vcmp.lt.s32.totalorder %v1199, 2
    %vm1220 = vcmp.lt.s32.totalorder %v1199, 3
    %vm1221 = vcmp.lt.s32.totalorder %v1199, 4
    %v1222 = vsel %vm1218, %v1202, %v1205
    %v1223 = vsel %vm1221, %v1211, 2102212464
    %v1224 = vsel %vm1220, %v1208, %v1223
    %v1225 = vsel %vm1219, %v1222, %v1224
    %v1226 = vsel %vm1218, %v1205, %v1208
    %v1227 = vsel %vm1221, %v1214, 920167782
    %v1228 = vsel %vm1220, %v1211, %v1227
    %v1229 = vsel %vm1219, %v1226, %v1228
    %v1230 = vsel %vm1218, %v1208, %v1211
    %v1231 = vsel %vm1221, %v1217, 1326507024
    %v1232 = vsel %vm1220, %v1214, %v1231
    %v1233 = vsel %vm1219, %v1230, %v1232
    %v1234 = vshll.u32 %v1194, 8
    %v1235 = vand.u32 %v1234, 65535
    %v1236 = vshrl.u32 %v1234, 16
    %v1237 = vand.u32 %v1233, 65535
    %v1238 = vshrl.u32 %v1233, 16
    %v1239 = vmul.u32 %v1235, %v1237
    %v1240 = vmul.u32 %v1235, %v1238
    %v1241 = vmul.u32 %v1236, %v1237
    %v1242 = vmul.u32 %v1236, %v1238
    %v1243 = vshll.u32 %v1240, 16
    %v1244 = vshrl.u32 %v1240, 16
    %v1245 = vshll.u32 %v1241, 16
    %v1246 = vshrl.u32 %v1241, 16
    %vm1247 = vc.u32 %v1239, %v1243
    %v1248 = vsel %vm1247, 1, 0
    %v1249 = vadd.s32 %v1239, %v1243
    %v1250 = vadd.s32 %v1242, %v1248
    %vm1251 = vc.u32 %v1249, %v1245
    %v1252 = vsel %vm1251, 1, 0
    %v1253 = vadd.s32 %v1249, %v1245
    %v1254 = vadd.s32 %v1250, %v1252
    %v1255 = vadd.s32 %v1254, %v1244
    %v1256 = vadd.s32 %v1255, %v1246
    %v1257 = vand.u32 %v1234, 65535
    %v1258 = vshrl.u32 %v1234, 16
    %v1259 = vand.u32 %v1229, 65535
    %v1260 = vshrl.u32 %v1229, 16
    %v1261 = vmul.u32 %v1257, %v1259
    %v1262 = vmul.u32 %v1257, %v1260
    %v1263 = vmul.u32 %v1258, %v1259
    %v1264 = vmul.u32 %v1258, %v1260
    %v1265 = vshll.u32 %v1262, 16
    %v1266 = vshrl.u32 %v1262, 16
    %v1267 = vshll.u32 %v1263, 16
    %v1268 = vshrl.u32 %v1263, 16
    %vm1269 = vc.u32 %v1261, %v1265
    %v1270 = vsel %vm1269, 1, 0
    %v1271 = vadd.s32 %v1261, %v1265
    %v1272 = vadd.s32 %v1264, %v1270
    %vm1273 = vc.u32 %v1271, %v1267
    %v1274 = vsel %vm1273, 1, 0
    %v1275 = vadd.s32 %v1271, %v1267
    %v1276 = vadd.s32 %v1272, %v1274
    %v1277 = vadd.s32 %v1276, %v1266
    %v1278 = vadd.s32 %v1277, %v1268
    %v1279 = vmul.u32 %v1234, %v1225
    %v1280 = vadd.s32 %v1256, %v1275
    %vm1281 = vc.u32 %v1256, %v1275
    %v1282 = vadd.s32 %v1278, 1
    %v1283 = vsel %vm1281, %v1282, %v1278
    %v1284 = vadd.s32 %v1279, %v1283
    %v1285 = vadd.s32 %v1284, 536870912
    %v1286 = vshrl.u32 %v1285, 30
    %v1287 = vshll.u32 %v1286, 30
    %v1288 = vsub.s32 %v1284, %v1287
    %vm1289 = vcmp.lt.s32.totalorder %v1288, 0
    %v1290 = vsub.s32 0, %v1288
    %v1291 = vsel %vm1289, %v1290, %v1288
    %v1292 = vclz %v1291
    %v1293 = vsub.s32 %v1292, 2
    %vm1294 = vcmp.gt.s32.totalorder 0, %v1293
    %v1295 = vsel %vm1294, 0, %v1293
    %v1296 = vsub.s32 32, %v1295
    %v1297 = vshll.u32 %v1288, %v1295
    %v1298 = vshrl.u32 %v1280, %v1296
    %v1299 = vor.u32 %v1297, %v1298
    %v1300 = vsub.s32 4294967266, %v1295
    %v1301 = vadd.s32 %v1300, 127
    %v1302 = vshll.u32 %v1301, 23
    %v1303 = vor.u32 4788187, %v1302
    %v1304 = vand.u32 2147483647, %v1303
    %v1306 = vcvt.s32.f32 %v1299
    %v1307 = vmul.f32 %v1306, %v1304
    %v1308 = vxor.u32 %v1307, 2147483648
    %v1309 = vsel %vm1188, %v1308, %v1307
    %v1310 = vsub.s32 4, %v1286
    %v1311 = vsel %vm1188, %v1310, %v1286
    %v1312 = vsel %vm1187, %v246, %v1309
    %v1313 = vsel %vm1187, 0, %v1311
    %v1314 = vmul.f32 %v1312, %v1312
    %v1315 = vmul.f32 %v1314, -0.001358992
    %v1316 = vadd.f32 %v1315, 0.041655596
    %v1317 = vmul.f32 %v1314, %v1316
    %v1318 = vadd.f32 %v1317, -0.4999988
    %v1319 = vmul.f32 %v1314, %v1318
    %v1320 = vadd.f32 1.0, %v1319
    %v1321 = vmul.f32 %v1312, %v1312
    %v1322 = vmul.f32 %v1321, -0.00019511016
    %v1323 = vadd.f32 %v1322, 0.008332121
    %v1324 = vmul.f32 %v1321, %v1323
    %v1325 = vadd.f32 %v1324, -0.16666654
    %v1326 = vmul.f32 %v1321, %v1325
    %v1327 = vadd.f32 %v1326, 1.0
    %v1328 = vmul.f32 %v1327, %v1312
    %vm1329 = vweird.f32 %v246
    %v1330 = vadd.s32 %v1313, 3
    %v1331 = vand.u32 %v1330, 3
    %vm1332 = vcmp.lt.s32.totalorder %v1331, 2
    %vm1333 = vcmp.eq.s32.totalorder %v1331, 0
    %v1334 = vxor.u32 %v1328, 2147483648
    %v1335 = vsel %vm1333, %v1320, %v1334
    %vm1336 = vcmp.eq.s32.totalorder %v1331, 2
    %v1337 = vxor.u32 %v1320, 2147483648
    %v1338 = vsel %vm1336, %v1337, %v1328
    %v1339 = vsel %vm1332, %v1335, %v1338
    %v1340 = vsel %vm1329, nan, %v1339
    %v1341 = vand.u32 2147483647, %v247
    %vm1342 = vcmp.le.f32.partialorder %v1341, 0.7853982
    %vm1343 = vcmp.lt.s32.totalorder %v247, 0
    %v1344 = vand.u32 %v247, 2139095040
    %v1345 = vshrl.u32 %v1344, 23
    %v1346 = vsub.s32 %v1345, 127
    %v1347 = vand.u32 2147483647, %v247
    %v1348 = vand.u32 %v1347, 8388607
    %v1349 = vor.u32 %v1348, 8388608
    %v1350 = vsub.s32 0, %v1349
    %v1351 = vadd.s32 %v1346, 1
    %vm1352 = vcmp.gt.s32.totalorder %v1351, 0
    %v1353 = vsel %vm1352, %v1351, 0
    %v1354 = vshrl.u32 %v1353, 5
    %v1355 = vand.u32 %v1353, 31
    %v1356 = vsub.s32 32, %v1355
    %v1357 = vshrl.u32 683565275, %v1356
    %v1358 = vshll.u32 683565275, %v1355
    %v1359 = vshrl.u32 2475754826, %v1356
    %v1360 = vor.u32 %v1358, %v1359
    %v1361 = vshll.u32 2475754826, %v1355
    %v1362 = vshrl.u32 2131351028, %v1356
    %v1363 = vor.u32 %v1361, %v1362
    %v1364 = vshll.u32 2131351028, %v1355
    %v1365 = vshrl.u32 2102212464, %v1356
    %v1366 = vor.u32 %v1364, %v1365
    %v1367 = vshll.u32 2102212464, %v1355
    %v1368 = vshrl.u32 920167782, %v1356
    %v1369 = vor.u32 %v1367, %v1368
    %v1370 = vshll.u32 920167782, %v1355
    %v1371 = vshrl.u32 1326507024, %v1356
    %v1372 = vor.u32 %v1370, %v1371
    %vm1373 = vcmp.lt.s32.totalorder %v1354, 1
    %vm1374 = vcmp.lt.s32.totalorder %v1354, 2
    %vm1375 = vcmp.lt.s32.totalorder %v1354, 3
    %vm1376 = vcmp.lt.s32.totalorder %v1354, 4
    %v1377 = vsel %vm1373, %v1357, %v1360
    %v1378 = vsel %vm1376, %v1366, 2102212464
    %v1379 = vsel %vm1375, %v1363, %v1378
    %v1380 = vsel %vm1374, %v1377, %v1379
    %v1381 = vsel %vm1373, %v1360, %v1363
    %v1382 = vsel %vm1376, %v1369, 920167782
    %v1383 = vsel %vm1375, %v1366, %v1382
    %v1384 = vsel %vm1374, %v1381, %v1383
    %v1385 = vsel %vm1373, %v1363, %v1366
    %v1386 = vsel %vm1376, %v1372, 1326507024
    %v1387 = vsel %vm1375, %v1369, %v1386
    %v1388 = vsel %vm1374, %v1385, %v1387
    %v1389 = vshll.u32 %v1349, 8
    %v1390 = vand.u32 %v1389, 65535
    %v1391 = vshrl.u32 %v1389, 16
    %v1392 = vand.u32 %v1388, 65535
    %v1393 = vshrl.u32 %v1388, 16
    %v1394 = vmul.u32 %v1390, %v1392
    %v1395 = vmul.u32 %v1390, %v1393
    %v1396 = vmul.u32 %v1391, %v1392
    %v1397 = vmul.u32 %v1391, %v1393
    %v1398 = vshll.u32 %v1395, 16
    %v1399 = vshrl.u32 %v1395, 16
    %v1400 = vshll.u32 %v1396, 16
    %v1401 = vshrl.u32 %v1396, 16
    %vm1402 = vc.u32 %v1394, %v1398
    %v1403 = vsel %vm1402, 1, 0
    %v1404 = vadd.s32 %v1394, %v1398
    %v1405 = vadd.s32 %v1397, %v1403
    %vm1406 = vc.u32 %v1404, %v1400
    %v1407 = vsel %vm1406, 1, 0
    %v1408 = vadd.s32 %v1404, %v1400
    %v1409 = vadd.s32 %v1405, %v1407
    %v1410 = vadd.s32 %v1409, %v1399
    %v1411 = vadd.s32 %v1410, %v1401
    %v1412 = vand.u32 %v1389, 65535
    %v1413 = vshrl.u32 %v1389, 16
    %v1414 = vand.u32 %v1384, 65535
    %v1415 = vshrl.u32 %v1384, 16
    %v1416 = vmul.u32 %v1412, %v1414
    %v1417 = vmul.u32 %v1412, %v1415
    %v1418 = vmul.u32 %v1413, %v1414
    %v1419 = vmul.u32 %v1413, %v1415
    %v1420 = vshll.u32 %v1417, 16
    %v1421 = vshrl.u32 %v1417, 16
    %v1422 = vshll.u32 %v1418, 16
    %v1423 = vshrl.u32 %v1418, 16
    %vm1424 = vc.u32 %v1416, %v1420
    %v1425 = vsel %vm1424, 1, 0
    %v1426 = vadd.s32 %v1416, %v1420
    %v1427 = vadd.s32 %v1419, %v1425
    %vm1428 = vc.u32 %v1426, %v1422
    %v1429 = vsel %vm1428, 1, 0
    %v1430 = vadd.s32 %v1426, %v1422
    %v1431 = vadd.s32 %v1427, %v1429
    %v1432 = vadd.s32 %v1431, %v1421
    %v1433 = vadd.s32 %v1432, %v1423
    %v1434 = vmul.u32 %v1389, %v1380
    %v1435 = vadd.s32 %v1411, %v1430
    %vm1436 = vc.u32 %v1411, %v1430
    %v1437 = vadd.s32 %v1433, 1
    %v1438 = vsel %vm1436, %v1437, %v1433
    %v1439 = vadd.s32 %v1434, %v1438
    %v1440 = vadd.s32 %v1439, 536870912
    %v1441 = vshrl.u32 %v1440, 30
    %v1442 = vshll.u32 %v1441, 30
    %v1443 = vsub.s32 %v1439, %v1442
    %vm1444 = vcmp.lt.s32.totalorder %v1443, 0
    %v1445 = vsub.s32 0, %v1443
    %v1446 = vsel %vm1444, %v1445, %v1443
    %v1447 = vclz %v1446
    %v1448 = vsub.s32 %v1447, 2
    %vm1449 = vcmp.gt.s32.totalorder 0, %v1448
    %v1450 = vsel %vm1449, 0, %v1448
    %v1451 = vsub.s32 32, %v1450
    %v1452 = vshll.u32 %v1443, %v1450
    %v1453 = vshrl.u32 %v1435, %v1451
    %v1454 = vor.u32 %v1452, %v1453
    %v1455 = vsub.s32 4294967266, %v1450
    %v1456 = vadd.s32 %v1455, 127
    %v1457 = vshll.u32 %v1456, 23
    %v1458 = vor.u32 4788187, %v1457
    %v1459 = vand.u32 2147483647, %v1458
    %v1461 = vcvt.s32.f32 %v1454
    %v1462 = vmul.f32 %v1461, %v1459
    %v1463 = vxor.u32 %v1462, 2147483648
    %v1464 = vsel %vm1343, %v1463, %v1462
    %v1465 = vsub.s32 4, %v1441
    %v1466 = vsel %vm1343, %v1465, %v1441
    %v1467 = vsel %vm1342, %v247, %v1464
    %v1468 = vsel %vm1342, 0, %v1466
    %v1469 = vmul.f32 %v1467, %v1467
    %v1470 = vmul.f32 %v1469, -0.001358992
    %v1471 = vadd.f32 %v1470, 0.041655596
    %v1472 = vmul.f32 %v1469, %v1471
    %v1473 = vadd.f32 %v1472, -0.4999988
    %v1474 = vmul.f32 %v1469, %v1473
    %v1475 = vadd.f32 1.0, %v1474
    %v1476 = vmul.f32 %v1467, %v1467
    %v1477 = vmul.f32 %v1476, -0.00019511016
    %v1478 = vadd.f32 %v1477, 0.008332121
    %v1479 = vmul.f32 %v1476, %v1478
    %v1480 = vadd.f32 %v1479, -0.16666654
    %v1481 = vmul.f32 %v1476, %v1480
    %v1482 = vadd.f32 %v1481, 1.0
    %v1483 = vmul.f32 %v1482, %v1467
    %vm1484 = vweird.f32 %v247
    %v1485 = vadd.s32 %v1468, 3
    %v1486 = vand.u32 %v1485, 3
    %vm1487 = vcmp.lt.s32.totalorder %v1486, 2
    %vm1488 = vcmp.eq.s32.totalorder %v1486, 0
    %v1489 = vxor.u32 %v1483, 2147483648
    %v1490 = vsel %vm1488, %v1475, %v1489
    %vm1491 = vcmp.eq.s32.totalorder %v1486, 2
    %v1492 = vxor.u32 %v1475, 2147483648
    %v1493 = vsel %vm1491, %v1492, %v1483
    %v1494 = vsel %vm1487, %v1490, %v1493
    %v1495 = vsel %vm1484, nan, %v1494
    %v1496 = vand.u32 2147483647, %v248
    %vm1497 = vcmp.le.f32.partialorder %v1496, 0.7853982
    %vm1498 = vcmp.lt.s32.totalorder %v248, 0
    %v1499 = vand.u32 %v248, 2139095040
    %v1500 = vshrl.u32 %v1499, 23
    %v1501 = vsub.s32 %v1500, 127
    %v1502 = vand.u32 2147483647, %v248
    %v1503 = vand.u32 %v1502, 8388607
    %v1504 = vor.u32 %v1503, 8388608
    %v1505 = vsub.s32 0, %v1504
    %v1506 = vadd.s32 %v1501, 1
    %vm1507 = vcmp.gt.s32.totalorder %v1506, 0
    %v1508 = vsel %vm1507, %v1506, 0
    %v1509 = vshrl.u32 %v1508, 5
    %v1510 = vand.u32 %v1508, 31
    %v1511 = vsub.s32 32, %v1510
    %v1512 = vshrl.u32 683565275, %v1511
    %v1513 = vshll.u32 683565275, %v1510
    %v1514 = vshrl.u32 2475754826, %v1511
    %v1515 = vor.u32 %v1513, %v1514
    %v1516 = vshll.u32 2475754826, %v1510
    %v1517 = vshrl.u32 2131351028, %v1511
    %v1518 = vor.u32 %v1516, %v1517
    %v1519 = vshll.u32 2131351028, %v1510
    %v1520 = vshrl.u32 2102212464, %v1511
    %v1521 = vor.u32 %v1519, %v1520
    %v1522 = vshll.u32 2102212464, %v1510
    %v1523 = vshrl.u32 920167782, %v1511
    %v1524 = vor.u32 %v1522, %v1523
    %v1525 = vshll.u32 920167782, %v1510
    %v1526 = vshrl.u32 1326507024, %v1511
    %v1527 = vor.u32 %v1525, %v1526
    %vm1528 = vcmp.lt.s32.totalorder %v1509, 1
    %vm1529 = vcmp.lt.s32.totalorder %v1509, 2
    %vm1530 = vcmp.lt.s32.totalorder %v1509, 3
    %vm1531 = vcmp.lt.s32.totalorder %v1509, 4
    %v1532 = vsel %vm1528, %v1512, %v1515
    %v1533 = vsel %vm1531, %v1521, 2102212464
    %v1534 = vsel %vm1530, %v1518, %v1533
    %v1535 = vsel %vm1529, %v1532, %v1534
    %v1536 = vsel %vm1528, %v1515, %v1518
    %v1537 = vsel %vm1531, %v1524, 920167782
    %v1538 = vsel %vm1530, %v1521, %v1537
    %v1539 = vsel %vm1529, %v1536, %v1538
    %v1540 = vsel %vm1528, %v1518, %v1521
    %v1541 = vsel %vm1531, %v1527, 1326507024
    %v1542 = vsel %vm1530, %v1524, %v1541
    %v1543 = vsel %vm1529, %v1540, %v1542
    %v1544 = vshll.u32 %v1504, 8
    %v1545 = vand.u32 %v1544, 65535
    %v1546 = vshrl.u32 %v1544, 16
    %v1547 = vand.u32 %v1543, 65535
    %v1548 = vshrl.u32 %v1543, 16
    %v1549 = vmul.u32 %v1545, %v1547
    %v1550 = vmul.u32 %v1545, %v1548
    %v1551 = vmul.u32 %v1546, %v1547
    %v1552 = vmul.u32 %v1546, %v1548
    %v1553 = vshll.u32 %v1550, 16
    %v1554 = vshrl.u32 %v1550, 16
    %v1555 = vshll.u32 %v1551, 16
    %v1556 = vshrl.u32 %v1551, 16
    %vm1557 = vc.u32 %v1549, %v1553
    %v1558 = vsel %vm1557, 1, 0
    %v1559 = vadd.s32 %v1549, %v1553
    %v1560 = vadd.s32 %v1552, %v1558
    %vm1561 = vc.u32 %v1559, %v1555
    %v1562 = vsel %vm1561, 1, 0
    %v1563 = vadd.s32 %v1559, %v1555
    %v1564 = vadd.s32 %v1560, %v1562
    %v1565 = vadd.s32 %v1564, %v1554
    %v1566 = vadd.s32 %v1565, %v1556
    %v1567 = vand.u32 %v1544, 65535
    %v1568 = vshrl.u32 %v1544, 16
    %v1569 = vand.u32 %v1539, 65535
    %v1570 = vshrl.u32 %v1539, 16
    %v1571 = vmul.u32 %v1567, %v1569
    %v1572 = vmul.u32 %v1567, %v1570
    %v1573 = vmul.u32 %v1568, %v1569
    %v1574 = vmul.u32 %v1568, %v1570
    %v1575 = vshll.u32 %v1572, 16
    %v1576 = vshrl.u32 %v1572, 16
    %v1577 = vshll.u32 %v1573, 16
    %v1578 = vshrl.u32 %v1573, 16
    %vm1579 = vc.u32 %v1571, %v1575
    %v1580 = vsel %vm1579, 1, 0
    %v1581 = vadd.s32 %v1571, %v1575
    %v1582 = vadd.s32 %v1574, %v1580
    %vm1583 = vc.u32 %v1581, %v1577
    %v1584 = vsel %vm1583, 1, 0
    %v1585 = vadd.s32 %v1581, %v1577
    %v1586 = vadd.s32 %v1582, %v1584
    %v1587 = vadd.s32 %v1586, %v1576
    %v1588 = vadd.s32 %v1587, %v1578
    %v1589 = vmul.u32 %v1544, %v1535
    %v1590 = vadd.s32 %v1566, %v1585
    %vm1591 = vc.u32 %v1566, %v1585
    %v1592 = vadd.s32 %v1588, 1
    %v1593 = vsel %vm1591, %v1592, %v1588
    %v1594 = vadd.s32 %v1589, %v1593
    %v1595 = vadd.s32 %v1594, 536870912
    %v1596 = vshrl.u32 %v1595, 30
    %v1597 = vshll.u32 %v1596, 30
    %v1598 = vsub.s32 %v1594, %v1597
    %vm1599 = vcmp.lt.s32.totalorder %v1598, 0
    %v1600 = vsub.s32 0, %v1598
    %v1601 = vsel %vm1599, %v1600, %v1598
    %v1602 = vclz %v1601
    %v1603 = vsub.s32 %v1602, 2
    %vm1604 = vcmp.gt.s32.totalorder 0, %v1603
    %v1605 = vsel %vm1604, 0, %v1603
    %v1606 = vsub.s32 32, %v1605
    %v1607 = vshll.u32 %v1598, %v1605
    %v1608 = vshrl.u32 %v1590, %v1606
    %v1609 = vor.u32 %v1607, %v1608
    %v1610 = vsub.s32 4294967266, %v1605
    %v1611 = vadd.s32 %v1610, 127
    %v1612 = vshll.u32 %v1611, 23
    %v1613 = vor.u32 4788187, %v1612
    %v1614 = vand.u32 2147483647, %v1613
    %v1616 = vcvt.s32.f32 %v1609
    %v1617 = vmul.f32 %v1616, %v1614
    %v1618 = vxor.u32 %v1617, 2147483648
    %v1619 = vsel %vm1498, %v1618, %v1617
    %v1620 = vsub.s32 4, %v1596
    %v1621 = vsel %vm1498, %v1620, %v1596
    %v1622 = vsel %vm1497, %v248, %v1619
    %v1623 = vsel %vm1497, 0, %v1621
    %v1624 = vmul.f32 %v1622, %v1622
    %v1625 = vmul.f32 %v1624, -0.001358992
    %v1626 = vadd.f32 %v1625, 0.041655596
    %v1627 = vmul.f32 %v1624, %v1626
    %v1628 = vadd.f32 %v1627, -0.4999988
    %v1629 = vmul.f32 %v1624, %v1628
    %v1630 = vadd.f32 1.0, %v1629
    %v1631 = vmul.f32 %v1622, %v1622
    %v1632 = vmul.f32 %v1631, -0.00019511016
    %v1633 = vadd.f32 %v1632, 0.008332121
    %v1634 = vmul.f32 %v1631, %v1633
    %v1635 = vadd.f32 %v1634, -0.16666654
    %v1636 = vmul.f32 %v1631, %v1635
    %v1637 = vadd.f32 %v1636, 1.0
    %v1638 = vmul.f32 %v1637, %v1622
    %vm1639 = vweird.f32 %v248
    %v1640 = vadd.s32 %v1623, 3
    %v1641 = vand.u32 %v1640, 3
    %vm1642 = vcmp.lt.s32.totalorder %v1641, 2
    %vm1643 = vcmp.eq.s32.totalorder %v1641, 0
    %v1644 = vxor.u32 %v1638, 2147483648
    %v1645 = vsel %vm1643, %v1630, %v1644
    %vm1646 = vcmp.eq.s32.totalorder %v1641, 2
    %v1647 = vxor.u32 %v1630, 2147483648
    %v1648 = vsel %vm1646, %v1647, %v1638
    %v1649 = vsel %vm1642, %v1645, %v1648
    %v1650 = vsel %vm1639, nan, %v1649
    %v1651 = vand.u32 2147483647, %v249
    %vm1652 = vcmp.le.f32.partialorder %v1651, 0.7853982
    %vm1653 = vcmp.lt.s32.totalorder %v249, 0
    %v1654 = vand.u32 %v249, 2139095040
    %v1655 = vshrl.u32 %v1654, 23
    %v1656 = vsub.s32 %v1655, 127
    %v1657 = vand.u32 2147483647, %v249
    %v1658 = vand.u32 %v1657, 8388607
    %v1659 = vor.u32 %v1658, 8388608
    %v1660 = vsub.s32 0, %v1659
    %v1661 = vadd.s32 %v1656, 1
    %vm1662 = vcmp.gt.s32.totalorder %v1661, 0
    %v1663 = vsel %vm1662, %v1661, 0
    %v1664 = vshrl.u32 %v1663, 5
    %v1665 = vand.u32 %v1663, 31
    %v1666 = vsub.s32 32, %v1665
    %v1667 = vshrl.u32 683565275, %v1666
    %v1668 = vshll.u32 683565275, %v1665
    %v1669 = vshrl.u32 2475754826, %v1666
    %v1670 = vor.u32 %v1668, %v1669
    %v1671 = vshll.u32 2475754826, %v1665
    %v1672 = vshrl.u32 2131351028, %v1666
    %v1673 = vor.u32 %v1671, %v1672
    %v1674 = vshll.u32 2131351028, %v1665
    %v1675 = vshrl.u32 2102212464, %v1666
    %v1676 = vor.u32 %v1674, %v1675
    %v1677 = vshll.u32 2102212464, %v1665
    %v1678 = vshrl.u32 920167782, %v1666
    %v1679 = vor.u32 %v1677, %v1678
    %v1680 = vshll.u32 920167782, %v1665
    %v1681 = vshrl.u32 1326507024, %v1666
    %v1682 = vor.u32 %v1680, %v1681
    %vm1683 = vcmp.lt.s32.totalorder %v1664, 1
    %vm1684 = vcmp.lt.s32.totalorder %v1664, 2
    %vm1685 = vcmp.lt.s32.totalorder %v1664, 3
    %vm1686 = vcmp.lt.s32.totalorder %v1664, 4
    %v1687 = vsel %vm1683, %v1667, %v1670
    %v1688 = vsel %vm1686, %v1676, 2102212464
    %v1689 = vsel %vm1685, %v1673, %v1688
    %v1690 = vsel %vm1684, %v1687, %v1689
    %v1691 = vsel %vm1683, %v1670, %v1673
    %v1692 = vsel %vm1686, %v1679, 920167782
    %v1693 = vsel %vm1685, %v1676, %v1692
    %v1694 = vsel %vm1684, %v1691, %v1693
    %v1695 = vsel %vm1683, %v1673, %v1676
    %v1696 = vsel %vm1686, %v1682, 1326507024
    %v1697 = vsel %vm1685, %v1679, %v1696
    %v1698 = vsel %vm1684, %v1695, %v1697
    %v1699 = vshll.u32 %v1659, 8
    %v1700 = vand.u32 %v1699, 65535
    %v1701 = vshrl.u32 %v1699, 16
    %v1702 = vand.u32 %v1698, 65535
    %v1703 = vshrl.u32 %v1698, 16
    %v1704 = vmul.u32 %v1700, %v1702
    %v1705 = vmul.u32 %v1700, %v1703
    %v1706 = vmul.u32 %v1701, %v1702
    %v1707 = vmul.u32 %v1701, %v1703
    %v1708 = vshll.u32 %v1705, 16
    %v1709 = vshrl.u32 %v1705, 16
    %v1710 = vshll.u32 %v1706, 16
    %v1711 = vshrl.u32 %v1706, 16
    %vm1712 = vc.u32 %v1704, %v1708
    %v1713 = vsel %vm1712, 1, 0
    %v1714 = vadd.s32 %v1704, %v1708
    %v1715 = vadd.s32 %v1707, %v1713
    %vm1716 = vc.u32 %v1714, %v1710
    %v1717 = vsel %vm1716, 1, 0
    %v1718 = vadd.s32 %v1714, %v1710
    %v1719 = vadd.s32 %v1715, %v1717
    %v1720 = vadd.s32 %v1719, %v1709
    %v1721 = vadd.s32 %v1720, %v1711
    %v1722 = vand.u32 %v1699, 65535
    %v1723 = vshrl.u32 %v1699, 16
    %v1724 = vand.u32 %v1694, 65535
    %v1725 = vshrl.u32 %v1694, 16
    %v1726 = vmul.u32 %v1722, %v1724
    %v1727 = vmul.u32 %v1722, %v1725
    %v1728 = vmul.u32 %v1723, %v1724
    %v1729 = vmul.u32 %v1723, %v1725
    %v1730 = vshll.u32 %v1727, 16
    %v1731 = vshrl.u32 %v1727, 16
    %v1732 = vshll.u32 %v1728, 16
    %v1733 = vshrl.u32 %v1728, 16
    %vm1734 = vc.u32 %v1726, %v1730
    %v1735 = vsel %vm1734, 1, 0
    %v1736 = vadd.s32 %v1726, %v1730
    %v1737 = vadd.s32 %v1729, %v1735
    %vm1738 = vc.u32 %v1736, %v1732
    %v1739 = vsel %vm1738, 1, 0
    %v1740 = vadd.s32 %v1736, %v1732
    %v1741 = vadd.s32 %v1737, %v1739
    %v1742 = vadd.s32 %v1741, %v1731
    %v1743 = vadd.s32 %v1742, %v1733
    %v1744 = vmul.u32 %v1699, %v1690
    %v1745 = vadd.s32 %v1721, %v1740
    %vm1746 = vc.u32 %v1721, %v1740
    %v1747 = vadd.s32 %v1743, 1
    %v1748 = vsel %vm1746, %v1747, %v1743
    %v1749 = vadd.s32 %v1744, %v1748
    %v1750 = vadd.s32 %v1749, 536870912
    %v1751 = vshrl.u32 %v1750, 30
    %v1752 = vshll.u32 %v1751, 30
    %v1753 = vsub.s32 %v1749, %v1752
    %vm1754 = vcmp.lt.s32.totalorder %v1753, 0
    %v1755 = vsub.s32 0, %v1753
    %v1756 = vsel %vm1754, %v1755, %v1753
    %v1757 = vclz %v1756
    %v1758 = vsub.s32 %v1757, 2
    %vm1759 = vcmp.gt.s32.totalorder 0, %v1758
    %v1760 = vsel %vm1759, 0, %v1758
    %v1761 = vsub.s32 32, %v1760
    %v1762 = vshll.u32 %v1753, %v1760
    %v1763 = vshrl.u32 %v1745, %v1761
    %v1764 = vor.u32 %v1762, %v1763
    %v1765 = vsub.s32 4294967266, %v1760
    %v1766 = vadd.s32 %v1765, 127
    %v1767 = vshll.u32 %v1766, 23
    %v1768 = vor.u32 4788187, %v1767
    %v1769 = vand.u32 2147483647, %v1768
    %v1771 = vcvt.s32.f32 %v1764
    %v1772 = vmul.f32 %v1771, %v1769
    %v1773 = vxor.u32 %v1772, 2147483648
    %v1774 = vsel %vm1653, %v1773, %v1772
    %v1775 = vsub.s32 4, %v1751
    %v1776 = vsel %vm1653, %v1775, %v1751
    %v1777 = vsel %vm1652, %v249, %v1774
    %v1778 = vsel %vm1652, 0, %v1776
    %v1779 = vmul.f32 %v1777, %v1777
    %v1780 = vmul.f32 %v1779, -0.001358992
    %v1781 = vadd.f32 %v1780, 0.041655596
    %v1782 = vmul.f32 %v1779, %v1781
    %v1783 = vadd.f32 %v1782, -0.4999988
    %v1784 = vmul.f32 %v1779, %v1783
    %v1785 = vadd.f32 1.0, %v1784
    %v1786 = vmul.f32 %v1777, %v1777
    %v1787 = vmul.f32 %v1786, -0.00019511016
    %v1788 = vadd.f32 %v1787, 0.008332121
    %v1789 = vmul.f32 %v1786, %v1788
    %v1790 = vadd.f32 %v1789, -0.16666654
    %v1791 = vmul.f32 %v1786, %v1790
    %v1792 = vadd.f32 %v1791, 1.0
    %v1793 = vmul.f32 %v1792, %v1777
    %vm1794 = vweird.f32 %v249
    %v1795 = vadd.s32 %v1778, 3
    %v1796 = vand.u32 %v1795, 3
    %vm1797 = vcmp.lt.s32.totalorder %v1796, 2
    %vm1798 = vcmp.eq.s32.totalorder %v1796, 0
    %v1799 = vxor.u32 %v1793, 2147483648
    %v1800 = vsel %vm1798, %v1785, %v1799
    %vm1801 = vcmp.eq.s32.totalorder %v1796, 2
    %v1802 = vxor.u32 %v1785, 2147483648
    %v1803 = vsel %vm1801, %v1802, %v1793
    %v1804 = vsel %vm1797, %v1800, %v1803
    %v1805 = vsel %vm1794, nan, %v1804
    %v1806 = vand.u32 2147483647, %v250
    %vm1807 = vcmp.le.f32.partialorder %v1806, 0.7853982
    %vm1808 = vcmp.lt.s32.totalorder %v250, 0
    %v1809 = vand.u32 %v250, 2139095040
    %v1810 = vshrl.u32 %v1809, 23
    %v1811 = vsub.s32 %v1810, 127
    %v1812 = vand.u32 2147483647, %v250
    %v1813 = vand.u32 %v1812, 8388607
    %v1814 = vor.u32 %v1813, 8388608
    %v1815 = vsub.s32 0, %v1814
    %v1816 = vadd.s32 %v1811, 1
    %vm1817 = vcmp.gt.s32.totalorder %v1816, 0
    %v1818 = vsel %vm1817, %v1816, 0
    %v1819 = vshrl.u32 %v1818, 5
    %v1820 = vand.u32 %v1818, 31
    %v1821 = vsub.s32 32, %v1820
    %v1822 = vshrl.u32 683565275, %v1821
    %v1823 = vshll.u32 683565275, %v1820
    %v1824 = vshrl.u32 2475754826, %v1821
    %v1825 = vor.u32 %v1823, %v1824
    %v1826 = vshll.u32 2475754826, %v1820
    %v1827 = vshrl.u32 2131351028, %v1821
    %v1828 = vor.u32 %v1826, %v1827
    %v1829 = vshll.u32 2131351028, %v1820
    %v1830 = vshrl.u32 2102212464, %v1821
    %v1831 = vor.u32 %v1829, %v1830
    %v1832 = vshll.u32 2102212464, %v1820
    %v1833 = vshrl.u32 920167782, %v1821
    %v1834 = vor.u32 %v1832, %v1833
    %v1835 = vshll.u32 920167782, %v1820
    %v1836 = vshrl.u32 1326507024, %v1821
    %v1837 = vor.u32 %v1835, %v1836
    %vm1838 = vcmp.lt.s32.totalorder %v1819, 1
    %vm1839 = vcmp.lt.s32.totalorder %v1819, 2
    %vm1840 = vcmp.lt.s32.totalorder %v1819, 3
    %vm1841 = vcmp.lt.s32.totalorder %v1819, 4
    %v1842 = vsel %vm1838, %v1822, %v1825
    %v1843 = vsel %vm1841, %v1831, 2102212464
    %v1844 = vsel %vm1840, %v1828, %v1843
    %v1845 = vsel %vm1839, %v1842, %v1844
    %v1846 = vsel %vm1838, %v1825, %v1828
    %v1847 = vsel %vm1841, %v1834, 920167782
    %v1848 = vsel %vm1840, %v1831, %v1847
    %v1849 = vsel %vm1839, %v1846, %v1848
    %v1850 = vsel %vm1838, %v1828, %v1831
    %v1851 = vsel %vm1841, %v1837, 1326507024
    %v1852 = vsel %vm1840, %v1834, %v1851
    %v1853 = vsel %vm1839, %v1850, %v1852
    %v1854 = vshll.u32 %v1814, 8
    %v1855 = vand.u32 %v1854, 65535
    %v1856 = vshrl.u32 %v1854, 16
    %v1857 = vand.u32 %v1853, 65535
    %v1858 = vshrl.u32 %v1853, 16
    %v1859 = vmul.u32 %v1855, %v1857
    %v1860 = vmul.u32 %v1855, %v1858
    %v1861 = vmul.u32 %v1856, %v1857
    %v1862 = vmul.u32 %v1856, %v1858
    %v1863 = vshll.u32 %v1860, 16
    %v1864 = vshrl.u32 %v1860, 16
    %v1865 = vshll.u32 %v1861, 16
    %v1866 = vshrl.u32 %v1861, 16
    %vm1867 = vc.u32 %v1859, %v1863
    %v1868 = vsel %vm1867, 1, 0
    %v1869 = vadd.s32 %v1859, %v1863
    %v1870 = vadd.s32 %v1862, %v1868
    %vm1871 = vc.u32 %v1869, %v1865
    %v1872 = vsel %vm1871, 1, 0
    %v1873 = vadd.s32 %v1869, %v1865
    %v1874 = vadd.s32 %v1870, %v1872
    %v1875 = vadd.s32 %v1874, %v1864
    %v1876 = vadd.s32 %v1875, %v1866
    %v1877 = vand.u32 %v1854, 65535
    %v1878 = vshrl.u32 %v1854, 16
    %v1879 = vand.u32 %v1849, 65535
    %v1880 = vshrl.u32 %v1849, 16
    %v1881 = vmul.u32 %v1877, %v1879
    %v1882 = vmul.u32 %v1877, %v1880
    %v1883 = vmul.u32 %v1878, %v1879
    %v1884 = vmul.u32 %v1878, %v1880
    %v1885 = vshll.u32 %v1882, 16
    %v1886 = vshrl.u32 %v1882, 16
    %v1887 = vshll.u32 %v1883, 16
    %v1888 = vshrl.u32 %v1883, 16
    %vm1889 = vc.u32 %v1881, %v1885
    %v1890 = vsel %vm1889, 1, 0
    %v1891 = vadd.s32 %v1881, %v1885
    %v1892 = vadd.s32 %v1884, %v1890
    %vm1893 = vc.u32 %v1891, %v1887
    %v1894 = vsel %vm1893, 1, 0
    %v1895 = vadd.s32 %v1891, %v1887
    %v1896 = vadd.s32 %v1892, %v1894
    %v1897 = vadd.s32 %v1896, %v1886
    %v1898 = vadd.s32 %v1897, %v1888
    %v1899 = vmul.u32 %v1854, %v1845
    %v1900 = vadd.s32 %v1876, %v1895
    %vm1901 = vc.u32 %v1876, %v1895
    %v1902 = vadd.s32 %v1898, 1
    %v1903 = vsel %vm1901, %v1902, %v1898
    %v1904 = vadd.s32 %v1899, %v1903
    %v1905 = vadd.s32 %v1904, 536870912
    %v1906 = vshrl.u32 %v1905, 30
    %v1907 = vshll.u32 %v1906, 30
    %v1908 = vsub.s32 %v1904, %v1907
    %vm1909 = vcmp.lt.s32.totalorder %v1908, 0
    %v1910 = vsub.s32 0, %v1908
    %v1911 = vsel %vm1909, %v1910, %v1908
    %v1912 = vclz %v1911
    %v1913 = vsub.s32 %v1912, 2
    %vm1914 = vcmp.gt.s32.totalorder 0, %v1913
    %v1915 = vsel %vm1914, 0, %v1913
    %v1916 = vsub.s32 32, %v1915
    %v1917 = vshll.u32 %v1908, %v1915
    %v1918 = vshrl.u32 %v1900, %v1916
    %v1919 = vor.u32 %v1917, %v1918
    %v1920 = vsub.s32 4294967266, %v1915
    %v1921 = vadd.s32 %v1920, 127
    %v1922 = vshll.u32 %v1921, 23
    %v1923 = vor.u32 4788187, %v1922
    %v1924 = vand.u32 2147483647, %v1923
    %v1926 = vcvt.s32.f32 %v1919
    %v1927 = vmul.f32 %v1926, %v1924
    %v1928 = vxor.u32 %v1927, 2147483648
    %v1929 = vsel %vm1808, %v1928, %v1927
    %v1930 = vsub.s32 4, %v1906
    %v1931 = vsel %vm1808, %v1930, %v1906
    %v1932 = vsel %vm1807, %v250, %v1929
    %v1933 = vsel %vm1807, 0, %v1931
    %v1934 = vmul.f32 %v1932, %v1932
    %v1935 = vmul.f32 %v1934, -0.001358992
    %v1936 = vadd.f32 %v1935, 0.041655596
    %v1937 = vmul.f32 %v1934, %v1936
    %v1938 = vadd.f32 %v1937, -0.4999988
    %v1939 = vmul.f32 %v1934, %v1938
    %v1940 = vadd.f32 1.0, %v1939
    %v1941 = vmul.f32 %v1932, %v1932
    %v1942 = vmul.f32 %v1941, -0.00019511016
    %v1943 = vadd.f32 %v1942, 0.008332121
    %v1944 = vmul.f32 %v1941, %v1943
    %v1945 = vadd.f32 %v1944, -0.16666654
    %v1946 = vmul.f32 %v1941, %v1945
    %v1947 = vadd.f32 %v1946, 1.0
    %v1948 = vmul.f32 %v1947, %v1932
    %vm1949 = vweird.f32 %v250
    %v1950 = vadd.s32 %v1933, 3
    %v1951 = vand.u32 %v1950, 3
    %vm1952 = vcmp.lt.s32.totalorder %v1951, 2
    %vm1953 = vcmp.eq.s32.totalorder %v1951, 0
    %v1954 = vxor.u32 %v1948, 2147483648
    %v1955 = vsel %vm1953, %v1940, %v1954
    %vm1956 = vcmp.eq.s32.totalorder %v1951, 2
    %v1957 = vxor.u32 %v1940, 2147483648
    %v1958 = vsel %vm1956, %v1957, %v1948
    %v1959 = vsel %vm1952, %v1955, %v1958
    %v1960 = vsel %vm1949, nan, %v1959
    %v1961 = vand.u32 2147483647, %v251
    %vm1962 = vcmp.le.f32.partialorder %v1961, 0.7853982
    %vm1963 = vcmp.lt.s32.totalorder %v251, 0
    %v1964 = vand.u32 %v251, 2139095040
    %v1965 = vshrl.u32 %v1964, 23
    %v1966 = vsub.s32 %v1965, 127
    %v1967 = vand.u32 2147483647, %v251
    %v1968 = vand.u32 %v1967, 8388607
    %v1969 = vor.u32 %v1968, 8388608
    %v1970 = vsub.s32 0, %v1969
    %v1971 = vadd.s32 %v1966, 1
    %vm1972 = vcmp.gt.s32.totalorder %v1971, 0
    %v1973 = vsel %vm1972, %v1971, 0
    %v1974 = vshrl.u32 %v1973, 5
    %v1975 = vand.u32 %v1973, 31
    %v1976 = vsub.s32 32, %v1975
    %v1977 = vshrl.u32 683565275, %v1976
    %v1978 = vshll.u32 683565275, %v1975
    %v1979 = vshrl.u32 2475754826, %v1976
    %v1980 = vor.u32 %v1978, %v1979
    %v1981 = vshll.u32 2475754826, %v1975
    %v1982 = vshrl.u32 2131351028, %v1976
    %v1983 = vor.u32 %v1981, %v1982
    %v1984 = vshll.u32 2131351028, %v1975
    %v1985 = vshrl.u32 2102212464, %v1976
    %v1986 = vor.u32 %v1984, %v1985
    %v1987 = vshll.u32 2102212464, %v1975
    %v1988 = vshrl.u32 920167782, %v1976
    %v1989 = vor.u32 %v1987, %v1988
    %v1990 = vshll.u32 920167782, %v1975
    %v1991 = vshrl.u32 1326507024, %v1976
    %v1992 = vor.u32 %v1990, %v1991
    %vm1993 = vcmp.lt.s32.totalorder %v1974, 1
    %vm1994 = vcmp.lt.s32.totalorder %v1974, 2
    %vm1995 = vcmp.lt.s32.totalorder %v1974, 3
    %vm1996 = vcmp.lt.s32.totalorder %v1974, 4
    %v1997 = vsel %vm1993, %v1977, %v1980
    %v1998 = vsel %vm1996, %v1986, 2102212464
    %v1999 = vsel %vm1995, %v1983, %v1998
    %v2000 = vsel %vm1994, %v1997, %v1999
    %v2001 = vsel %vm1993, %v1980, %v1983
    %v2002 = vsel %vm1996, %v1989, 920167782
    %v2003 = vsel %vm1995, %v1986, %v2002
    %v2004 = vsel %vm1994, %v2001, %v2003
    %v2005 = vsel %vm1993, %v1983, %v1986
    %v2006 = vsel %vm1996, %v1992, 1326507024
    %v2007 = vsel %vm1995, %v1989, %v2006
    %v2008 = vsel %vm1994, %v2005, %v2007
    %v2009 = vshll.u32 %v1969, 8
    %v2010 = vand.u32 %v2009, 65535
    %v2011 = vshrl.u32 %v2009, 16
    %v2012 = vand.u32 %v2008, 65535
    %v2013 = vshrl.u32 %v2008, 16
    %v2014 = vmul.u32 %v2010, %v2012
    %v2015 = vmul.u32 %v2010, %v2013
    %v2016 = vmul.u32 %v2011, %v2012
    %v2017 = vmul.u32 %v2011, %v2013
    %v2018 = vshll.u32 %v2015, 16
    %v2019 = vshrl.u32 %v2015, 16
    %v2020 = vshll.u32 %v2016, 16
    %v2021 = vshrl.u32 %v2016, 16
    %vm2022 = vc.u32 %v2014, %v2018
    %v2023 = vsel %vm2022, 1, 0
    %v2024 = vadd.s32 %v2014, %v2018
    %v2025 = vadd.s32 %v2017, %v2023
    %vm2026 = vc.u32 %v2024, %v2020
    %v2027 = vsel %vm2026, 1, 0
    %v2028 = vadd.s32 %v2024, %v2020
    %v2029 = vadd.s32 %v2025, %v2027
    %v2030 = vadd.s32 %v2029, %v2019
    %v2031 = vadd.s32 %v2030, %v2021
    %v2032 = vand.u32 %v2009, 65535
    %v2033 = vshrl.u32 %v2009, 16
    %v2034 = vand.u32 %v2004, 65535
    %v2035 = vshrl.u32 %v2004, 16
    %v2036 = vmul.u32 %v2032, %v2034
    %v2037 = vmul.u32 %v2032, %v2035
    %v2038 = vmul.u32 %v2033, %v2034
    %v2039 = vmul.u32 %v2033, %v2035
    %v2040 = vshll.u32 %v2037, 16
    %v2041 = vshrl.u32 %v2037, 16
    %v2042 = vshll.u32 %v2038, 16
    %v2043 = vshrl.u32 %v2038, 16
    %vm2044 = vc.u32 %v2036, %v2040
    %v2045 = vsel %vm2044, 1, 0
    %v2046 = vadd.s32 %v2036, %v2040
    %v2047 = vadd.s32 %v2039, %v2045
    %vm2048 = vc.u32 %v2046, %v2042
    %v2049 = vsel %vm2048, 1, 0
    %v2050 = vadd.s32 %v2046, %v2042
    %v2051 = vadd.s32 %v2047, %v2049
    %v2052 = vadd.s32 %v2051, %v2041
    %v2053 = vadd.s32 %v2052, %v2043
    %v2054 = vmul.u32 %v2009, %v2000
    %v2055 = vadd.s32 %v2031, %v2050
    %vm2056 = vc.u32 %v2031, %v2050
    %v2057 = vadd.s32 %v2053, 1
    %v2058 = vsel %vm2056, %v2057, %v2053
    %v2059 = vadd.s32 %v2054, %v2058
    %v2060 = vadd.s32 %v2059, 536870912
    %v2061 = vshrl.u32 %v2060, 30
    %v2062 = vshll.u32 %v2061, 30
    %v2063 = vsub.s32 %v2059, %v2062
    %vm2064 = vcmp.lt.s32.totalorder %v2063, 0
    %v2065 = vsub.s32 0, %v2063
    %v2066 = vsel %vm2064, %v2065, %v2063
    %v2067 = vclz %v2066
    %v2068 = vsub.s32 %v2067, 2
    %vm2069 = vcmp.gt.s32.totalorder 0, %v2068
    %v2070 = vsel %vm2069, 0, %v2068
    %v2071 = vsub.s32 32, %v2070
    %v2072 = vshll.u32 %v2063, %v2070
    %v2073 = vshrl.u32 %v2055, %v2071
    %v2074 = vor.u32 %v2072, %v2073
    %v2075 = vsub.s32 4294967266, %v2070
    %v2076 = vadd.s32 %v2075, 127
    %v2077 = vshll.u32 %v2076, 23
    %v2078 = vor.u32 4788187, %v2077
    %v2079 = vand.u32 2147483647, %v2078
    %v2081 = vcvt.s32.f32 %v2074
    %v2082 = vmul.f32 %v2081, %v2079
    %v2083 = vxor.u32 %v2082, 2147483648
    %v2084 = vsel %vm1963, %v2083, %v2082
    %v2085 = vsub.s32 4, %v2061
    %v2086 = vsel %vm1963, %v2085, %v2061
    %v2087 = vsel %vm1962, %v251, %v2084
    %v2088 = vsel %vm1962, 0, %v2086
    %v2089 = vmul.f32 %v2087, %v2087
    %v2090 = vmul.f32 %v2089, -0.001358992
    %v2091 = vadd.f32 %v2090, 0.041655596
    %v2092 = vmul.f32 %v2089, %v2091
    %v2093 = vadd.f32 %v2092, -0.4999988
    %v2094 = vmul.f32 %v2089, %v2093
    %v2095 = vadd.f32 1.0, %v2094
    %v2096 = vmul.f32 %v2087, %v2087
    %v2097 = vmul.f32 %v2096, -0.00019511016
    %v2098 = vadd.f32 %v2097, 0.008332121
    %v2099 = vmul.f32 %v2096, %v2098
    %v2100 = vadd.f32 %v2099, -0.16666654
    %v2101 = vmul.f32 %v2096, %v2100
    %v2102 = vadd.f32 %v2101, 1.0
    %v2103 = vmul.f32 %v2102, %v2087
    %vm2104 = vweird.f32 %v251
    %v2105 = vadd.s32 %v2088, 3
    %v2106 = vand.u32 %v2105, 3
    %vm2107 = vcmp.lt.s32.totalorder %v2106, 2
    %vm2108 = vcmp.eq.s32.totalorder %v2106, 0
    %v2109 = vxor.u32 %v2103, 2147483648
    %v2110 = vsel %vm2108, %v2095, %v2109
    %vm2111 = vcmp.eq.s32.totalorder %v2106, 2
    %v2112 = vxor.u32 %v2095, 2147483648
    %v2113 = vsel %vm2111, %v2112, %v2103
    %v2114 = vsel %vm2107, %v2110, %v2113
    %v2115 = vsel %vm2104, nan, %v2114
    %v2116 = vand.u32 2147483647, %v252
    %vm2117 = vcmp.le.f32.partialorder %v2116, 0.7853982
    %vm2118 = vcmp.lt.s32.totalorder %v252, 0
    %v2119 = vand.u32 %v252, 2139095040
    %v2120 = vshrl.u32 %v2119, 23
    %v2121 = vsub.s32 %v2120, 127
    %v2122 = vand.u32 2147483647, %v252
    %v2123 = vand.u32 %v2122, 8388607
    %v2124 = vor.u32 %v2123, 8388608
    %v2125 = vsub.s32 0, %v2124
    %v2126 = vadd.s32 %v2121, 1
    %vm2127 = vcmp.gt.s32.totalorder %v2126, 0
    %v2128 = vsel %vm2127, %v2126, 0
    %v2129 = vshrl.u32 %v2128, 5
    %v2130 = vand.u32 %v2128, 31
    %v2131 = vsub.s32 32, %v2130
    %v2132 = vshrl.u32 683565275, %v2131
    %v2133 = vshll.u32 683565275, %v2130
    %v2134 = vshrl.u32 2475754826, %v2131
    %v2135 = vor.u32 %v2133, %v2134
    %v2136 = vshll.u32 2475754826, %v2130
    %v2137 = vshrl.u32 2131351028, %v2131
    %v2138 = vor.u32 %v2136, %v2137
    %v2139 = vshll.u32 2131351028, %v2130
    %v2140 = vshrl.u32 2102212464, %v2131
    %v2141 = vor.u32 %v2139, %v2140
    %v2142 = vshll.u32 2102212464, %v2130
    %v2143 = vshrl.u32 920167782, %v2131
    %v2144 = vor.u32 %v2142, %v2143
    %v2145 = vshll.u32 920167782, %v2130
    %v2146 = vshrl.u32 1326507024, %v2131
    %v2147 = vor.u32 %v2145, %v2146
    %vm2148 = vcmp.lt.s32.totalorder %v2129, 1
    %vm2149 = vcmp.lt.s32.totalorder %v2129, 2
    %vm2150 = vcmp.lt.s32.totalorder %v2129, 3
    %vm2151 = vcmp.lt.s32.totalorder %v2129, 4
    %v2152 = vsel %vm2148, %v2132, %v2135
    %v2153 = vsel %vm2151, %v2141, 2102212464
    %v2154 = vsel %vm2150, %v2138, %v2153
    %v2155 = vsel %vm2149, %v2152, %v2154
    %v2156 = vsel %vm2148, %v2135, %v2138
    %v2157 = vsel %vm2151, %v2144, 920167782
    %v2158 = vsel %vm2150, %v2141, %v2157
    %v2159 = vsel %vm2149, %v2156, %v2158
    %v2160 = vsel %vm2148, %v2138, %v2141
    %v2161 = vsel %vm2151, %v2147, 1326507024
    %v2162 = vsel %vm2150, %v2144, %v2161
    %v2163 = vsel %vm2149, %v2160, %v2162
    %v2164 = vshll.u32 %v2124, 8
    %v2165 = vand.u32 %v2164, 65535
    %v2166 = vshrl.u32 %v2164, 16
    %v2167 = vand.u32 %v2163, 65535
    %v2168 = vshrl.u32 %v2163, 16
    %v2169 = vmul.u32 %v2165, %v2167
    %v2170 = vmul.u32 %v2165, %v2168
    %v2171 = vmul.u32 %v2166, %v2167
    %v2172 = vmul.u32 %v2166, %v2168
    %v2173 = vshll.u32 %v2170, 16
    %v2174 = vshrl.u32 %v2170, 16
    %v2175 = vshll.u32 %v2171, 16
    %v2176 = vshrl.u32 %v2171, 16
    %vm2177 = vc.u32 %v2169, %v2173
    %v2178 = vsel %vm2177, 1, 0
    %v2179 = vadd.s32 %v2169, %v2173
    %v2180 = vadd.s32 %v2172, %v2178
    %vm2181 = vc.u32 %v2179, %v2175
    %v2182 = vsel %vm2181, 1, 0
    %v2183 = vadd.s32 %v2179, %v2175
    %v2184 = vadd.s32 %v2180, %v2182
    %v2185 = vadd.s32 %v2184, %v2174
    %v2186 = vadd.s32 %v2185, %v2176
    %v2187 = vand.u32 %v2164, 65535
    %v2188 = vshrl.u32 %v2164, 16
    %v2189 = vand.u32 %v2159, 65535
    %v2190 = vshrl.u32 %v2159, 16
    %v2191 = vmul.u32 %v2187, %v2189
    %v2192 = vmul.u32 %v2187, %v2190
    %v2193 = vmul.u32 %v2188, %v2189
    %v2194 = vmul.u32 %v2188, %v2190
    %v2195 = vshll.u32 %v2192, 16
    %v2196 = vshrl.u32 %v2192, 16
    %v2197 = vshll.u32 %v2193, 16
    %v2198 = vshrl.u32 %v2193, 16
    %vm2199 = vc.u32 %v2191, %v2195
    %v2200 = vsel %vm2199, 1, 0
    %v2201 = vadd.s32 %v2191, %v2195
    %v2202 = vadd.s32 %v2194, %v2200
    %vm2203 = vc.u32 %v2201, %v2197
    %v2204 = vsel %vm2203, 1, 0
    %v2205 = vadd.s32 %v2201, %v2197
    %v2206 = vadd.s32 %v2202, %v2204
    %v2207 = vadd.s32 %v2206, %v2196
    %v2208 = vadd.s32 %v2207, %v2198
    %v2209 = vmul.u32 %v2164, %v2155
    %v2210 = vadd.s32 %v2186, %v2205
    %vm2211 = vc.u32 %v2186, %v2205
    %v2212 = vadd.s32 %v2208, 1
    %v2213 = vsel %vm2211, %v2212, %v2208
    %v2214 = vadd.s32 %v2209, %v2213
    %v2215 = vadd.s32 %v2214, 536870912
    %v2216 = vshrl.u32 %v2215, 30
    %v2217 = vshll.u32 %v2216, 30
    %v2218 = vsub.s32 %v2214, %v2217
    %vm2219 = vcmp.lt.s32.totalorder %v2218, 0
    %v2220 = vsub.s32 0, %v2218
    %v2221 = vsel %vm2219, %v2220, %v2218
    %v2222 = vclz %v2221
    %v2223 = vsub.s32 %v2222, 2
    %vm2224 = vcmp.gt.s32.totalorder 0, %v2223
    %v2225 = vsel %vm2224, 0, %v2223
    %v2226 = vsub.s32 32, %v2225
    %v2227 = vshll.u32 %v2218, %v2225
    %v2228 = vshrl.u32 %v2210, %v2226
    %v2229 = vor.u32 %v2227, %v2228
    %v2230 = vsub.s32 4294967266, %v2225
    %v2231 = vadd.s32 %v2230, 127
    %v2232 = vshll.u32 %v2231, 23
    %v2233 = vor.u32 4788187, %v2232
    %v2234 = vand.u32 2147483647, %v2233
    %v2236 = vcvt.s32.f32 %v2229
    %v2237 = vmul.f32 %v2236, %v2234
    %v2238 = vxor.u32 %v2237, 2147483648
    %v2239 = vsel %vm2118, %v2238, %v2237
    %v2240 = vsub.s32 4, %v2216
    %v2241 = vsel %vm2118, %v2240, %v2216
    %v2242 = vsel %vm2117, %v252, %v2239
    %v2243 = vsel %vm2117, 0, %v2241
    %v2244 = vmul.f32 %v2242, %v2242
    %v2245 = vmul.f32 %v2244, -0.001358992
    %v2246 = vadd.f32 %v2245, 0.041655596
    %v2247 = vmul.f32 %v2244, %v2246
    %v2248 = vadd.f32 %v2247, -0.4999988
    %v2249 = vmul.f32 %v2244, %v2248
    %v2250 = vadd.f32 1.0, %v2249
    %v2251 = vmul.f32 %v2242, %v2242
    %v2252 = vmul.f32 %v2251, -0.00019511016
    %v2253 = vadd.f32 %v2252, 0.008332121
    %v2254 = vmul.f32 %v2251, %v2253
    %v2255 = vadd.f32 %v2254, -0.16666654
    %v2256 = vmul.f32 %v2251, %v2255
    %v2257 = vadd.f32 %v2256, 1.0
    %v2258 = vmul.f32 %v2257, %v2242
    %vm2259 = vweird.f32 %v252
    %v2260 = vadd.s32 %v2243, 3
    %v2261 = vand.u32 %v2260, 3
    %vm2262 = vcmp.lt.s32.totalorder %v2261, 2
    %vm2263 = vcmp.eq.s32.totalorder %v2261, 0
    %v2264 = vxor.u32 %v2258, 2147483648
    %v2265 = vsel %vm2263, %v2250, %v2264
    %vm2266 = vcmp.eq.s32.totalorder %v2261, 2
    %v2267 = vxor.u32 %v2250, 2147483648
    %v2268 = vsel %vm2266, %v2267, %v2258
    %v2269 = vsel %vm2262, %v2265, %v2268
    %v2270 = vsel %vm2259, nan, %v2269
    %v2271 = vand.u32 2147483647, %v253
    %vm2272 = vcmp.le.f32.partialorder %v2271, 0.7853982
    %vm2273 = vcmp.lt.s32.totalorder %v253, 0
    %v2274 = vand.u32 %v253, 2139095040
    %v2275 = vshrl.u32 %v2274, 23
    %v2276 = vsub.s32 %v2275, 127
    %v2277 = vand.u32 2147483647, %v253
    %v2278 = vand.u32 %v2277, 8388607
    %v2279 = vor.u32 %v2278, 8388608
    %v2280 = vsub.s32 0, %v2279
    %v2281 = vadd.s32 %v2276, 1
    %vm2282 = vcmp.gt.s32.totalorder %v2281, 0
    %v2283 = vsel %vm2282, %v2281, 0
    %v2284 = vshrl.u32 %v2283, 5
    %v2285 = vand.u32 %v2283, 31
    %v2286 = vsub.s32 32, %v2285
    %v2287 = vshrl.u32 683565275, %v2286
    %v2288 = vshll.u32 683565275, %v2285
    %v2289 = vshrl.u32 2475754826, %v2286
    %v2290 = vor.u32 %v2288, %v2289
    %v2291 = vshll.u32 2475754826, %v2285
    %v2292 = vshrl.u32 2131351028, %v2286
    %v2293 = vor.u32 %v2291, %v2292
    %v2294 = vshll.u32 2131351028, %v2285
    %v2295 = vshrl.u32 2102212464, %v2286
    %v2296 = vor.u32 %v2294, %v2295
    %v2297 = vshll.u32 2102212464, %v2285
    %v2298 = vshrl.u32 920167782, %v2286
    %v2299 = vor.u32 %v2297, %v2298
    %v2300 = vshll.u32 920167782, %v2285
    %v2301 = vshrl.u32 1326507024, %v2286
    %v2302 = vor.u32 %v2300, %v2301
    %vm2303 = vcmp.lt.s32.totalorder %v2284, 1
    %vm2304 = vcmp.lt.s32.totalorder %v2284, 2
    %vm2305 = vcmp.lt.s32.totalorder %v2284, 3
    %vm2306 = vcmp.lt.s32.totalorder %v2284, 4
    %v2307 = vsel %vm2303, %v2287, %v2290
    %v2308 = vsel %vm2306, %v2296, 2102212464
    %v2309 = vsel %vm2305, %v2293, %v2308
    %v2310 = vsel %vm2304, %v2307, %v2309
    %v2311 = vsel %vm2303, %v2290, %v2293
    %v2312 = vsel %vm2306, %v2299, 920167782
    %v2313 = vsel %vm2305, %v2296, %v2312
    %v2314 = vsel %vm2304, %v2311, %v2313
    %v2315 = vsel %vm2303, %v2293, %v2296
    %v2316 = vsel %vm2306, %v2302, 1326507024
    %v2317 = vsel %vm2305, %v2299, %v2316
    %v2318 = vsel %vm2304, %v2315, %v2317
    %v2319 = vshll.u32 %v2279, 8
    %v2320 = vand.u32 %v2319, 65535
    %v2321 = vshrl.u32 %v2319, 16
    %v2322 = vand.u32 %v2318, 65535
    %v2323 = vshrl.u32 %v2318, 16
    %v2324 = vmul.u32 %v2320, %v2322
    %v2325 = vmul.u32 %v2320, %v2323
    %v2326 = vmul.u32 %v2321, %v2322
    %v2327 = vmul.u32 %v2321, %v2323
    %v2328 = vshll.u32 %v2325, 16
    %v2329 = vshrl.u32 %v2325, 16
    %v2330 = vshll.u32 %v2326, 16
    %v2331 = vshrl.u32 %v2326, 16
    %vm2332 = vc.u32 %v2324, %v2328
    %v2333 = vsel %vm2332, 1, 0
    %v2334 = vadd.s32 %v2324, %v2328
    %v2335 = vadd.s32 %v2327, %v2333
    %vm2336 = vc.u32 %v2334, %v2330
    %v2337 = vsel %vm2336, 1, 0
    %v2338 = vadd.s32 %v2334, %v2330
    %v2339 = vadd.s32 %v2335, %v2337
    %v2340 = vadd.s32 %v2339, %v2329
    %v2341 = vadd.s32 %v2340, %v2331
    %v2342 = vand.u32 %v2319, 65535
    %v2343 = vshrl.u32 %v2319, 16
    %v2344 = vand.u32 %v2314, 65535
    %v2345 = vshrl.u32 %v2314, 16
    %v2346 = vmul.u32 %v2342, %v2344
    %v2347 = vmul.u32 %v2342, %v2345
    %v2348 = vmul.u32 %v2343, %v2344
    %v2349 = vmul.u32 %v2343, %v2345
    %v2350 = vshll.u32 %v2347, 16
    %v2351 = vshrl.u32 %v2347, 16
    %v2352 = vshll.u32 %v2348, 16
    %v2353 = vshrl.u32 %v2348, 16
    %vm2354 = vc.u32 %v2346, %v2350
    %v2355 = vsel %vm2354, 1, 0
    %v2356 = vadd.s32 %v2346, %v2350
    %v2357 = vadd.s32 %v2349, %v2355
    %vm2358 = vc.u32 %v2356, %v2352
    %v2359 = vsel %vm2358, 1, 0
    %v2360 = vadd.s32 %v2356, %v2352
    %v2361 = vadd.s32 %v2357, %v2359
    %v2362 = vadd.s32 %v2361, %v2351
    %v2363 = vadd.s32 %v2362, %v2353
    %v2364 = vmul.u32 %v2319, %v2310
    %v2365 = vadd.s32 %v2341, %v2360
    %vm2366 = vc.u32 %v2341, %v2360
    %v2367 = vadd.s32 %v2363, 1
    %v2368 = vsel %vm2366, %v2367, %v2363
    %v2369 = vadd.s32 %v2364, %v2368
    %v2370 = vadd.s32 %v2369, 536870912
    %v2371 = vshrl.u32 %v2370, 30
    %v2372 = vshll.u32 %v2371, 30
    %v2373 = vsub.s32 %v2369, %v2372
    %vm2374 = vcmp.lt.s32.totalorder %v2373, 0
    %v2375 = vsub.s32 0, %v2373
    %v2376 = vsel %vm2374, %v2375, %v2373
    %v2377 = vclz %v2376
    %v2378 = vsub.s32 %v2377, 2
    %vm2379 = vcmp.gt.s32.totalorder 0, %v2378
    %v2380 = vsel %vm2379, 0, %v2378
    %v2381 = vsub.s32 32, %v2380
    %v2382 = vshll.u32 %v2373, %v2380
    %v2383 = vshrl.u32 %v2365, %v2381
    %v2384 = vor.u32 %v2382, %v2383
    %v2385 = vsub.s32 4294967266, %v2380
    %v2386 = vadd.s32 %v2385, 127
    %v2387 = vshll.u32 %v2386, 23
    %v2388 = vor.u32 4788187, %v2387
    %v2389 = vand.u32 2147483647, %v2388
    %v2391 = vcvt.s32.f32 %v2384
    %v2392 = vmul.f32 %v2391, %v2389
    %v2393 = vxor.u32 %v2392, 2147483648
    %v2394 = vsel %vm2273, %v2393, %v2392
    %v2395 = vsub.s32 4, %v2371
    %v2396 = vsel %vm2273, %v2395, %v2371
    %v2397 = vsel %vm2272, %v253, %v2394
    %v2398 = vsel %vm2272, 0, %v2396
    %v2399 = vmul.f32 %v2397, %v2397
    %v2400 = vmul.f32 %v2399, -0.001358992
    %v2401 = vadd.f32 %v2400, 0.041655596
    %v2402 = vmul.f32 %v2399, %v2401
    %v2403 = vadd.f32 %v2402, -0.4999988
    %v2404 = vmul.f32 %v2399, %v2403
    %v2405 = vadd.f32 1.0, %v2404
    %v2406 = vmul.f32 %v2397, %v2397
    %v2407 = vmul.f32 %v2406, -0.00019511016
    %v2408 = vadd.f32 %v2407, 0.008332121
    %v2409 = vmul.f32 %v2406, %v2408
    %v2410 = vadd.f32 %v2409, -0.16666654
    %v2411 = vmul.f32 %v2406, %v2410
    %v2412 = vadd.f32 %v2411, 1.0
    %v2413 = vmul.f32 %v2412, %v2397
    %vm2414 = vweird.f32 %v253
    %v2415 = vadd.s32 %v2398, 3
    %v2416 = vand.u32 %v2415, 3
    %vm2417 = vcmp.lt.s32.totalorder %v2416, 2
    %vm2418 = vcmp.eq.s32.totalorder %v2416, 0
    %v2419 = vxor.u32 %v2413, 2147483648
    %v2420 = vsel %vm2418, %v2405, %v2419
    %vm2421 = vcmp.eq.s32.totalorder %v2416, 2
    %v2422 = vxor.u32 %v2405, 2147483648
    %v2423 = vsel %vm2421, %v2422, %v2413
    %v2424 = vsel %vm2417, %v2420, %v2423
    %v2425 = vsel %vm2414, nan, %v2424
    %v2426 = vand.u32 2147483647, %v254
    %vm2427 = vcmp.le.f32.partialorder %v2426, 0.7853982
    %vm2428 = vcmp.lt.s32.totalorder %v254, 0
    %v2429 = vand.u32 %v254, 2139095040
    %v2430 = vshrl.u32 %v2429, 23
    %v2431 = vsub.s32 %v2430, 127
    %v2432 = vand.u32 2147483647, %v254
    %v2433 = vand.u32 %v2432, 8388607
    %v2434 = vor.u32 %v2433, 8388608
    %v2435 = vsub.s32 0, %v2434
    %v2436 = vadd.s32 %v2431, 1
    %vm2437 = vcmp.gt.s32.totalorder %v2436, 0
    %v2438 = vsel %vm2437, %v2436, 0
    %v2439 = vshrl.u32 %v2438, 5
    %v2440 = vand.u32 %v2438, 31
    %v2441 = vsub.s32 32, %v2440
    %v2442 = vshrl.u32 683565275, %v2441
    %v2443 = vshll.u32 683565275, %v2440
    %v2444 = vshrl.u32 2475754826, %v2441
    %v2445 = vor.u32 %v2443, %v2444
    %v2446 = vshll.u32 2475754826, %v2440
    %v2447 = vshrl.u32 2131351028, %v2441
    %v2448 = vor.u32 %v2446, %v2447
    %v2449 = vshll.u32 2131351028, %v2440
    %v2450 = vshrl.u32 2102212464, %v2441
    %v2451 = vor.u32 %v2449, %v2450
    %v2452 = vshll.u32 2102212464, %v2440
    %v2453 = vshrl.u32 920167782, %v2441
    %v2454 = vor.u32 %v2452, %v2453
    %v2455 = vshll.u32 920167782, %v2440
    %v2456 = vshrl.u32 1326507024, %v2441
    %v2457 = vor.u32 %v2455, %v2456
    %vm2458 = vcmp.lt.s32.totalorder %v2439, 1
    %vm2459 = vcmp.lt.s32.totalorder %v2439, 2
    %vm2460 = vcmp.lt.s32.totalorder %v2439, 3
    %vm2461 = vcmp.lt.s32.totalorder %v2439, 4
    %v2462 = vsel %vm2458, %v2442, %v2445
    %v2463 = vsel %vm2461, %v2451, 2102212464
    %v2464 = vsel %vm2460, %v2448, %v2463
    %v2465 = vsel %vm2459, %v2462, %v2464
    %v2466 = vsel %vm2458, %v2445, %v2448
    %v2467 = vsel %vm2461, %v2454, 920167782
    %v2468 = vsel %vm2460, %v2451, %v2467
    %v2469 = vsel %vm2459, %v2466, %v2468
    %v2470 = vsel %vm2458, %v2448, %v2451
    %v2471 = vsel %vm2461, %v2457, 1326507024
    %v2472 = vsel %vm2460, %v2454, %v2471
    %v2473 = vsel %vm2459, %v2470, %v2472
    %v2474 = vshll.u32 %v2434, 8
    %v2475 = vand.u32 %v2474, 65535
    %v2476 = vshrl.u32 %v2474, 16
    %v2477 = vand.u32 %v2473, 65535
    %v2478 = vshrl.u32 %v2473, 16
    %v2479 = vmul.u32 %v2475, %v2477
    %v2480 = vmul.u32 %v2475, %v2478
    %v2481 = vmul.u32 %v2476, %v2477
    %v2482 = vmul.u32 %v2476, %v2478
    %v2483 = vshll.u32 %v2480, 16
    %v2484 = vshrl.u32 %v2480, 16
    %v2485 = vshll.u32 %v2481, 16
    %v2486 = vshrl.u32 %v2481, 16
    %vm2487 = vc.u32 %v2479, %v2483
    %v2488 = vsel %vm2487, 1, 0
    %v2489 = vadd.s32 %v2479, %v2483
    %v2490 = vadd.s32 %v2482, %v2488
    %vm2491 = vc.u32 %v2489, %v2485
    %v2492 = vsel %vm2491, 1, 0
    %v2493 = vadd.s32 %v2489, %v2485
    %v2494 = vadd.s32 %v2490, %v2492
    %v2495 = vadd.s32 %v2494, %v2484
    %v2496 = vadd.s32 %v2495, %v2486
    %v2497 = vand.u32 %v2474, 65535
    %v2498 = vshrl.u32 %v2474, 16
    %v2499 = vand.u32 %v2469, 65535
    %v2500 = vshrl.u32 %v2469, 16
    %v2501 = vmul.u32 %v2497, %v2499
    %v2502 = vmul.u32 %v2497, %v2500
    %v2503 = vmul.u32 %v2498, %v2499
    %v2504 = vmul.u32 %v2498, %v2500
    %v2505 = vshll.u32 %v2502, 16
    %v2506 = vshrl.u32 %v2502, 16
    %v2507 = vshll.u32 %v2503, 16
    %v2508 = vshrl.u32 %v2503, 16
    %vm2509 = vc.u32 %v2501, %v2505
    %v2510 = vsel %vm2509, 1, 0
    %v2511 = vadd.s32 %v2501, %v2505
    %v2512 = vadd.s32 %v2504, %v2510
    %vm2513 = vc.u32 %v2511, %v2507
    %v2514 = vsel %vm2513, 1, 0
    %v2515 = vadd.s32 %v2511, %v2507
    %v2516 = vadd.s32 %v2512, %v2514
    %v2517 = vadd.s32 %v2516, %v2506
    %v2518 = vadd.s32 %v2517, %v2508
    %v2519 = vmul.u32 %v2474, %v2465
    %v2520 = vadd.s32 %v2496, %v2515
    %vm2521 = vc.u32 %v2496, %v2515
    %v2522 = vadd.s32 %v2518, 1
    %v2523 = vsel %vm2521, %v2522, %v2518
    %v2524 = vadd.s32 %v2519, %v2523
    %v2525 = vadd.s32 %v2524, 536870912
    %v2526 = vshrl.u32 %v2525, 30
    %v2527 = vshll.u32 %v2526, 30
    %v2528 = vsub.s32 %v2524, %v2527
    %vm2529 = vcmp.lt.s32.totalorder %v2528, 0
    %v2530 = vsub.s32 0, %v2528
    %v2531 = vsel %vm2529, %v2530, %v2528
    %v2532 = vclz %v2531
    %v2533 = vsub.s32 %v2532, 2
    %vm2534 = vcmp.gt.s32.totalorder 0, %v2533
    %v2535 = vsel %vm2534, 0, %v2533
    %v2536 = vsub.s32 32, %v2535
    %v2537 = vshll.u32 %v2528, %v2535
    %v2538 = vshrl.u32 %v2520, %v2536
    %v2539 = vor.u32 %v2537, %v2538
    %v2540 = vsub.s32 4294967266, %v2535
    %v2541 = vadd.s32 %v2540, 127
    %v2542 = vshll.u32 %v2541, 23
    %v2543 = vor.u32 4788187, %v2542
    %v2544 = vand.u32 2147483647, %v2543
    %v2546 = vcvt.s32.f32 %v2539
    %v2547 = vmul.f32 %v2546, %v2544
    %v2548 = vxor.u32 %v2547, 2147483648
    %v2549 = vsel %vm2428, %v2548, %v2547
    %v2550 = vsub.s32 4, %v2526
    %v2551 = vsel %vm2428, %v2550, %v2526
    %v2552 = vsel %vm2427, %v254, %v2549
    %v2553 = vsel %vm2427, 0, %v2551
    %v2554 = vmul.f32 %v2552, %v2552
    %v2555 = vmul.f32 %v2554, -0.001358992
    %v2556 = vadd.f32 %v2555, 0.041655596
    %v2557 = vmul.f32 %v2554, %v2556
    %v2558 = vadd.f32 %v2557, -0.4999988
    %v2559 = vmul.f32 %v2554, %v2558
    %v2560 = vadd.f32 1.0, %v2559
    %v2561 = vmul.f32 %v2552, %v2552
    %v2562 = vmul.f32 %v2561, -0.00019511016
    %v2563 = vadd.f32 %v2562, 0.008332121
    %v2564 = vmul.f32 %v2561, %v2563
    %v2565 = vadd.f32 %v2564, -0.16666654
    %v2566 = vmul.f32 %v2561, %v2565
    %v2567 = vadd.f32 %v2566, 1.0
    %v2568 = vmul.f32 %v2567, %v2552
    %vm2569 = vweird.f32 %v254
    %v2570 = vadd.s32 %v2553, 3
    %v2571 = vand.u32 %v2570, 3
    %vm2572 = vcmp.lt.s32.totalorder %v2571, 2
    %vm2573 = vcmp.eq.s32.totalorder %v2571, 0
    %v2574 = vxor.u32 %v2568, 2147483648
    %v2575 = vsel %vm2573, %v2560, %v2574
    %vm2576 = vcmp.eq.s32.totalorder %v2571, 2
    %v2577 = vxor.u32 %v2560, 2147483648
    %v2578 = vsel %vm2576, %v2577, %v2568
    %v2579 = vsel %vm2572, %v2575, %v2578
    %v2580 = vsel %vm2569, nan, %v2579
    %v2581 = vand.u32 2147483647, %v255
    %vm2582 = vcmp.le.f32.partialorder %v2581, 0.7853982
    %vm2583 = vcmp.lt.s32.totalorder %v255, 0
    %v2584 = vand.u32 %v255, 2139095040
    %v2585 = vshrl.u32 %v2584, 23
    %v2586 = vsub.s32 %v2585, 127
    %v2587 = vand.u32 2147483647, %v255
    %v2588 = vand.u32 %v2587, 8388607
    %v2589 = vor.u32 %v2588, 8388608
    %v2590 = vsub.s32 0, %v2589
    %v2591 = vadd.s32 %v2586, 1
    %vm2592 = vcmp.gt.s32.totalorder %v2591, 0
    %v2593 = vsel %vm2592, %v2591, 0
    %v2594 = vshrl.u32 %v2593, 5
    %v2595 = vand.u32 %v2593, 31
    %v2596 = vsub.s32 32, %v2595
    %v2597 = vshrl.u32 683565275, %v2596
    %v2598 = vshll.u32 683565275, %v2595
    %v2599 = vshrl.u32 2475754826, %v2596
    %v2600 = vor.u32 %v2598, %v2599
    %v2601 = vshll.u32 2475754826, %v2595
    %v2602 = vshrl.u32 2131351028, %v2596
    %v2603 = vor.u32 %v2601, %v2602
    %v2604 = vshll.u32 2131351028, %v2595
    %v2605 = vshrl.u32 2102212464, %v2596
    %v2606 = vor.u32 %v2604, %v2605
    %v2607 = vshll.u32 2102212464, %v2595
    %v2608 = vshrl.u32 920167782, %v2596
    %v2609 = vor.u32 %v2607, %v2608
    %v2610 = vshll.u32 920167782, %v2595
    %v2611 = vshrl.u32 1326507024, %v2596
    %v2612 = vor.u32 %v2610, %v2611
    %vm2613 = vcmp.lt.s32.totalorder %v2594, 1
    %vm2614 = vcmp.lt.s32.totalorder %v2594, 2
    %vm2615 = vcmp.lt.s32.totalorder %v2594, 3
    %vm2616 = vcmp.lt.s32.totalorder %v2594, 4
    %v2617 = vsel %vm2613, %v2597, %v2600
    %v2618 = vsel %vm2616, %v2606, 2102212464
    %v2619 = vsel %vm2615, %v2603, %v2618
    %v2620 = vsel %vm2614, %v2617, %v2619
    %v2621 = vsel %vm2613, %v2600, %v2603
    %v2622 = vsel %vm2616, %v2609, 920167782
    %v2623 = vsel %vm2615, %v2606, %v2622
    %v2624 = vsel %vm2614, %v2621, %v2623
    %v2625 = vsel %vm2613, %v2603, %v2606
    %v2626 = vsel %vm2616, %v2612, 1326507024
    %v2627 = vsel %vm2615, %v2609, %v2626
    %v2628 = vsel %vm2614, %v2625, %v2627
    %v2629 = vshll.u32 %v2589, 8
    %v2630 = vand.u32 %v2629, 65535
    %v2631 = vshrl.u32 %v2629, 16
    %v2632 = vand.u32 %v2628, 65535
    %v2633 = vshrl.u32 %v2628, 16
    %v2634 = vmul.u32 %v2630, %v2632
    %v2635 = vmul.u32 %v2630, %v2633
    %v2636 = vmul.u32 %v2631, %v2632
    %v2637 = vmul.u32 %v2631, %v2633
    %v2638 = vshll.u32 %v2635, 16
    %v2639 = vshrl.u32 %v2635, 16
    %v2640 = vshll.u32 %v2636, 16
    %v2641 = vshrl.u32 %v2636, 16
    %vm2642 = vc.u32 %v2634, %v2638
    %v2643 = vsel %vm2642, 1, 0
    %v2644 = vadd.s32 %v2634, %v2638
    %v2645 = vadd.s32 %v2637, %v2643
    %vm2646 = vc.u32 %v2644, %v2640
    %v2647 = vsel %vm2646, 1, 0
    %v2648 = vadd.s32 %v2644, %v2640
    %v2649 = vadd.s32 %v2645, %v2647
    %v2650 = vadd.s32 %v2649, %v2639
    %v2651 = vadd.s32 %v2650, %v2641
    %v2652 = vand.u32 %v2629, 65535
    %v2653 = vshrl.u32 %v2629, 16
    %v2654 = vand.u32 %v2624, 65535
    %v2655 = vshrl.u32 %v2624, 16
    %v2656 = vmul.u32 %v2652, %v2654
    %v2657 = vmul.u32 %v2652, %v2655
    %v2658 = vmul.u32 %v2653, %v2654
    %v2659 = vmul.u32 %v2653, %v2655
    %v2660 = vshll.u32 %v2657, 16
    %v2661 = vshrl.u32 %v2657, 16
    %v2662 = vshll.u32 %v2658, 16
    %v2663 = vshrl.u32 %v2658, 16
    %vm2664 = vc.u32 %v2656, %v2660
    %v2665 = vsel %vm2664, 1, 0
    %v2666 = vadd.s32 %v2656, %v2660
    %v2667 = vadd.s32 %v2659, %v2665
    %vm2668 = vc.u32 %v2666, %v2662
    %v2669 = vsel %vm2668, 1, 0
    %v2670 = vadd.s32 %v2666, %v2662
    %v2671 = vadd.s32 %v2667, %v2669
    %v2672 = vadd.s32 %v2671, %v2661
    %v2673 = vadd.s32 %v2672, %v2663
    %v2674 = vmul.u32 %v2629, %v2620
    %v2675 = vadd.s32 %v2651, %v2670
    %vm2676 = vc.u32 %v2651, %v2670
    %v2677 = vadd.s32 %v2673, 1
    %v2678 = vsel %vm2676, %v2677, %v2673
    %v2679 = vadd.s32 %v2674, %v2678
    %v2680 = vadd.s32 %v2679, 536870912
    %v2681 = vshrl.u32 %v2680, 30
    %v2682 = vshll.u32 %v2681, 30
    %v2683 = vsub.s32 %v2679, %v2682
    %vm2684 = vcmp.lt.s32.totalorder %v2683, 0
    %v2685 = vsub.s32 0, %v2683
    %v2686 = vsel %vm2684, %v2685, %v2683
    %v2687 = vclz %v2686
    %v2688 = vsub.s32 %v2687, 2
    %vm2689 = vcmp.gt.s32.totalorder 0, %v2688
    %v2690 = vsel %vm2689, 0, %v2688
    %v2691 = vsub.s32 32, %v2690
    %v2692 = vshll.u32 %v2683, %v2690
    %v2693 = vshrl.u32 %v2675, %v2691
    %v2694 = vor.u32 %v2692, %v2693
    %v2695 = vsub.s32 4294967266, %v2690
    %v2696 = vadd.s32 %v2695, 127
    %v2697 = vshll.u32 %v2696, 23
    %v2698 = vor.u32 4788187, %v2697
    %v2699 = vand.u32 2147483647, %v2698
    %v2701 = vcvt.s32.f32 %v2694
    %v2702 = vmul.f32 %v2701, %v2699
    %v2703 = vxor.u32 %v2702, 2147483648
    %v2704 = vsel %vm2583, %v2703, %v2702
    %v2705 = vsub.s32 4, %v2681
    %v2706 = vsel %vm2583, %v2705, %v2681
    %v2707 = vsel %vm2582, %v255, %v2704
    %v2708 = vsel %vm2582, 0, %v2706
    %v2709 = vmul.f32 %v2707, %v2707
    %v2710 = vmul.f32 %v2709, -0.001358992
    %v2711 = vadd.f32 %v2710, 0.041655596
    %v2712 = vmul.f32 %v2709, %v2711
    %v2713 = vadd.f32 %v2712, -0.4999988
    %v2714 = vmul.f32 %v2709, %v2713
    %v2715 = vadd.f32 1.0, %v2714
    %v2716 = vmul.f32 %v2707, %v2707
    %v2717 = vmul.f32 %v2716, -0.00019511016
    %v2718 = vadd.f32 %v2717, 0.008332121
    %v2719 = vmul.f32 %v2716, %v2718
    %v2720 = vadd.f32 %v2719, -0.16666654
    %v2721 = vmul.f32 %v2716, %v2720
    %v2722 = vadd.f32 %v2721, 1.0
    %v2723 = vmul.f32 %v2722, %v2707
    %vm2724 = vweird.f32 %v255
    %v2725 = vadd.s32 %v2708, 3
    %v2726 = vand.u32 %v2725, 3
    %vm2727 = vcmp.lt.s32.totalorder %v2726, 2
    %vm2728 = vcmp.eq.s32.totalorder %v2726, 0
    %v2729 = vxor.u32 %v2723, 2147483648
    %v2730 = vsel %vm2728, %v2715, %v2729
    %vm2731 = vcmp.eq.s32.totalorder %v2726, 2
    %v2732 = vxor.u32 %v2715, 2147483648
    %v2733 = vsel %vm2731, %v2732, %v2723
    %v2734 = vsel %vm2727, %v2730, %v2733
    %v2735 = vsel %vm2724, nan, %v2734
    %v2736 = vperm.slane %v220, 0
    %v2737 = vmul.f32 %v2736, %v410
    %v2738 = vmul.f32 %v2736, %v565
    %v2739 = vmul.f32 %v2736, %v720
    %v2740 = vmul.f32 %v2736, %v875
    %v2741 = vmul.f32 %v2736, %v1030
    %v2742 = vmul.f32 %v2736, %v1185
    %v2743 = vmul.f32 %v2736, %v1340
    %v2744 = vmul.f32 %v2736, %v1495
    %v2745 = vmul.f32 %v2736, %v1650
    %v2746 = vmul.f32 %v2736, %v1805
    %v2747 = vmul.f32 %v2736, %v1960
    %v2748 = vmul.f32 %v2736, %v2115
    %v2749 = vmul.f32 %v2736, %v2270
    %v2750 = vmul.f32 %v2736, %v2425
    %v2751 = vmul.f32 %v2736, %v2580
    %v2752 = vmul.f32 %v2736, %v2735
    %v2753 = vadd.f32 %v223, %v2737
    %v2754 = vadd.f32 %v224, %v2738
    %v2755 = vadd.f32 %v225, %v2739
    %v2756 = vadd.f32 %v226, %v2740
    %v2757 = vadd.f32 %v227, %v2741
    %v2758 = vadd.f32 %v228, %v2742
    %v2759 = vadd.f32 %v229, %v2743
    %v2760 = vadd.f32 %v230, %v2744
    %v2761 = vadd.f32 %v231, %v2745
    %v2762 = vadd.f32 %v232, %v2746
    %v2763 = vadd.f32 %v233, %v2747
    %v2764 = vadd.f32 %v234, %v2748
    %v2765 = vadd.f32 %v235, %v2749
    %v2766 = vadd.f32 %v236, %v2750
    %v2767 = vadd.f32 %v237, %v2751
    %v2768 = vadd.f32 %v238, %v2752
    %v2769 = vpack.c.bf16 %v2754, %v2753
    %v2770 = vpack.c.bf16 %v2756, %v2755
    %v2771 = vpack.c.bf16 %v2758, %v2757
    %v2772 = vpack.c.bf16 %v2760, %v2759
    %v2773 = vpack.c.bf16 %v2762, %v2761
    %v2774 = vpack.c.bf16 %v2764, %v2763
    %v2775 = vpack.c.bf16 %v2766, %v2765
    %v2776 = vpack.c.bf16 %v2768, %v2767
    %v2777 = vld [vmem:[%s3] sm:$0xf]
    %v2778 = vld [vmem:[%s3 + $0x4] sm:$0xf]
    %v2779 = vld [vmem:[%s3 + $0x8] sm:$0xf]
    %v2780 = vld [vmem:[%s3 + $0xc] sm:$0xf]
    %v2781 = vld [vmem:[%s3 + $0x10] sm:$0xf]
    %v2782 = vld [vmem:[%s3 + $0x14] sm:$0xf]
    %v2783 = vld [vmem:[%s3 + $0x18] sm:$0xf]
    %v2784 = vld [vmem:[%s3 + $0x1c] sm:$0xf]
    %v2785 = vld [vmem:[%s3 + $0x20] sm:$0xf]
    %v2786 = vld [vmem:[%s3 + $0x24] sm:$0xf]
    %v2787 = vld [vmem:[%s3 + $0x28] sm:$0xf]
    %v2788 = vld [vmem:[%s3 + $0x2c] sm:$0xf]
    %v2789 = vld [vmem:[%s3 + $0x30] sm:$0xf]
    %v2790 = vld [vmem:[%s3 + $0x34] sm:$0xf]
    %v2791 = vld [vmem:[%s3 + $0x38] sm:$0xf]
    %v2792 = vld [vmem:[%s3 + $0x3c] sm:$0xf]
    %v2793 = vld [vmem:[%s4] sm:$0x1]
    %v2795 = vperm.slane %v2793, 0
    %v2813 = vunpack.c.l.b16 %v2777
    %v2814 = vunpack.c.l.b16 %v2778
    %v2815 = vunpack.c.l.b16 %v2779
    %v2816 = vunpack.c.l.b16 %v2780
    %v2817 = vunpack.c.l.b16 %v2781
    %v2818 = vunpack.c.l.b16 %v2782
    %v2819 = vunpack.c.l.b16 %v2783
    %v2820 = vunpack.c.l.b16 %v2784
    %v2821 = vunpack.c.l.b16 %v2785
    %v2822 = vunpack.c.l.b16 %v2786
    %v2823 = vunpack.c.l.b16 %v2787
    %v2824 = vunpack.c.l.b16 %v2788
    %v2825 = vunpack.c.l.b16 %v2789
    %v2826 = vunpack.c.l.b16 %v2790
    %v2827 = vunpack.c.l.b16 %v2791
    %v2828 = vunpack.c.l.b16 %v2792
    %v2829 = vpack.c.b16 %v2814, %v2813
    %v2830 = vpack.c.b16 %v2816, %v2815
    %v2831 = vpack.c.b16 %v2818, %v2817
    %v2832 = vpack.c.b16 %v2820, %v2819
    %v2833 = vpack.c.b16 %v2822, %v2821
    %v2834 = vpack.c.b16 %v2824, %v2823
    %v2835 = vpack.c.b16 %v2826, %v2825
    %v2836 = vpack.c.b16 %v2828, %v2827
    %2845 = vmatpush.bf16.msra.mxu0 %v2836
    %2846 = vmatpush.bf16.msra.mxu0 %v2835
    %2847 = vmatpush.bf16.msra.mxu0 %v2834
    %2848 = vmatpush.bf16.msra.mxu0 %v2833
    %2849 = vmatpush.bf16.msra.mxu0 %v2832
    %2850 = vmatpush.bf16.msra.mxu0 %v2831
    %2851 = vmatpush.bf16.msra.mxu0 %v2830
    %2852 = vmatpush.bf16.msra.mxu0 %v2829
    %2853 = vmatmul.bf16.gmra.mxu0 %v2769
    %v2854 = vpop.f32.mrf.mxu0
    %v2855 = vadd.f32 %v2795, %v2854
    %v2856 = vpop.f32.mrf.mxu0
    %v2857 = vadd.f32 %v2795, %v2856
    %2858 = vmatmul.bf16.gmra.mxu0 %v2770
    %v2859 = vpop.f32.mrf.mxu0
    %v2860 = vadd.f32 %v2795, %v2859
    %v2861 = vpop.f32.mrf.mxu0
    %v2862 = vadd.f32 %v2795, %v2861
    %2863 = vmatmul.bf16.gmra.mxu0 %v2771
    %v2864 = vpop.f32.mrf.mxu0
    %v2865 = vadd.f32 %v2795, %v2864
    %v2866 = vpop.f32.mrf.mxu0
    %v2867 = vadd.f32 %v2795, %v2866
    %2868 = vmatmul.bf16.gmra.mxu0 %v2772
    %v2869 = vpop.f32.mrf.mxu0
    %v2870 = vadd.f32 %v2795, %v2869
    %v2871 = vpop.f32.mrf.mxu0
    %v2872 = vadd.f32 %v2795, %v2871
    %2873 = vmatmul.bf16.gmra.mxu0 %v2773
    %v2874 = vpop.f32.mrf.mxu0
    %v2875 = vadd.f32 %v2795, %v2874
    %v2876 = vpop.f32.mrf.mxu0
    %v2877 = vadd.f32 %v2795, %v2876
    %2878 = vmatmul.bf16.gmra.mxu0 %v2774
    %v2879 = vpop.f32.mrf.mxu0
    %v2880 = vadd.f32 %v2795, %v2879
    %v2881 = vpop.f32.mrf.mxu0
    %v2882 = vadd.f32 %v2795, %v2881
    %2883 = vmatmul.bf16.gmra.mxu0 %v2775
    %v2884 = vpop.f32.mrf.mxu0
    %v2885 = vadd.f32 %v2795, %v2884
    %v2886 = vpop.f32.mrf.mxu0
    %v2887 = vadd.f32 %v2795, %v2886
    %2888 = vmatmul.bf16.gmra.mxu0 %v2776
    %v2889 = vpop.f32.mrf.mxu0
    %v2890 = vadd.f32 %v2795, %v2889
    %v2891 = vpop.f32.mrf.mxu0
    %v2892 = vadd.f32 %v2795, %v2891
    %2893 = vdwg.mxu0
    %v2894 = vmax.f32 %v2855, 0.0
    %v2895 = vmax.f32 %v2857, 0.0
    %v2896 = vmax.f32 %v2860, 0.0
    %v2897 = vmax.f32 %v2862, 0.0
    %v2898 = vmax.f32 %v2865, 0.0
    %v2899 = vmax.f32 %v2867, 0.0
    %v2900 = vmax.f32 %v2870, 0.0
    %v2901 = vmax.f32 %v2872, 0.0
    %v2902 = vmax.f32 %v2875, 0.0
    %v2903 = vmax.f32 %v2877, 0.0
    %v2904 = vmax.f32 %v2880, 0.0
    %v2905 = vmax.f32 %v2882, 0.0
    %v2906 = vmax.f32 %v2885, 0.0
    %v2907 = vmax.f32 %v2887, 0.0
    %v2908 = vmax.f32 %v2890, 0.0
    %v2909 = vmax.f32 %v2892, 0.0
    %v2910 = vpack.c.bf16 %v2895, %v2894
    %v2911 = vpack.c.bf16 %v2897, %v2896
    %v2912 = vpack.c.bf16 %v2899, %v2898
    %v2913 = vpack.c.bf16 %v2901, %v2900
    %v2914 = vpack.c.bf16 %v2903, %v2902
    %v2915 = vpack.c.bf16 %v2905, %v2904
    %v2916 = vpack.c.bf16 %v2907, %v2906
    %v2917 = vpack.c.bf16 %v2909, %v2908
    %v2918 = vld [vmem:[#allocation3] sm:$0xf]
    %v2919 = vld [vmem:[#allocation3 + $0x4] sm:$0xf]
    %v2920 = vld [vmem:[#allocation3 + $0x8] sm:$0xf]
    %v2921 = vld [vmem:[#allocation3 + $0xc] sm:$0xf]
    %v2922 = vld [vmem:[#allocation3 + $0x10] sm:$0xf]
    %v2923 = vld [vmem:[#allocation3 + $0x14] sm:$0xf]
    %v2924 = vld [vmem:[#allocation3 + $0x18] sm:$0xf]
    %v2925 = vld [vmem:[#allocation3 + $0x1c] sm:$0xf]
    %v2926 = vld [vmem:[#allocation3 + $0x20] sm:$0xf]
    %v2927 = vld [vmem:[#allocation3 + $0x24] sm:$0xf]
    %v2928 = vld [vmem:[#allocation3 + $0x28] sm:$0xf]
    %v2929 = vld [vmem:[#allocation3 + $0x2c] sm:$0xf]
    %v2930 = vld [vmem:[#allocation3 + $0x30] sm:$0xf]
    %v2931 = vld [vmem:[#allocation3 + $0x34] sm:$0xf]
    %v2932 = vld [vmem:[#allocation3 + $0x38] sm:$0xf]
    %v2933 = vld [vmem:[#allocation3 + $0x3c] sm:$0xf]
    %v2934 = vld [vmem:[%s6] sm:$0x1]
    %v2936 = vperm.slane %v2934, 0
    %v2954 = vunpack.c.l.b16 %v2918
    %v2955 = vunpack.c.l.b16 %v2919
    %v2956 = vunpack.c.l.b16 %v2920
    %v2957 = vunpack.c.l.b16 %v2921
    %v2958 = vunpack.c.l.b16 %v2922
    %v2959 = vunpack.c.l.b16 %v2923
    %v2960 = vunpack.c.l.b16 %v2924
    %v2961 = vunpack.c.l.b16 %v2925
    %v2962 = vunpack.c.l.b16 %v2926
    %v2963 = vunpack.c.l.b16 %v2927
    %v2964 = vunpack.c.l.b16 %v2928
    %v2965 = vunpack.c.l.b16 %v2929
    %v2966 = vunpack.c.l.b16 %v2930
    %v2967 = vunpack.c.l.b16 %v2931
    %v2968 = vunpack.c.l.b16 %v2932
    %v2969 = vunpack.c.l.b16 %v2933
    %v2970 = vpack.c.b16 %v2955, %v2954
    %v2971 = vpack.c.b16 %v2957, %v2956
    %v2972 = vpack.c.b16 %v2959, %v2958
    %v2973 = vpack.c.b16 %v2961, %v2960
    %v2974 = vpack.c.b16 %v2963, %v2962
    %v2975 = vpack.c.b16 %v2965, %v2964
    %v2976 = vpack.c.b16 %v2967, %v2966
    %v2977 = vpack.c.b16 %v2969, %v2968
    %2986 = vmatpush.bf16.msra.mxu0 %v2977
    %2987 = vmatpush.bf16.msra.mxu0 %v2976
    %2988 = vmatpush.bf16.msra.mxu0 %v2975
    %2989 = vmatpush.bf16.msra.mxu0 %v2974
    %2990 = vmatpush.bf16.msra.mxu0 %v2973
    %2991 = vmatpush.bf16.msra.mxu0 %v2972
    %2992 = vmatpush.bf16.msra.mxu0 %v2971
    %2993 = vmatpush.bf16.msra.mxu0 %v2970
    %2994 = vmatmul.bf16.gmra.mxu0 %v2910
    %v2995 = vpop.f32.mrf.mxu0
    %v2996 = vadd.f32 %v2936, %v2995
    %v2997 = vpop.f32.mrf.mxu0
    %v2998 = vadd.f32 %v2936, %v2997
    %2999 = vmatmul.bf16.gmra.mxu0 %v2911
    %v3000 = vpop.f32.mrf.mxu0
    %v3001 = vadd.f32 %v2936, %v3000
    %v3002 = vpop.f32.mrf.mxu0
    %v3003 = vadd.f32 %v2936, %v3002
    %3004 = vmatmul.bf16.gmra.mxu0 %v2912
    %v3005 = vpop.f32.mrf.mxu0
    %v3006 = vadd.f32 %v2936, %v3005
    %v3007 = vpop.f32.mrf.mxu0
    %v3008 = vadd.f32 %v2936, %v3007
    %3009 = vmatmul.bf16.gmra.mxu0 %v2913
    %v3010 = vpop.f32.mrf.mxu0
    %v3011 = vadd.f32 %v2936, %v3010
    %v3012 = vpop.f32.mrf.mxu0
    %v3013 = vadd.f32 %v2936, %v3012
    %3014 = vmatmul.bf16.gmra.mxu0 %v2914
    %v3015 = vpop.f32.mrf.mxu0
    %v3016 = vadd.f32 %v2936, %v3015
    %v3017 = vpop.f32.mrf.mxu0
    %v3018 = vadd.f32 %v2936, %v3017
    %3019 = vmatmul.bf16.gmra.mxu0 %v2915
    %v3020 = vpop.f32.mrf.mxu0
    %v3021 = vadd.f32 %v2936, %v3020
    %v3022 = vpop.f32.mrf.mxu0
    %v3023 = vadd.f32 %v2936, %v3022
    %3024 = vmatmul.bf16.gmra.mxu0 %v2916
    %v3025 = vpop.f32.mrf.mxu0
    %v3026 = vadd.f32 %v2936, %v3025
    %v3027 = vpop.f32.mrf.mxu0
    %v3028 = vadd.f32 %v2936, %v3027
    %3029 = vmatmul.bf16.gmra.mxu0 %v2917
    %v3030 = vpop.f32.mrf.mxu0
    %v3031 = vadd.f32 %v2936, %v3030
    %v3032 = vpop.f32.mrf.mxu0
    %v3033 = vadd.f32 %v2936, %v3032
    %3034 = vdwg.mxu0
    %v3035 = vmax.f32 %v2996, 0.0
    %v3036 = vmax.f32 %v2998, 0.0
    %v3037 = vmax.f32 %v3001, 0.0
    %v3038 = vmax.f32 %v3003, 0.0
    %v3039 = vmax.f32 %v3006, 0.0
    %v3040 = vmax.f32 %v3008, 0.0
    %v3041 = vmax.f32 %v3011, 0.0
    %v3042 = vmax.f32 %v3013, 0.0
    %v3043 = vmax.f32 %v3016, 0.0
    %v3044 = vmax.f32 %v3018, 0.0
    %v3045 = vmax.f32 %v3021, 0.0
    %v3046 = vmax.f32 %v3023, 0.0
    %v3047 = vmax.f32 %v3026, 0.0
    %v3048 = vmax.f32 %v3028, 0.0
    %v3049 = vmax.f32 %v3031, 0.0
    %v3050 = vmax.f32 %v3033, 0.0
    %v3051 = vpack.c.bf16 %v3036, %v3035
    %v3052 = vpack.c.bf16 %v3038, %v3037
    %v3053 = vpack.c.bf16 %v3040, %v3039
    %v3054 = vpack.c.bf16 %v3042, %v3041
    %v3055 = vpack.c.bf16 %v3044, %v3043
    %v3056 = vpack.c.bf16 %v3046, %v3045
    %v3057 = vpack.c.bf16 %v3048, %v3047
    %v3058 = vpack.c.bf16 %v3050, %v3049
    %v3059 = vld [vmem:[#allocation5] sm:$0xf]
    %v3060 = vld [vmem:[#allocation5 + $0x4] sm:$0xf]
    %v3061 = vld [vmem:[#allocation5 + $0x8] sm:$0xf]
    %v3062 = vld [vmem:[#allocation5 + $0xc] sm:$0xf]
    %v3063 = vld [vmem:[#allocation5 + $0x10] sm:$0xf]
    %v3064 = vld [vmem:[#allocation5 + $0x14] sm:$0xf]
    %v3065 = vld [vmem:[#allocation5 + $0x18] sm:$0xf]
    %v3066 = vld [vmem:[#allocation5 + $0x1c] sm:$0xf]
    %v3067 = vld [vmem:[#allocation5 + $0x20] sm:$0xf]
    %v3068 = vld [vmem:[#allocation5 + $0x24] sm:$0xf]
    %v3069 = vld [vmem:[#allocation5 + $0x28] sm:$0xf]
    %v3070 = vld [vmem:[#allocation5 + $0x2c] sm:$0xf]
    %v3071 = vld [vmem:[#allocation5 + $0x30] sm:$0xf]
    %v3072 = vld [vmem:[#allocation5 + $0x34] sm:$0xf]
    %v3073 = vld [vmem:[#allocation5 + $0x38] sm:$0xf]
    %v3074 = vld [vmem:[#allocation5 + $0x3c] sm:$0xf]
    %v3075 = vld [vmem:[%s8] sm:$0x1]
    %v3077 = vperm.slane %v3075, 0
    %v3095 = vunpack.c.l.b16 %v3059
    %v3096 = vunpack.c.l.b16 %v3060
    %v3097 = vunpack.c.l.b16 %v3061
    %v3098 = vunpack.c.l.b16 %v3062
    %v3099 = vunpack.c.l.b16 %v3063
    %v3100 = vunpack.c.l.b16 %v3064
    %v3101 = vunpack.c.l.b16 %v3065
    %v3102 = vunpack.c.l.b16 %v3066
    %v3103 = vunpack.c.l.b16 %v3067
    %v3104 = vunpack.c.l.b16 %v3068
    %v3105 = vunpack.c.l.b16 %v3069
    %v3106 = vunpack.c.l.b16 %v3070
    %v3107 = vunpack.c.l.b16 %v3071
    %v3108 = vunpack.c.l.b16 %v3072
    %v3109 = vunpack.c.l.b16 %v3073
    %v3110 = vunpack.c.l.b16 %v3074
    %v3111 = vpack.c.b16 %v3096, %v3095
    %v3112 = vpack.c.b16 %v3098, %v3097
    %v3113 = vpack.c.b16 %v3100, %v3099
    %v3114 = vpack.c.b16 %v3102, %v3101
    %v3115 = vpack.c.b16 %v3104, %v3103
    %v3116 = vpack.c.b16 %v3106, %v3105
    %v3117 = vpack.c.b16 %v3108, %v3107
    %v3118 = vpack.c.b16 %v3110, %v3109
    %3127 = vmatpush.bf16.msra.mxu0 %v3118
    %3128 = vmatpush.bf16.msra.mxu0 %v3117
    %3129 = vmatpush.bf16.msra.mxu0 %v3116
    %3130 = vmatpush.bf16.msra.mxu0 %v3115
    %3131 = vmatpush.bf16.msra.mxu0 %v3114
    %3132 = vmatpush.bf16.msra.mxu0 %v3113
    %3133 = vmatpush.bf16.msra.mxu0 %v3112
    %3134 = vmatpush.bf16.msra.mxu0 %v3111
    %3135 = vmatmul.bf16.gmra.mxu0 %v3051
    %v3136 = vpop.f32.mrf.mxu0
    %v3137 = vadd.f32 %v3077, %v3136
    %v3138 = vpop.f32.mrf.mxu0
    %v3139 = vadd.f32 %v3077, %v3138
    %3140 = vmatmul.bf16.gmra.mxu0 %v3052
    %v3141 = vpop.f32.mrf.mxu0
    %v3142 = vadd.f32 %v3077, %v3141
    %v3143 = vpop.f32.mrf.mxu0
    %v3144 = vadd.f32 %v3077, %v3143
    %3145 = vmatmul.bf16.gmra.mxu0 %v3053
    %v3146 = vpop.f32.mrf.mxu0
    %v3147 = vadd.f32 %v3077, %v3146
    %v3148 = vpop.f32.mrf.mxu0
    %v3149 = vadd.f32 %v3077, %v3148
    %3150 = vmatmul.bf16.gmra.mxu0 %v3054
    %v3151 = vpop.f32.mrf.mxu0
    %v3152 = vadd.f32 %v3077, %v3151
    %v3153 = vpop.f32.mrf.mxu0
    %v3154 = vadd.f32 %v3077, %v3153
    %3155 = vmatmul.bf16.gmra.mxu0 %v3055
    %v3156 = vpop.f32.mrf.mxu0
    %v3157 = vadd.f32 %v3077, %v3156
    %v3158 = vpop.f32.mrf.mxu0
    %v3159 = vadd.f32 %v3077, %v3158
    %3160 = vmatmul.bf16.gmra.mxu0 %v3056
    %v3161 = vpop.f32.mrf.mxu0
    %v3162 = vadd.f32 %v3077, %v3161
    %v3163 = vpop.f32.mrf.mxu0
    %v3164 = vadd.f32 %v3077, %v3163
    %3165 = vmatmul.bf16.gmra.mxu0 %v3057
    %v3166 = vpop.f32.mrf.mxu0
    %v3167 = vadd.f32 %v3077, %v3166
    %v3168 = vpop.f32.mrf.mxu0
    %v3169 = vadd.f32 %v3077, %v3168
    %3170 = vmatmul.bf16.gmra.mxu0 %v3058
    %v3171 = vpop.f32.mrf.mxu0
    %v3172 = vadd.f32 %v3077, %v3171
    %v3173 = vpop.f32.mrf.mxu0
    %v3174 = vadd.f32 %v3077, %v3173
    %3175 = vdwg.mxu0
    %v3176 = vmax.f32 %v3137, 0.0
    %v3177 = vmax.f32 %v3139, 0.0
    %v3178 = vmax.f32 %v3142, 0.0
    %v3179 = vmax.f32 %v3144, 0.0
    %v3180 = vmax.f32 %v3147, 0.0
    %v3181 = vmax.f32 %v3149, 0.0
    %v3182 = vmax.f32 %v3152, 0.0
    %v3183 = vmax.f32 %v3154, 0.0
    %v3184 = vmax.f32 %v3157, 0.0
    %v3185 = vmax.f32 %v3159, 0.0
    %v3186 = vmax.f32 %v3162, 0.0
    %v3187 = vmax.f32 %v3164, 0.0
    %v3188 = vmax.f32 %v3167, 0.0
    %v3189 = vmax.f32 %v3169, 0.0
    %v3190 = vmax.f32 %v3172, 0.0
    %v3191 = vmax.f32 %v3174, 0.0
    %v3192 = vld [vmem:[%s9] sm:$0x1]
    %v3193 = vld [vmem:[#allocation2] sm:$0x1]
    %v3195 = vperm.slane %v3192, 0
    %v3197 = vmul.f32 %v3176, %v3195
    %v3198 = vmul.f32 %v3177, %v3195
    %v3199 = vmul.f32 %v3178, %v3195
    %v3200 = vmul.f32 %v3179, %v3195
    %v3201 = vmul.f32 %v3180, %v3195
    %v3202 = vmul.f32 %v3181, %v3195
    %v3203 = vmul.f32 %v3182, %v3195
    %v3204 = vmul.f32 %v3183, %v3195
    %v3205 = vmul.f32 %v3184, %v3195
    %v3206 = vmul.f32 %v3185, %v3195
    %v3207 = vmul.f32 %v3186, %v3195
    %v3208 = vmul.f32 %v3187, %v3195
    %v3209 = vmul.f32 %v3188, %v3195
    %v3210 = vmul.f32 %v3189, %v3195
    %v3211 = vmul.f32 %v3190, %v3195
    %v3212 = vmul.f32 %v3191, %v3195
    %3213 = vadd.xlane.f32.xlu0 %v3197
    %v3214 = vpop.xlane.xlu0 %3213
    %3215 = vadd.xlane.f32.xlu0 %v3198
    %v3216 = vpop.xlane.xlu0 %3215
    %3217 = vadd.xlane.f32.xlu0 %v3199
    %v3218 = vpop.xlane.xlu0 %3217
    %3219 = vadd.xlane.f32.xlu0 %v3200
    %v3220 = vpop.xlane.xlu0 %3219
    %3221 = vadd.xlane.f32.xlu0 %v3201
    %v3222 = vpop.xlane.xlu0 %3221
    %3223 = vadd.xlane.f32.xlu0 %v3202
    %v3224 = vpop.xlane.xlu0 %3223
    %3225 = vadd.xlane.f32.xlu0 %v3203
    %v3226 = vpop.xlane.xlu0 %3225
    %3227 = vadd.xlane.f32.xlu0 %v3204
    %v3228 = vpop.xlane.xlu0 %3227
    %3229 = vadd.xlane.f32.xlu0 %v3205
    %v3230 = vpop.xlane.xlu0 %3229
    %3231 = vadd.xlane.f32.xlu0 %v3206
    %v3232 = vpop.xlane.xlu0 %3231
    %3233 = vadd.xlane.f32.xlu0 %v3207
    %v3234 = vpop.xlane.xlu0 %3233
    %3235 = vadd.xlane.f32.xlu0 %v3208
    %v3236 = vpop.xlane.xlu0 %3235
    %3237 = vadd.xlane.f32.xlu0 %v3209
    %v3238 = vpop.xlane.xlu0 %3237
    %3239 = vadd.xlane.f32.xlu0 %v3210
    %v3240 = vpop.xlane.xlu0 %3239
    %3241 = vadd.xlane.f32.xlu0 %v3211
    %v3242 = vpop.xlane.xlu0 %3241
    %3243 = vadd.xlane.f32.xlu0 %v3212
    %v3244 = vpop.xlane.xlu0 %3243
    %v3246 = vperm.slane %v3193, 0
    %v3248 = vadd.f32 %v3214, %v3246
    %v3249 = vadd.f32 %v3216, %v3246
    %v3250 = vadd.f32 %v3218, %v3246
    %v3251 = vadd.f32 %v3220, %v3246
    %v3252 = vadd.f32 %v3222, %v3246
    %v3253 = vadd.f32 %v3224, %v3246
    %v3254 = vadd.f32 %v3226, %v3246
    %v3255 = vadd.f32 %v3228, %v3246
    %v3256 = vadd.f32 %v3230, %v3246
    %v3257 = vadd.f32 %v3232, %v3246
    %v3258 = vadd.f32 %v3234, %v3246
    %v3259 = vadd.f32 %v3236, %v3246
    %v3260 = vadd.f32 %v3238, %v3246
    %v3261 = vadd.f32 %v3240, %v3246
    %v3262 = vadd.f32 %v3242, %v3246
    %v3263 = vadd.f32 %v3244, %v3246
    %vm3264 = vcmask 7168
    %3265 = vst.msk [vmem:[%s11] sm:$0xff] %vm3264, %v3248
    %3266 = vst.msk [vmem:[%s11 + $0x8] sm:$0xff] %vm3264, %v3249
    %3267 = vst.msk [vmem:[%s11 + $0x10] sm:$0xff] %vm3264, %v3250
    %3268 = vst.msk [vmem:[%s11 + $0x18] sm:$0xff] %vm3264, %v3251
    %3269 = vst.msk [vmem:[%s11 + $0x20] sm:$0xff] %vm3264, %v3252
    %3270 = vst.msk [vmem:[%s11 + $0x28] sm:$0xff] %vm3264, %v3253
    %3271 = vst.msk [vmem:[%s11 + $0x30] sm:$0xff] %vm3264, %v3254
    %3272 = vst.msk [vmem:[%s11 + $0x38] sm:$0xff] %vm3264, %v3255
    %3273 = vst.msk [vmem:[%s11 + $0x40] sm:$0xff] %vm3264, %v3256
    %3274 = vst.msk [vmem:[%s11 + $0x48] sm:$0xff] %vm3264, %v3257
    %3275 = vst.msk [vmem:[%s11 + $0x50] sm:$0xff] %vm3264, %v3258
    %3276 = vst.msk [vmem:[%s11 + $0x58] sm:$0xff] %vm3264, %v3259
    %3277 = vst.msk [vmem:[%s11 + $0x60] sm:$0xff] %vm3264, %v3260
    %3278 = vst.msk [vmem:[%s11 + $0x68] sm:$0xff] %vm3264, %v3261
    %3279 = vst.msk [vmem:[%s11 + $0x70] sm:$0xff] %vm3264, %v3262
    %3280 = vst.msk [vmem:[%s11 + $0x78] sm:$0xff] %vm3264, %v3263
    // Predicated region
    $region54: #{tpu_custom_call.1} parent=1 // pred_check
      _
    $region55: #{tpu_custom_call.1} parent=1 // pred_check_branch
      %3282 = sbr.rel (0) target = $region57
    $region56: #{tpu_custom_call.1} parent=1 // pred_region
      _
    $region57: #{tpu_custom_call.1} parent=1 // pred_fallthru
      _
    // Predicated region
    $region58: #{tpu_custom_call.1} parent=1 // pred_check
      _
    $region59: #{tpu_custom_call.1} parent=1 // pred_check_branch
      %3284 = sbr.rel (0) target = $region61
    $region60: #{tpu_custom_call.1} parent=1 // pred_region
      _
    $region61: #{tpu_custom_call.1} parent=1 // pred_fallthru
      _
    %3285 = vsyncpa [#allocation4], 1
    %3286 = vsyncpa [#allocation6], 1

</llo_original>
